<compile_context>
chip_gen: v7x
topology: tpu7x:2x2x1
jax: 0.10.0
libtpu: 0.0.40
codegen_flags: <defaults>
</compile_context>

<pallas_src>
import functools

import jax
import jax.numpy as jnp
from jax import lax
from jax.experimental import pallas as pl
from jax.experimental.pallas import tpu as pltpu

_VMEM = pl.BlockSpec(memory_space=pltpu.MemorySpace.VMEM)
# Chosen so the whole-array-resident design keeps headroom on v7x (64 MiB
# physical VMEM); v5e/v6e (128 MiB) are comfortably within it.
_VMEM_LIMIT = 40 * 1024 * 1024
_BF16 = jnp.bfloat16


# ----------------------------------------------------------------------------
# Encoder kernel: bidirectional LSTM.  Input pre-gates for both directions are
# hoisted into ONE bf16 matmul; only h @ Whh remains in the time loop.  Writes
# the fused enc_out (L, B, 2H) directly (no concat outside).
# ----------------------------------------------------------------------------
def encoder_kernel(x_ref,                         # (L, B, E)  bf16 embedded src
                   wih_fb_ref,                    # (E, 8H)    bf16 [wih_f|wih_b]
                   b_fb_ref,                      # (1, 8H)    f32  fused biases
                   whh_f_ref, whh_b_ref,          # (H, 4H)    bf16 recurrent W
                   enc_ref,                       # (L, B, 2H) f32  fused outputs
                   hid_ref, cell_ref,             # (B, 2H)    f32  final states
                   pre_ref):                      # (L, B, 8H) f32  scratch
    L, B, E = x_ref.shape
    H = whh_f_ref.shape[0]

    # Single hoisted bf16 MXU matmul for BOTH directions' pre-gates (bias folded).
    x_flat = x_ref[...].reshape(L * B, E)
    pre = jnp.dot(x_flat, wih_fb_ref[...],
                  preferred_element_type=jnp.float32) + b_fb_ref[...]
    pre_ref[...] = pre.reshape(L, B, 8 * H)

    whh_f = whh_f_ref[...]
    whh_b = whh_b_ref[...]

    def lstm_step(pre_t, h, c, whh):
        gates = pre_t + jnp.dot(h.astype(_BF16), whh,
                                preferred_element_type=jnp.float32)
        i = jax.nn.sigmoid(gates[:, 0:H])
        f = jax.nn.sigmoid(gates[:, H:2 * H])
        g = jnp.tanh(gates[:, 2 * H:3 * H])
        o = jax.nn.sigmoid(gates[:, 3 * H:4 * H])
        c_new = f * c + i * g
        h_new = o * jnp.tanh(c_new)
        return h_new, c_new

    def body(t, carry):
        hf, cf, hb, cb = carry
        hf, cf = lstm_step(pre_ref[t, :, 0:4 * H], hf, cf, whh_f)           # fwd t
        hb, cb = lstm_step(pre_ref[L - 1 - t, :, 4 * H:8 * H], hb, cb, whh_b)  # bwd
        enc_ref[t, :, 0:H] = hf
        enc_ref[L - 1 - t, :, H:2 * H] = hb
        return hf, cf, hb, cb

    # TODO(synk): on v7x the two directions could run on separate TensorCores
    # via pl.core_map; kept single-core here for portability.
    z = jnp.zeros((B, H), jnp.float32)
    unroll = True if L <= 16 else 8            # cap unroll for long sequences
    hf, cf, hb, cb = lax.fori_loop(0, L, body, (z, z, z, z), unroll=unroll)

    # hid/cell = concat(forward_last, backward_last) == torch.cat((h[-2], h[-1]), 1)
    hid_ref[:, 0:H] = hf
    hid_ref[:, H:2 * H] = hb
    cell_ref[:, 0:H] = cf
    cell_ref[:, H:2 * H] = cb


# ----------------------------------------------------------------------------
# Decoder kernel: bridge linear, hoisted decoder pre-gates, hoisted attention
# key projection, then per-step (VPU/XLU attention + two bf16 LSTM-cell dots).
# Emits the hidden-state sequence; vocab projection is a separate tiled kernel.
# ----------------------------------------------------------------------------
def decoder_kernel(enc_ref,                     # (L, B, 2*encH)  f32
                   hid_ref, cell_ref,           # (B, 2*encH)     f32
                   emb_cmt_ref,                 # (T, B, E)       bf16
                   w_lin_ref, b_lin_ref,        # (2*encH, decH) bf16, (1, decH) f32
                   w_att_t_ref,                 # (2*encH, decH)  bf16 == w_att.T
                   wih_e_ref,                   # (E, 4*decH)     bf16
                   wih_c_ref,                   # (2*encH, 4*decH) bf16
                   whh_d_ref,                   # (decH, 4*decH)  bf16
                   b_d_ref,                     # (1, 4*decH)     f32
                   hout_ref,                    # (T, B, decH)    f32 out
                   pre_ref,                     # (T, B, 4*decH)  f32 scratch
                   att_ref):                    # (L, B, decH)    f32 scratch
    T, B, Hd = hout_ref.shape
    L = enc_ref.shape[0]
    E = emb_cmt_ref.shape[2]
    D2 = enc_ref.shape[2]                        # 2*encH

    # Attention keys projected once for all decode steps (bf16 MXU matmul).
    enc_flat = enc_ref[...].reshape(L * B, D2)
    att_ref[...] = jnp.dot(enc_flat.astype(_BF16), w_att_t_ref[...],
                           preferred_element_type=jnp.float32).reshape(L, B, Hd)

    # Hoisted decoder-input pre-gates (bias folded in): emb @ wih_e + b_d.
    emb_flat = emb_cmt_ref[...].reshape(T * B, E)
    pre_ref[...] = (jnp.dot(emb_flat, wih_e_ref[...],
                            preferred_element_type=jnp.float32)
                    + b_d_ref[...]).reshape(T, B, 4 * Hd)

    # Bridge linear, single dot over the stacked [hid ; cell] rows.
    hc = jnp.concatenate([hid_ref[...], cell_ref[...]], axis=0).astype(_BF16)
    hc_out = (jnp.dot(hc, w_lin_ref[...], preferred_element_type=jnp.float32)
              + b_lin_ref[...])
    dec_h = hc_out[0:B]
    dec_c = hc_out[B:2 * B]

    wih_c = wih_c_ref[...]
    whh_d = whh_d_ref[...]

    def body(t, carry):
        h, c = carry
        # --- attention on VPU/XLU (L is small); keeps the MXU free ----------
        att = att_ref[...]                                      # (L, B, decH)
        s = jnp.sum(att * h[None, :, :], axis=-1)               # (L, B) scores
        m = jnp.max(s, axis=0, keepdims=True)
        e = jnp.exp(s - m)
        attn = e * pl.reciprocal(jnp.sum(e, axis=0, keepdims=True), approx=True)
        ctx = jnp.sum(attn[:, :, None] * enc_ref[...], axis=0)  # (B, D2)
        # TODO(synk): for long sources (L >> 32) switch to batched MXU einsums.

        # --- LSTM cell: two bf16 dots summed (no per-step concat) -----------
        gates = (pre_ref[t - 1]
                 + jnp.dot(ctx.astype(_BF16), wih_c,
                           preferred_element_type=jnp.float32)
                 + jnp.dot(h.astype(_BF16), whh_d,
                           preferred_element_type=jnp.float32))
        i = jax.nn.sigmoid(gates[:, 0:Hd])
        f = jax.nn.sigmoid(gates[:, Hd:2 * Hd])
        g = jnp.tanh(gates[:, 2 * Hd:3 * Hd])
        o = jax.nn.sigmoid(gates[:, 3 * Hd:4 * Hd])
        c_new = f * c + i * g
        h_new = o * jnp.tanh(c_new)
        hout_ref[t] = h_new
        # teacher_forcing_ratio == 1 -> next input is comment[t] (already in
        # pre_ref); the argmax "pred" branch of the reference is dead code.
        return h_new, c_new

    hout_ref[0] = jnp.zeros((B, Hd), jnp.float32)    # outputs[0] never written
    unroll = True if T <= 16 else 8
    lax.fori_loop(1, T, body, (dec_h, dec_c), unroll=unroll)


# ----------------------------------------------------------------------------
# Output projection: logits = h_all @ w_out + b_out as a tiled matmul over
# lane-dense vocab tiles ("parallel" grid).  Rows belonging to t == 0 are
# zeroed with a cheap slice store (only the first B flattened rows).
# ----------------------------------------------------------------------------
def out_proj_kernel(h_ref, w_ref, b_ref, o_ref, *, rows_to_zero):
    o_ref[...] = (jnp.dot(h_ref[...], w_ref[...],
                          preferred_element_type=jnp.float32) + b_ref[...])
    o_ref[pl.ds(0, rows_to_zero), :] = jnp.zeros(
        (rows_to_zero, o_ref.shape[1]), o_ref.dtype)


# ----------------------------------------------------------------------------
# Wrappers
# ----------------------------------------------------------------------------
def run_encoder(emb_src, p):
    L, B, _E = emb_src.shape
    H = p["enc_whh_f"].shape[0]
    return pl.pallas_call(
        encoder_kernel,
        out_shape=(
            jax.ShapeDtypeStruct((L, B, 2 * H), jnp.float32),
            jax.ShapeDtypeStruct((B, 2 * H), jnp.float32),
            jax.ShapeDtypeStruct((B, 2 * H), jnp.float32),
        ),
        in_specs=[_VMEM] * 5,
        out_specs=(_VMEM, _VMEM, _VMEM),
        scratch_shapes=[pltpu.VMEM((L, B, 8 * H), jnp.float32)],
        compiler_params=pltpu.CompilerParams(vmem_limit_bytes=_VMEM_LIMIT),
    )(emb_src, p["enc_wih_fb"], p["enc_b_fb"], p["enc_whh_f"], p["enc_whh_b"])


def run_decoder(enc_out, hid, cell, emb_cmt, p):
    T, B, _E = emb_cmt.shape
    L = enc_out.shape[0]
    Hd = p["dec_whh"].shape[0]
    return pl.pallas_call(
        decoder_kernel,
        out_shape=jax.ShapeDtypeStruct((T, B, Hd), jnp.float32),
        in_specs=[_VMEM] * 11,
        out_specs=_VMEM,
        scratch_shapes=[pltpu.VMEM((T, B, 4 * Hd), jnp.float32),
                        pltpu.VMEM((L, B, Hd), jnp.float32)],
        compiler_params=pltpu.CompilerParams(vmem_limit_bytes=_VMEM_LIMIT),
    )(enc_out, hid, cell, emb_cmt,
      p["w_lin"], p["b_lin"], p["w_att_t"],
      p["dec_wih_e"], p["dec_wih_c"], p["dec_whh"], p["dec_b"])


def _round_up(x, m):
    return (x + m - 1) // m * m


def _pick_vocab_tile(Vp, M, Hd, budget=24 * 1024 * 1024):
    """Largest lane-dense vocab tile whose double-buffered footprint fits the
    budget (conservative for v7x; v5e/v6e have extra headroom)."""
    for tn in (2048, 1024, 512, 256, 128):
        if Vp % tn:
            continue
        need = M * Hd * 2 + 2 * (Hd * tn * 2 + tn * 4 + M * tn * 4)
        if need <= budget:
            return tn
    return 128


def run_out_proj(h_all, w_out_p, b_out_p, out_dim):
    T, B, Hd = h_all.shape
    Vp = w_out_p.shape[1]
    M = T * B
    h2 = h_all.reshape(M, Hd).astype(_BF16)          # bf16 MXU operand
    tn = _pick_vocab_tile(Vp, M, Hd)
    logits = pl.pallas_call(
        functools.partial(out_proj_kernel, rows_to_zero=B),
        out_shape=jax.ShapeDtypeStruct((M, Vp), jnp.float32),
        grid=(Vp // tn,),
        in_specs=[pl.BlockSpec((M, Hd), lambda j: (0, 0)),
                  pl.BlockSpec((Hd, tn), lambda j: (0, j)),
                  pl.BlockSpec((1, tn), lambda j: (0, j))],
        out_specs=pl.BlockSpec((M, tn), lambda j: (0, j)),
        compiler_params=pltpu.CompilerParams(
            dimension_semantics=("parallel",),
            vmem_limit_bytes=_VMEM_LIMIT),
    )(h2, w_out_p, b_out_p)
    return logits.reshape(T, B, Vp)[:, :, :out_dim]


def seq2seq_forward(params, source, comment, teacher_forcing_ratio=1.0):
    """Mirrors Seq2Seq.forward.  `source` is a tuple whose first element is the
    (src_len, batch) int32 token tensor (reference does `source = source[0]`)."""
    src = source[0]                                             # (L, B) int32
    # Embedding lookups are XLA glue (gather); everything else is in-kernel.
    emb_src = jnp.take(params["src_emb"], src, axis=0)          # (L, B, E) bf16
    enc_out, hid, cell = run_encoder(emb_src, params)           # fused (L,B,2H)
    emb_cmt = jnp.take(params["trg_emb"], comment, axis=0)      # (T, B, E) bf16
    # TODO(synk): teacher_forcing_ratio < 1 (scheduled sampling) needs a
    # per-step data-dependent embedding gather; only ratio == 1 is implemented.
    del teacher_forcing_ratio
    h_all = run_decoder(enc_out, hid, cell, emb_cmt, params)    # (T, B, decH)
    return run_out_proj(h_all, params["w_out_p"], params["b_out_p"],
                        params["out_dim"])


def init_params(key, src_vocab, trg_vocab, emb_dim, enc_hid, dec_hid):
    """Base parameters in PyTorch-like logical layout (f32, input-major).
    NOTE: when importing real checkpoints the fused biases must be b_ih + b_hh."""
    ks = jax.random.split(key, 17)

    def w(k, shape, scale=0.1):
        return jax.random.normal(k, shape, jnp.float32) * scale

    return dict(
        src_emb=w(ks[0], (src_vocab, emb_dim)),
        trg_emb=w(ks[1], (trg_vocab, emb_dim)),
        # encoder bidirectional LSTM (gate order i, f, g, o)
        enc_wih_f=w(ks[2], (emb_dim, 4 * enc_hid)),
        enc_whh_f=w(ks[3], (enc_hid, 4 * enc_hid)),
        enc_b_f=w(ks[4], (1, 4 * enc_hid)),
        enc_wih_b=w(ks[5], (emb_dim, 4 * enc_hid)),
        enc_whh_b=w(ks[6], (enc_hid, 4 * enc_hid)),
        enc_b_b=w(ks[7], (1, 4 * enc_hid)),
        # hid/cell bridge linear: 2*enc_hid -> dec_hid
        w_lin=w(ks[8], (2 * enc_hid, dec_hid)),
        b_lin=w(ks[9], (1, dec_hid)),
        # attention projection
        w_att=w(ks[10], (dec_hid, 2 * enc_hid)),
        # decoder LSTMCell, input split into [embedding ; context]
        dec_wih_e=w(ks[11], (emb_dim, 4 * dec_hid)),
        dec_wih_c=w(ks[12], (2 * enc_hid, 4 * dec_hid)),
        dec_whh=w(ks[13], (dec_hid, 4 * dec_hid)),
        dec_b=w(ks[14], (1, 4 * dec_hid)),
        # output projection dec_hid -> output_dim
        w_out=w(ks[15], (dec_hid, trg_vocab)),
        b_out=w(ks[16], (1, trg_vocab)),
    )


def prepare_params(p):
    """One-time kernel-layout prep: fuse the two encoder input weights/biases,
    transpose the attention projection, pad the vocab to a multiple of 128,
    and cast all matmul operands to bf16 (biases / accumulation stay f32)."""
    V = p["w_out"].shape[1]
    Vp = _round_up(V, 128)
    w_out, b_out = p["w_out"], p["b_out"]
    if Vp != V:
        w_out = jnp.pad(w_out, ((0, 0), (0, Vp - V)))
        b_out = jnp.pad(b_out, ((0, 0), (0, Vp - V)))
    return dict(
        src_emb=p["src_emb"].astype(_BF16),
        trg_emb=p["trg_emb"].astype(_BF16),
        enc_wih_fb=jnp.concatenate([p["enc_wih_f"], p["enc_wih_b"]],
                                   axis=1).astype(_BF16),
        enc_b_fb=jnp.concatenate([p["enc_b_f"], p["enc_b_b"]], axis=1),
        enc_whh_f=p["enc_whh_f"].astype(_BF16),
        enc_whh_b=p["enc_whh_b"].astype(_BF16),
        w_lin=p["w_lin"].astype(_BF16),
        b_lin=p["b_lin"],
        w_att_t=p["w_att"].T.astype(_BF16),
        dec_wih_e=p["dec_wih_e"].astype(_BF16),
        dec_wih_c=p["dec_wih_c"].astype(_BF16),
        dec_whh=p["dec_whh"].astype(_BF16),
        dec_b=p["dec_b"],
        w_out_p=w_out.astype(_BF16),
        b_out_p=b_out,
        out_dim=V,
    )


if __name__ == "__main__":
    # Small but hardware-friendly sizes: batch = 8 (full sublane), embedding
    # and hidden dims multiples of 128 (lane-dense gate slices / pre-gate
    # matmuls), vocab a multiple of 128 (lane-dense logit stores).
    SRC_LEN, TRG_LEN, BATCH = 8, 10, 8
    SRC_VOCAB, TRG_VOCAB = 50, 256
    EMB, ENC_H, DEC_H = 128, 128, 128

    key = jax.random.PRNGKey(0)
    pkey, skey, ckey = jax.random.split(key, 3)
    params = prepare_params(
        init_params(pkey, SRC_VOCAB, TRG_VOCAB, EMB, ENC_H, DEC_H))

    src = jax.random.randint(skey, (SRC_LEN, BATCH), 0, SRC_VOCAB, dtype=jnp.int32)
    cmt = jax.random.randint(ckey, (TRG_LEN, BATCH), 0, TRG_VOCAB, dtype=jnp.int32)

    outputs = seq2seq_forward(params, (src,), cmt, teacher_forcing_ratio=1.0)
    outputs = jax.block_until_ready(outputs)

    assert outputs.shape == (TRG_LEN, BATCH, TRG_VOCAB)
    assert bool(jnp.all(outputs[0] == 0.0))          # outputs[0] never written
    assert bool(jnp.all(jnp.isfinite(outputs)))
    print("KERNEL_OK")
</pallas_src>

<mosaic_0001>
module attributes {stable_mosaic.version = 11 : i64} {
  func.func @encoder_kernel(%arg0: memref<8x8x128xbf16, #tpu.memory_space<vmem>>, %arg1: memref<128x1024xbf16, #tpu.memory_space<vmem>>, %arg2: memref<1x1024xf32, #tpu.memory_space<vmem>>, %arg3: memref<128x512xbf16, #tpu.memory_space<vmem>>, %arg4: memref<128x512xbf16, #tpu.memory_space<vmem>>, %arg5: memref<8x8x256xf32, #tpu.memory_space<vmem>>, %arg6: memref<8x256xf32, #tpu.memory_space<vmem>>, %arg7: memref<8x256xf32, #tpu.memory_space<vmem>>, %arg8: memref<8x8x1024xf32, #tpu.memory_space<vmem>>) attributes {dimension_semantics = [], scalar_prefetch = 0 : i64, scratch_operands = 1 : i64, tpu.core_type = #tpu.core_type<tc>} {
    %c0 = arith.constant 0 : index
    %c0_0 = arith.constant 0 : index
    %c0_1 = arith.constant 0 : index
    %0 = vector.load %arg0[%c0, %c0_0, %c0_1] : memref<8x8x128xbf16, #tpu.memory_space<vmem>>, vector<8x8x128xbf16>
    %1 = vector.shape_cast %0 : vector<8x8x128xbf16> to vector<64x128xbf16>
    %c0_2 = arith.constant 0 : index
    %c0_3 = arith.constant 0 : index
    %2 = vector.load %arg1[%c0_2, %c0_3] : memref<128x1024xbf16, #tpu.memory_space<vmem>>, vector<128x1024xbf16>
    %cst = arith.constant dense<0.000000e+00> : vector<64x1024xf32>
    %3 = tpu.matmul %1, %2, %cst {dimension_numbers = #tpu.dot_dimension_numbers<[1], [0], [0], [1], [0, 0, 1, 1], [], []>} : vector<64x128xbf16>, vector<128x1024xbf16>, vector<64x1024xf32> -> vector<64x1024xf32>
    %c0_4 = arith.constant 0 : index
    %c0_5 = arith.constant 0 : index
    %4 = vector.load %arg2[%c0_4, %c0_5] : memref<1x1024xf32, #tpu.memory_space<vmem>>, vector<1x1024xf32>
    %5 = vector.broadcast %4 : vector<1x1024xf32> to vector<64x1024xf32>
    %6 = arith.addf %3, %5 : vector<64x1024xf32>
    %7 = vector.shape_cast %6 : vector<64x1024xf32> to vector<8x8x1024xf32>
    %c0_6 = arith.constant 0 : index
    %c0_7 = arith.constant 0 : index
    %c0_8 = arith.constant 0 : index
    %8 = vector.load %arg8[%c0_6, %c0_7, %c0_8] : memref<8x8x1024xf32, #tpu.memory_space<vmem>>, vector<8x8x1024xf32>
    tpu.vector_store %arg8[%c0_6, %c0_7, %c0_8], %7 {strides = array<i32>} : memref<8x8x1024xf32, #tpu.memory_space<vmem>>, vector<8x8x1024xf32>,
    %c0_9 = arith.constant 0 : index
    %c0_10 = arith.constant 0 : index
    %9 = vector.load %arg3[%c0_9, %c0_10] : memref<128x512xbf16, #tpu.memory_space<vmem>>, vector<128x512xbf16>
    %c0_11 = arith.constant 0 : index
    %c0_12 = arith.constant 0 : index
    %10 = vector.load %arg4[%c0_11, %c0_12] : memref<128x512xbf16, #tpu.memory_space<vmem>>, vector<128x512xbf16>
    %cst_13 = arith.constant 0.000000e+00 : f32
    %11 = vector.broadcast %cst_13 : f32 to vector<8x128xf32>
    %c0_i32 = arith.constant 0 : i32
    %12 = arith.index_cast %c0_i32 : i32 to index
    %c0_14 = arith.constant 0 : index
    %c0_15 = arith.constant 0 : index
    %13 = vector.load %arg8[%12, %c0_14, %c0_15] : memref<8x8x1024xf32, #tpu.memory_space<vmem>>, vector<1x8x512xf32>
    %14 = vector.shape_cast %13 : vector<1x8x512xf32> to vector<8x512xf32>
    %15 = arith.truncf %11 : vector<8x128xf32> to vector<8x128xbf16>
    %cst_16 = arith.constant dense<0.000000e+00> : vector<8x512xf32>
    %16 = tpu.matmul %15, %9, %cst_16 {dimension_numbers = #tpu.dot_dimension_numbers<[1], [0], [0], [1], [0, 0, 1, 1], [], []>} : vector<8x128xbf16>, vector<128x512xbf16>, vector<8x512xf32> -> vector<8x512xf32>
    %17 = arith.addf %14, %16 : vector<8x512xf32>
    %18 = vector.extract_strided_slice %17 {offsets = [0, 0], sizes = [8, 128], strides = [1, 1]} : vector<8x512xf32> to vector<8x128xf32>
    %19 = arith.negf %18 : vector<8x128xf32>
    %20 = math.exp %19 : vector<8x128xf32>
    %cst_17 = arith.constant 1.000000e+00 : f32
    %21 = vector.broadcast %cst_17 : f32 to vector<8x128xf32>
    %22 = arith.addf %21, %20 : vector<8x128xf32>
    %23 = arith.divf %21, %22 : vector<8x128xf32>
    %24 = vector.extract_strided_slice %17 {offsets = [0, 128], sizes = [8, 128], strides = [1, 1]} : vector<8x512xf32> to vector<8x128xf32>
    %25 = arith.negf %24 : vector<8x128xf32>
    %26 = math.exp %25 : vector<8x128xf32>
    %cst_18 = arith.constant 1.000000e+00 : f32
    %27 = vector.broadcast %cst_18 : f32 to vector<8x128xf32>
    %28 = arith.addf %27, %26 : vector<8x128xf32>
    %29 = arith.divf %27, %28 : vector<8x128xf32>
    %30 = vector.extract_strided_slice %17 {offsets = [0, 256], sizes = [8, 128], strides = [1, 1]} : vector<8x512xf32> to vector<8x128xf32>
    %31 = math.tanh %30 : vector<8x128xf32>
    %32 = vector.extract_strided_slice %17 {offsets = [0, 384], sizes = [8, 128], strides = [1, 1]} : vector<8x512xf32> to vector<8x128xf32>
    %33 = arith.negf %32 : vector<8x128xf32>
    %34 = math.exp %33 : vector<8x128xf32>
    %cst_19 = arith.constant 1.000000e+00 : f32
    %35 = vector.broadcast %cst_19 : f32 to vector<8x128xf32>
    %36 = arith.addf %35, %34 : vector<8x128xf32>
    %37 = arith.divf %35, %36 : vector<8x128xf32>
    %38 = arith.mulf %29, %11 : vector<8x128xf32>
    %39 = arith.mulf %23, %31 : vector<8x128xf32>
    %40 = arith.addf %38, %39 : vector<8x128xf32>
    %41 = math.tanh %40 : vector<8x128xf32>
    %42 = arith.mulf %37, %41 : vector<8x128xf32>
    %c7_i32 = arith.constant 7 : i32
    %43 = arith.subi %c7_i32, %c0_i32 : i32
    %44 = arith.index_cast %43 : i32 to index
    %c0_20 = arith.constant 0 : index
    %c512 = arith.constant 512 : index
    %45 = vector.load %arg8[%44, %c0_20, %c512] : memref<8x8x1024xf32, #tpu.memory_space<vmem>>, vector<1x8x512xf32>
    %46 = vector.shape_cast %45 : vector<1x8x512xf32> to vector<8x512xf32>
    %47 = arith.truncf %11 : vector<8x128xf32> to vector<8x128xbf16>
    %cst_21 = arith.constant dense<0.000000e+00> : vector<8x512xf32>
    %48 = tpu.matmul %47, %10, %cst_21 {dimension_numbers = #tpu.dot_dimension_numbers<[1], [0], [0], [1], [0, 0, 1, 1], [], []>} : vector<8x128xbf16>, vector<128x512xbf16>, vector<8x512xf32> -> vector<8x512xf32>
    %49 = arith.addf %46, %48 : vector<8x512xf32>
    %50 = vector.extract_strided_slice %49 {offsets = [0, 0], sizes = [8, 128], strides = [1, 1]} : vector<8x512xf32> to vector<8x128xf32>
    %51 = arith.negf %50 : vector<8x128xf32>
    %52 = math.exp %51 : vector<8x128xf32>
    %cst_22 = arith.constant 1.000000e+00 : f32
    %53 = vector.broadcast %cst_22 : f32 to vector<8x128xf32>
    %54 = arith.addf %53, %52 : vector<8x128xf32>
    %55 = arith.divf %53, %54 : vector<8x128xf32>
    %56 = vector.extract_strided_slice %49 {offsets = [0, 128], sizes = [8, 128], strides = [1, 1]} : vector<8x512xf32> to vector<8x128xf32>
    %57 = arith.negf %56 : vector<8x128xf32>
    %58 = math.exp %57 : vector<8x128xf32>
    %cst_23 = arith.constant 1.000000e+00 : f32
    %59 = vector.broadcast %cst_23 : f32 to vector<8x128xf32>
    %60 = arith.addf %59, %58 : vector<8x128xf32>
    %61 = arith.divf %59, %60 : vector<8x128xf32>
    %62 = vector.extract_strided_slice %49 {offsets = [0, 256], sizes = [8, 128], strides = [1, 1]} : vector<8x512xf32> to vector<8x128xf32>
    %63 = math.tanh %62 : vector<8x128xf32>
    %64 = vector.extract_strided_slice %49 {offsets = [0, 384], sizes = [8, 128], strides = [1, 1]} : vector<8x512xf32> to vector<8x128xf32>
    %65 = arith.negf %64 : vector<8x128xf32>
    %66 = math.exp %65 : vector<8x128xf32>
    %cst_24 = arith.constant 1.000000e+00 : f32
    %67 = vector.broadcast %cst_24 : f32 to vector<8x128xf32>
    %68 = arith.addf %67, %66 : vector<8x128xf32>
    %69 = arith.divf %67, %68 : vector<8x128xf32>
    %70 = arith.mulf %61, %11 : vector<8x128xf32>
    %71 = arith.mulf %55, %63 : vector<8x128xf32>
    %72 = arith.addf %70, %71 : vector<8x128xf32>
    %73 = math.tanh %72 : vector<8x128xf32>
    %74 = arith.mulf %69, %73 : vector<8x128xf32>
    %75 = arith.index_cast %c0_i32 : i32 to index
    %c0_25 = arith.constant 0 : index
    %c0_26 = arith.constant 0 : index
    %76 = vector.load %arg5[%75, %c0_25, %c0_26] : memref<8x8x256xf32, #tpu.memory_space<vmem>>, vector<1x8x128xf32>
    %77 = vector.shape_cast %76 : vector<1x8x128xf32> to vector<8x128xf32>
    %78 = vector.shape_cast %42 : vector<8x128xf32> to vector<1x8x128xf32>
    tpu.vector_store %arg5[%75, %c0_25, %c0_26], %78 {strides = array<i32>} : memref<8x8x256xf32, #tpu.memory_space<vmem>>, vector<1x8x128xf32>,
    %c7_i32_27 = arith.constant 7 : i32
    %79 = arith.subi %c7_i32_27, %c0_i32 : i32
    %80 = arith.index_cast %79 : i32 to index
    %c0_28 = arith.constant 0 : index
    %c128 = arith.constant 128 : index
    %81 = vector.load %arg5[%80, %c0_28, %c128] : memref<8x8x256xf32, #tpu.memory_space<vmem>>, vector<1x8x128xf32>
    %82 = vector.shape_cast %81 : vector<1x8x128xf32> to vector<8x128xf32>
    %83 = vector.shape_cast %74 : vector<8x128xf32> to vector<1x8x128xf32>
    tpu.vector_store %arg5[%80, %c0_28, %c128], %83 {strides = array<i32>} : memref<8x8x256xf32, #tpu.memory_space<vmem>>, vector<1x8x128xf32>,
    %c1_i32 = arith.constant 1 : i32
    %84 = arith.index_cast %c1_i32 : i32 to index
    %c0_29 = arith.constant 0 : index
    %c0_30 = arith.constant 0 : index
    %85 = vector.load %arg8[%84, %c0_29, %c0_30] : memref<8x8x1024xf32, #tpu.memory_space<vmem>>, vector<1x8x512xf32>
    %86 = vector.shape_cast %85 : vector<1x8x512xf32> to vector<8x512xf32>
    %87 = arith.truncf %42 : vector<8x128xf32> to vector<8x128xbf16>
    %cst_31 = arith.constant dense<0.000000e+00> : vector<8x512xf32>
    %88 = tpu.matmul %87, %9, %cst_31 {dimension_numbers = #tpu.dot_dimension_numbers<[1], [0], [0], [1], [0, 0, 1, 1], [], []>} : vector<8x128xbf16>, vector<128x512xbf16>, vector<8x512xf32> -> vector<8x512xf32>
    %89 = arith.addf %86, %88 : vector<8x512xf32>
    %90 = vector.extract_strided_slice %89 {offsets = [0, 0], sizes = [8, 128], strides = [1, 1]} : vector<8x512xf32> to vector<8x128xf32>
    %91 = arith.negf %90 : vector<8x128xf32>
    %92 = math.exp %91 : vector<8x128xf32>
    %cst_32 = arith.constant 1.000000e+00 : f32
    %93 = vector.broadcast %cst_32 : f32 to vector<8x128xf32>
    %94 = arith.addf %93, %92 : vector<8x128xf32>
    %95 = arith.divf %93, %94 : vector<8x128xf32>
    %96 = vector.extract_strided_slice %89 {offsets = [0, 128], sizes = [8, 128], strides = [1, 1]} : vector<8x512xf32> to vector<8x128xf32>
    %97 = arith.negf %96 : vector<8x128xf32>
    %98 = math.exp %97 : vector<8x128xf32>
    %cst_33 = arith.constant 1.000000e+00 : f32
    %99 = vector.broadcast %cst_33 : f32 to vector<8x128xf32>
    %100 = arith.addf %99, %98 : vector<8x128xf32>
    %101 = arith.divf %99, %100 : vector<8x128xf32>
    %102 = vector.extract_strided_slice %89 {offsets = [0, 256], sizes = [8, 128], strides = [1, 1]} : vector<8x512xf32> to vector<8x128xf32>
    %103 = math.tanh %102 : vector<8x128xf32>
    %104 = vector.extract_strided_slice %89 {offsets = [0, 384], sizes = [8, 128], strides = [1, 1]} : vector<8x512xf32> to vector<8x128xf32>
    %105 = arith.negf %104 : vector<8x128xf32>
    %106 = math.exp %105 : vector<8x128xf32>
    %cst_34 = arith.constant 1.000000e+00 : f32
    %107 = vector.broadcast %cst_34 : f32 to vector<8x128xf32>
    %108 = arith.addf %107, %106 : vector<8x128xf32>
    %109 = arith.divf %107, %108 : vector<8x128xf32>
    %110 = arith.mulf %101, %40 : vector<8x128xf32>
    %111 = arith.mulf %95, %103 : vector<8x128xf32>
    %112 = arith.addf %110, %111 : vector<8x128xf32>
    %113 = math.tanh %112 : vector<8x128xf32>
    %114 = arith.mulf %109, %113 : vector<8x128xf32>
    %c7_i32_35 = arith.constant 7 : i32
    %115 = arith.subi %c7_i32_35, %c1_i32 : i32
    %116 = arith.index_cast %115 : i32 to index
    %c0_36 = arith.constant 0 : index
    %c512_37 = arith.constant 512 : index
    %117 = vector.load %arg8[%116, %c0_36, %c512_37] : memref<8x8x1024xf32, #tpu.memory_space<vmem>>, vector<1x8x512xf32>
    %118 = vector.shape_cast %117 : vector<1x8x512xf32> to vector<8x512xf32>
    %119 = arith.truncf %74 : vector<8x128xf32> to vector<8x128xbf16>
    %cst_38 = arith.constant dense<0.000000e+00> : vector<8x512xf32>
    %120 = tpu.matmul %119, %10, %cst_38 {dimension_numbers = #tpu.dot_dimension_numbers<[1], [0], [0], [1], [0, 0, 1, 1], [], []>} : vector<8x128xbf16>, vector<128x512xbf16>, vector<8x512xf32> -> vector<8x512xf32>
    %121 = arith.addf %118, %120 : vector<8x512xf32>
    %122 = vector.extract_strided_slice %121 {offsets = [0, 0], sizes = [8, 128], strides = [1, 1]} : vector<8x512xf32> to vector<8x128xf32>
    %123 = arith.negf %122 : vector<8x128xf32>
    %124 = math.exp %123 : vector<8x128xf32>
    %cst_39 = arith.constant 1.000000e+00 : f32
    %125 = vector.broadcast %cst_39 : f32 to vector<8x128xf32>
    %126 = arith.addf %125, %124 : vector<8x128xf32>
    %127 = arith.divf %125, %126 : vector<8x128xf32>
    %128 = vector.extract_strided_slice %121 {offsets = [0, 128], sizes = [8, 128], strides = [1, 1]} : vector<8x512xf32> to vector<8x128xf32>
    %129 = arith.negf %128 : vector<8x128xf32>
    %130 = math.exp %129 : vector<8x128xf32>
    %cst_40 = arith.constant 1.000000e+00 : f32
    %131 = vector.broadcast %cst_40 : f32 to vector<8x128xf32>
    %132 = arith.addf %131, %130 : vector<8x128xf32>
    %133 = arith.divf %131, %132 : vector<8x128xf32>
    %134 = vector.extract_strided_slice %121 {offsets = [0, 256], sizes = [8, 128], strides = [1, 1]} : vector<8x512xf32> to vector<8x128xf32>
    %135 = math.tanh %134 : vector<8x128xf32>
    %136 = vector.extract_strided_slice %121 {offsets = [0, 384], sizes = [8, 128], strides = [1, 1]} : vector<8x512xf32> to vector<8x128xf32>
    %137 = arith.negf %136 : vector<8x128xf32>
    %138 = math.exp %137 : vector<8x128xf32>
    %cst_41 = arith.constant 1.000000e+00 : f32
    %139 = vector.broadcast %cst_41 : f32 to vector<8x128xf32>
    %140 = arith.addf %139, %138 : vector<8x128xf32>
    %141 = arith.divf %139, %140 : vector<8x128xf32>
    %142 = arith.mulf %133, %72 : vector<8x128xf32>
    %143 = arith.mulf %127, %135 : vector<8x128xf32>
    %144 = arith.addf %142, %143 : vector<8x128xf32>
    %145 = math.tanh %144 : vector<8x128xf32>
    %146 = arith.mulf %141, %145 : vector<8x128xf32>
    %147 = arith.index_cast %c1_i32 : i32 to index
    %c0_42 = arith.constant 0 : index
    %c0_43 = arith.constant 0 : index
    %148 = vector.load %arg5[%147, %c0_42, %c0_43] : memref<8x8x256xf32, #tpu.memory_space<vmem>>, vector<1x8x128xf32>
    %149 = vector.shape_cast %148 : vector<1x8x128xf32> to vector<8x128xf32>
    %150 = vector.shape_cast %114 : vector<8x128xf32> to vector<1x8x128xf32>
    tpu.vector_store %arg5[%147, %c0_42, %c0_43], %150 {strides = array<i32>} : memref<8x8x256xf32, #tpu.memory_space<vmem>>, vector<1x8x128xf32>,
    %c7_i32_44 = arith.constant 7 : i32
    %151 = arith.subi %c7_i32_44, %c1_i32 : i32
    %152 = arith.index_cast %151 : i32 to index
    %c0_45 = arith.constant 0 : index
    %c128_46 = arith.constant 128 : index
    %153 = vector.load %arg5[%152, %c0_45, %c128_46] : memref<8x8x256xf32, #tpu.memory_space<vmem>>, vector<1x8x128xf32>
    %154 = vector.shape_cast %153 : vector<1x8x128xf32> to vector<8x128xf32>
    %155 = vector.shape_cast %146 : vector<8x128xf32> to vector<1x8x128xf32>
    tpu.vector_store %arg5[%152, %c0_45, %c128_46], %155 {strides = array<i32>} : memref<8x8x256xf32, #tpu.memory_space<vmem>>, vector<1x8x128xf32>,
    %c2_i32 = arith.constant 2 : i32
    %156 = arith.index_cast %c2_i32 : i32 to index
    %c0_47 = arith.constant 0 : index
    %c0_48 = arith.constant 0 : index
    %157 = vector.load %arg8[%156, %c0_47, %c0_48] : memref<8x8x1024xf32, #tpu.memory_space<vmem>>, vector<1x8x512xf32>
    %158 = vector.shape_cast %157 : vector<1x8x512xf32> to vector<8x512xf32>
    %159 = arith.truncf %114 : vector<8x128xf32> to vector<8x128xbf16>
    %cst_49 = arith.constant dense<0.000000e+00> : vector<8x512xf32>
    %160 = tpu.matmul %159, %9, %cst_49 {dimension_numbers = #tpu.dot_dimension_numbers<[1], [0], [0], [1], [0, 0, 1, 1], [], []>} : vector<8x128xbf16>, vector<128x512xbf16>, vector<8x512xf32> -> vector<8x512xf32>
    %161 = arith.addf %158, %160 : vector<8x512xf32>
    %162 = vector.extract_strided_slice %161 {offsets = [0, 0], sizes = [8, 128], strides = [1, 1]} : vector<8x512xf32> to vector<8x128xf32>
    %163 = arith.negf %162 : vector<8x128xf32>
    %164 = math.exp %163 : vector<8x128xf32>
    %cst_50 = arith.constant 1.000000e+00 : f32
    %165 = vector.broadcast %cst_50 : f32 to vector<8x128xf32>
    %166 = arith.addf %165, %164 : vector<8x128xf32>
    %167 = arith.divf %165, %166 : vector<8x128xf32>
    %168 = vector.extract_strided_slice %161 {offsets = [0, 128], sizes = [8, 128], strides = [1, 1]} : vector<8x512xf32> to vector<8x128xf32>
    %169 = arith.negf %168 : vector<8x128xf32>
    %170 = math.exp %169 : vector<8x128xf32>
    %cst_51 = arith.constant 1.000000e+00 : f32
    %171 = vector.broadcast %cst_51 : f32 to vector<8x128xf32>
    %172 = arith.addf %171, %170 : vector<8x128xf32>
    %173 = arith.divf %171, %172 : vector<8x128xf32>
    %174 = vector.extract_strided_slice %161 {offsets = [0, 256], sizes = [8, 128], strides = [1, 1]} : vector<8x512xf32> to vector<8x128xf32>
    %175 = math.tanh %174 : vector<8x128xf32>
    %176 = vector.extract_strided_slice %161 {offsets = [0, 384], sizes = [8, 128], strides = [1, 1]} : vector<8x512xf32> to vector<8x128xf32>
    %177 = arith.negf %176 : vector<8x128xf32>
    %178 = math.exp %177 : vector<8x128xf32>
    %cst_52 = arith.constant 1.000000e+00 : f32
    %179 = vector.broadcast %cst_52 : f32 to vector<8x128xf32>
    %180 = arith.addf %179, %178 : vector<8x128xf32>
    %181 = arith.divf %179, %180 : vector<8x128xf32>
    %182 = arith.mulf %173, %112 : vector<8x128xf32>
    %183 = arith.mulf %167, %175 : vector<8x128xf32>
    %184 = arith.addf %182, %183 : vector<8x128xf32>
    %185 = math.tanh %184 : vector<8x128xf32>
    %186 = arith.mulf %181, %185 : vector<8x128xf32>
    %c7_i32_53 = arith.constant 7 : i32
    %187 = arith.subi %c7_i32_53, %c2_i32 : i32
    %188 = arith.index_cast %187 : i32 to index
    %c0_54 = arith.constant 0 : index
    %c512_55 = arith.constant 512 : index
    %189 = vector.load %arg8[%188, %c0_54, %c512_55] : memref<8x8x1024xf32, #tpu.memory_space<vmem>>, vector<1x8x512xf32>
    %190 = vector.shape_cast %189 : vector<1x8x512xf32> to vector<8x512xf32>
    %191 = arith.truncf %146 : vector<8x128xf32> to vector<8x128xbf16>
    %cst_56 = arith.constant dense<0.000000e+00> : vector<8x512xf32>
    %192 = tpu.matmul %191, %10, %cst_56 {dimension_numbers = #tpu.dot_dimension_numbers<[1], [0], [0], [1], [0, 0, 1, 1], [], []>} : vector<8x128xbf16>, vector<128x512xbf16>, vector<8x512xf32> -> vector<8x512xf32>
    %193 = arith.addf %190, %192 : vector<8x512xf32>
    %194 = vector.extract_strided_slice %193 {offsets = [0, 0], sizes = [8, 128], strides = [1, 1]} : vector<8x512xf32> to vector<8x128xf32>
    %195 = arith.negf %194 : vector<8x128xf32>
    %196 = math.exp %195 : vector<8x128xf32>
    %cst_57 = arith.constant 1.000000e+00 : f32
    %197 = vector.broadcast %cst_57 : f32 to vector<8x128xf32>
    %198 = arith.addf %197, %196 : vector<8x128xf32>
    %199 = arith.divf %197, %198 : vector<8x128xf32>
    %200 = vector.extract_strided_slice %193 {offsets = [0, 128], sizes = [8, 128], strides = [1, 1]} : vector<8x512xf32> to vector<8x128xf32>
    %201 = arith.negf %200 : vector<8x128xf32>
    %202 = math.exp %201 : vector<8x128xf32>
    %cst_58 = arith.constant 1.000000e+00 : f32
    %203 = vector.broadcast %cst_58 : f32 to vector<8x128xf32>
    %204 = arith.addf %203, %202 : vector<8x128xf32>
    %205 = arith.divf %203, %204 : vector<8x128xf32>
    %206 = vector.extract_strided_slice %193 {offsets = [0, 256], sizes = [8, 128], strides = [1, 1]} : vector<8x512xf32> to vector<8x128xf32>
    %207 = math.tanh %206 : vector<8x128xf32>
    %208 = vector.extract_strided_slice %193 {offsets = [0, 384], sizes = [8, 128], strides = [1, 1]} : vector<8x512xf32> to vector<8x128xf32>
    %209 = arith.negf %208 : vector<8x128xf32>
    %210 = math.exp %209 : vector<8x128xf32>
    %cst_59 = arith.constant 1.000000e+00 : f32
    %211 = vector.broadcast %cst_59 : f32 to vector<8x128xf32>
    %212 = arith.addf %211, %210 : vector<8x128xf32>
    %213 = arith.divf %211, %212 : vector<8x128xf32>
    %214 = arith.mulf %205, %144 : vector<8x128xf32>
    %215 = arith.mulf %199, %207 : vector<8x128xf32>
    %216 = arith.addf %214, %215 : vector<8x128xf32>
    %217 = math.tanh %216 : vector<8x128xf32>
    %218 = arith.mulf %213, %217 : vector<8x128xf32>
    %219 = arith.index_cast %c2_i32 : i32 to index
    %c0_60 = arith.constant 0 : index
    %c0_61 = arith.constant 0 : index
    %220 = vector.load %arg5[%219, %c0_60, %c0_61] : memref<8x8x256xf32, #tpu.memory_space<vmem>>, vector<1x8x128xf32>
    %221 = vector.shape_cast %220 : vector<1x8x128xf32> to vector<8x128xf32>
    %222 = vector.shape_cast %186 : vector<8x128xf32> to vector<1x8x128xf32>
    tpu.vector_store %arg5[%219, %c0_60, %c0_61], %222 {strides = array<i32>} : memref<8x8x256xf32, #tpu.memory_space<vmem>>, vector<1x8x128xf32>,
    %c7_i32_62 = arith.constant 7 : i32
    %223 = arith.subi %c7_i32_62, %c2_i32 : i32
    %224 = arith.index_cast %223 : i32 to index
    %c0_63 = arith.constant 0 : index
    %c128_64 = arith.constant 128 : index
    %225 = vector.load %arg5[%224, %c0_63, %c128_64] : memref<8x8x256xf32, #tpu.memory_space<vmem>>, vector<1x8x128xf32>
    %226 = vector.shape_cast %225 : vector<1x8x128xf32> to vector<8x128xf32>
    %227 = vector.shape_cast %218 : vector<8x128xf32> to vector<1x8x128xf32>
    tpu.vector_store %arg5[%224, %c0_63, %c128_64], %227 {strides = array<i32>} : memref<8x8x256xf32, #tpu.memory_space<vmem>>, vector<1x8x128xf32>,
    %c3_i32 = arith.constant 3 : i32
    %228 = arith.index_cast %c3_i32 : i32 to index
    %c0_65 = arith.constant 0 : index
    %c0_66 = arith.constant 0 : index
    %229 = vector.load %arg8[%228, %c0_65, %c0_66] : memref<8x8x1024xf32, #tpu.memory_space<vmem>>, vector<1x8x512xf32>
    %230 = vector.shape_cast %229 : vector<1x8x512xf32> to vector<8x512xf32>
    %231 = arith.truncf %186 : vector<8x128xf32> to vector<8x128xbf16>
    %cst_67 = arith.constant dense<0.000000e+00> : vector<8x512xf32>
    %232 = tpu.matmul %231, %9, %cst_67 {dimension_numbers = #tpu.dot_dimension_numbers<[1], [0], [0], [1], [0, 0, 1, 1], [], []>} : vector<8x128xbf16>, vector<128x512xbf16>, vector<8x512xf32> -> vector<8x512xf32>
    %233 = arith.addf %230, %232 : vector<8x512xf32>
    %234 = vector.extract_strided_slice %233 {offsets = [0, 0], sizes = [8, 128], strides = [1, 1]} : vector<8x512xf32> to vector<8x128xf32>
    %235 = arith.negf %234 : vector<8x128xf32>
    %236 = math.exp %235 : vector<8x128xf32>
    %cst_68 = arith.constant 1.000000e+00 : f32
    %237 = vector.broadcast %cst_68 : f32 to vector<8x128xf32>
    %238 = arith.addf %237, %236 : vector<8x128xf32>
    %239 = arith.divf %237, %238 : vector<8x128xf32>
    %240 = vector.extract_strided_slice %233 {offsets = [0, 128], sizes = [8, 128], strides = [1, 1]} : vector<8x512xf32> to vector<8x128xf32>
    %241 = arith.negf %240 : vector<8x128xf32>
    %242 = math.exp %241 : vector<8x128xf32>
    %cst_69 = arith.constant 1.000000e+00 : f32
    %243 = vector.broadcast %cst_69 : f32 to vector<8x128xf32>
    %244 = arith.addf %243, %242 : vector<8x128xf32>
    %245 = arith.divf %243, %244 : vector<8x128xf32>
    %246 = vector.extract_strided_slice %233 {offsets = [0, 256], sizes = [8, 128], strides = [1, 1]} : vector<8x512xf32> to vector<8x128xf32>
    %247 = math.tanh %246 : vector<8x128xf32>
    %248 = vector.extract_strided_slice %233 {offsets = [0, 384], sizes = [8, 128], strides = [1, 1]} : vector<8x512xf32> to vector<8x128xf32>
    %249 = arith.negf %248 : vector<8x128xf32>
    %250 = math.exp %249 : vector<8x128xf32>
    %cst_70 = arith.constant 1.000000e+00 : f32
    %251 = vector.broadcast %cst_70 : f32 to vector<8x128xf32>
    %252 = arith.addf %251, %250 : vector<8x128xf32>
    %253 = arith.divf %251, %252 : vector<8x128xf32>
    %254 = arith.mulf %245, %184 : vector<8x128xf32>
    %255 = arith.mulf %239, %247 : vector<8x128xf32>
    %256 = arith.addf %254, %255 : vector<8x128xf32>
    %257 = math.tanh %256 : vector<8x128xf32>
    %258 = arith.mulf %253, %257 : vector<8x128xf32>
    %c7_i32_71 = arith.constant 7 : i32
    %259 = arith.subi %c7_i32_71, %c3_i32 : i32
    %260 = arith.index_cast %259 : i32 to index
    %c0_72 = arith.constant 0 : index
    %c512_73 = arith.constant 512 : index
    %261 = vector.load %arg8[%260, %c0_72, %c512_73] : memref<8x8x1024xf32, #tpu.memory_space<vmem>>, vector<1x8x512xf32>
    %262 = vector.shape_cast %261 : vector<1x8x512xf32> to vector<8x512xf32>
    %263 = arith.truncf %218 : vector<8x128xf32> to vector<8x128xbf16>
    %cst_74 = arith.constant dense<0.000000e+00> : vector<8x512xf32>
    %264 = tpu.matmul %263, %10, %cst_74 {dimension_numbers = #tpu.dot_dimension_numbers<[1], [0], [0], [1], [0, 0, 1, 1], [], []>} : vector<8x128xbf16>, vector<128x512xbf16>, vector<8x512xf32> -> vector<8x512xf32>
    %265 = arith.addf %262, %264 : vector<8x512xf32>
    %266 = vector.extract_strided_slice %265 {offsets = [0, 0], sizes = [8, 128], strides = [1, 1]} : vector<8x512xf32> to vector<8x128xf32>
    %267 = arith.negf %266 : vector<8x128xf32>
    %268 = math.exp %267 : vector<8x128xf32>
    %cst_75 = arith.constant 1.000000e+00 : f32
    %269 = vector.broadcast %cst_75 : f32 to vector<8x128xf32>
    %270 = arith.addf %269, %268 : vector<8x128xf32>
    %271 = arith.divf %269, %270 : vector<8x128xf32>
    %272 = vector.extract_strided_slice %265 {offsets = [0, 128], sizes = [8, 128], strides = [1, 1]} : vector<8x512xf32> to vector<8x128xf32>
    %273 = arith.negf %272 : vector<8x128xf32>
    %274 = math.exp %273 : vector<8x128xf32>
    %cst_76 = arith.constant 1.000000e+00 : f32
    %275 = vector.broadcast %cst_76 : f32 to vector<8x128xf32>
    %276 = arith.addf %275, %274 : vector<8x128xf32>
    %277 = arith.divf %275, %276 : vector<8x128xf32>
    %278 = vector.extract_strided_slice %265 {offsets = [0, 256], sizes = [8, 128], strides = [1, 1]} : vector<8x512xf32> to vector<8x128xf32>
    %279 = math.tanh %278 : vector<8x128xf32>
    %280 = vector.extract_strided_slice %265 {offsets = [0, 384], sizes = [8, 128], strides = [1, 1]} : vector<8x512xf32> to vector<8x128xf32>
    %281 = arith.negf %280 : vector<8x128xf32>
    %282 = math.exp %281 : vector<8x128xf32>
    %cst_77 = arith.constant 1.000000e+00 : f32
    %283 = vector.broadcast %cst_77 : f32 to vector<8x128xf32>
    %284 = arith.addf %283, %282 : vector<8x128xf32>
    %285 = arith.divf %283, %284 : vector<8x128xf32>
    %286 = arith.mulf %277, %216 : vector<8x128xf32>
    %287 = arith.mulf %271, %279 : vector<8x128xf32>
    %288 = arith.addf %286, %287 : vector<8x128xf32>
    %289 = math.tanh %288 : vector<8x128xf32>
    %290 = arith.mulf %285, %289 : vector<8x128xf32>
    %291 = arith.index_cast %c3_i32 : i32 to index
    %c0_78 = arith.constant 0 : index
    %c0_79 = arith.constant 0 : index
    %292 = vector.load %arg5[%291, %c0_78, %c0_79] : memref<8x8x256xf32, #tpu.memory_space<vmem>>, vector<1x8x128xf32>
    %293 = vector.shape_cast %292 : vector<1x8x128xf32> to vector<8x128xf32>
    %294 = vector.shape_cast %258 : vector<8x128xf32> to vector<1x8x128xf32>
    tpu.vector_store %arg5[%291, %c0_78, %c0_79], %294 {strides = array<i32>} : memref<8x8x256xf32, #tpu.memory_space<vmem>>, vector<1x8x128xf32>,
    %c7_i32_80 = arith.constant 7 : i32
    %295 = arith.subi %c7_i32_80, %c3_i32 : i32
    %296 = arith.index_cast %295 : i32 to index
    %c0_81 = arith.constant 0 : index
    %c128_82 = arith.constant 128 : index
    %297 = vector.load %arg5[%296, %c0_81, %c128_82] : memref<8x8x256xf32, #tpu.memory_space<vmem>>, vector<1x8x128xf32>
    %298 = vector.shape_cast %297 : vector<1x8x128xf32> to vector<8x128xf32>
    %299 = vector.shape_cast %290 : vector<8x128xf32> to vector<1x8x128xf32>
    tpu.vector_store %arg5[%296, %c0_81, %c128_82], %299 {strides = array<i32>} : memref<8x8x256xf32, #tpu.memory_space<vmem>>, vector<1x8x128xf32>,
    %c4_i32 = arith.constant 4 : i32
    %300 = arith.index_cast %c4_i32 : i32 to index
    %c0_83 = arith.constant 0 : index
    %c0_84 = arith.constant 0 : index
    %301 = vector.load %arg8[%300, %c0_83, %c0_84] : memref<8x8x1024xf32, #tpu.memory_space<vmem>>, vector<1x8x512xf32>
    %302 = vector.shape_cast %301 : vector<1x8x512xf32> to vector<8x512xf32>
    %303 = arith.truncf %258 : vector<8x128xf32> to vector<8x128xbf16>
    %cst_85 = arith.constant dense<0.000000e+00> : vector<8x512xf32>
    %304 = tpu.matmul %303, %9, %cst_85 {dimension_numbers = #tpu.dot_dimension_numbers<[1], [0], [0], [1], [0, 0, 1, 1], [], []>} : vector<8x128xbf16>, vector<128x512xbf16>, vector<8x512xf32> -> vector<8x512xf32>
    %305 = arith.addf %302, %304 : vector<8x512xf32>
    %306 = vector.extract_strided_slice %305 {offsets = [0, 0], sizes = [8, 128], strides = [1, 1]} : vector<8x512xf32> to vector<8x128xf32>
    %307 = arith.negf %306 : vector<8x128xf32>
    %308 = math.exp %307 : vector<8x128xf32>
    %cst_86 = arith.constant 1.000000e+00 : f32
    %309 = vector.broadcast %cst_86 : f32 to vector<8x128xf32>
    %310 = arith.addf %309, %308 : vector<8x128xf32>
    %311 = arith.divf %309, %310 : vector<8x128xf32>
    %312 = vector.extract_strided_slice %305 {offsets = [0, 128], sizes = [8, 128], strides = [1, 1]} : vector<8x512xf32> to vector<8x128xf32>
    %313 = arith.negf %312 : vector<8x128xf32>
    %314 = math.exp %313 : vector<8x128xf32>
    %cst_87 = arith.constant 1.000000e+00 : f32
    %315 = vector.broadcast %cst_87 : f32 to vector<8x128xf32>
    %316 = arith.addf %315, %314 : vector<8x128xf32>
    %317 = arith.divf %315, %316 : vector<8x128xf32>
    %318 = vector.extract_strided_slice %305 {offsets = [0, 256], sizes = [8, 128], strides = [1, 1]} : vector<8x512xf32> to vector<8x128xf32>
    %319 = math.tanh %318 : vector<8x128xf32>
    %320 = vector.extract_strided_slice %305 {offsets = [0, 384], sizes = [8, 128], strides = [1, 1]} : vector<8x512xf32> to vector<8x128xf32>
    %321 = arith.negf %320 : vector<8x128xf32>
    %322 = math.exp %321 : vector<8x128xf32>
    %cst_88 = arith.constant 1.000000e+00 : f32
    %323 = vector.broadcast %cst_88 : f32 to vector<8x128xf32>
    %324 = arith.addf %323, %322 : vector<8x128xf32>
    %325 = arith.divf %323, %324 : vector<8x128xf32>
    %326 = arith.mulf %317, %256 : vector<8x128xf32>
    %327 = arith.mulf %311, %319 : vector<8x128xf32>
    %328 = arith.addf %326, %327 : vector<8x128xf32>
    %329 = math.tanh %328 : vector<8x128xf32>
    %330 = arith.mulf %325, %329 : vector<8x128xf32>
    %c7_i32_89 = arith.constant 7 : i32
    %331 = arith.subi %c7_i32_89, %c4_i32 : i32
    %332 = arith.index_cast %331 : i32 to index
    %c0_90 = arith.constant 0 : index
    %c512_91 = arith.constant 512 : index
    %333 = vector.load %arg8[%332, %c0_90, %c512_91] : memref<8x8x1024xf32, #tpu.memory_space<vmem>>, vector<1x8x512xf32>
    %334 = vector.shape_cast %333 : vector<1x8x512xf32> to vector<8x512xf32>
    %335 = arith.truncf %290 : vector<8x128xf32> to vector<8x128xbf16>
    %cst_92 = arith.constant dense<0.000000e+00> : vector<8x512xf32>
    %336 = tpu.matmul %335, %10, %cst_92 {dimension_numbers = #tpu.dot_dimension_numbers<[1], [0], [0], [1], [0, 0, 1, 1], [], []>} : vector<8x128xbf16>, vector<128x512xbf16>, vector<8x512xf32> -> vector<8x512xf32>
    %337 = arith.addf %334, %336 : vector<8x512xf32>
    %338 = vector.extract_strided_slice %337 {offsets = [0, 0], sizes = [8, 128], strides = [1, 1]} : vector<8x512xf32> to vector<8x128xf32>
    %339 = arith.negf %338 : vector<8x128xf32>
    %340 = math.exp %339 : vector<8x128xf32>
    %cst_93 = arith.constant 1.000000e+00 : f32
    %341 = vector.broadcast %cst_93 : f32 to vector<8x128xf32>
    %342 = arith.addf %341, %340 : vector<8x128xf32>
    %343 = arith.divf %341, %342 : vector<8x128xf32>
    %344 = vector.extract_strided_slice %337 {offsets = [0, 128], sizes = [8, 128], strides = [1, 1]} : vector<8x512xf32> to vector<8x128xf32>
    %345 = arith.negf %344 : vector<8x128xf32>
    %346 = math.exp %345 : vector<8x128xf32>
    %cst_94 = arith.constant 1.000000e+00 : f32
    %347 = vector.broadcast %cst_94 : f32 to vector<8x128xf32>
    %348 = arith.addf %347, %346 : vector<8x128xf32>
    %349 = arith.divf %347, %348 : vector<8x128xf32>
    %350 = vector.extract_strided_slice %337 {offsets = [0, 256], sizes = [8, 128], strides = [1, 1]} : vector<8x512xf32> to vector<8x128xf32>
    %351 = math.tanh %350 : vector<8x128xf32>
    %352 = vector.extract_strided_slice %337 {offsets = [0, 384], sizes = [8, 128], strides = [1, 1]} : vector<8x512xf32> to vector<8x128xf32>
    %353 = arith.negf %352 : vector<8x128xf32>
    %354 = math.exp %353 : vector<8x128xf32>
    %cst_95 = arith.constant 1.000000e+00 : f32
    %355 = vector.broadcast %cst_95 : f32 to vector<8x128xf32>
    %356 = arith.addf %355, %354 : vector<8x128xf32>
    %357 = arith.divf %355, %356 : vector<8x128xf32>
    %358 = arith.mulf %349, %288 : vector<8x128xf32>
    %359 = arith.mulf %343, %351 : vector<8x128xf32>
    %360 = arith.addf %358, %359 : vector<8x128xf32>
    %361 = math.tanh %360 : vector<8x128xf32>
    %362 = arith.mulf %357, %361 : vector<8x128xf32>
    %363 = arith.index_cast %c4_i32 : i32 to index
    %c0_96 = arith.constant 0 : index
    %c0_97 = arith.constant 0 : index
    %364 = vector.load %arg5[%363, %c0_96, %c0_97] : memref<8x8x256xf32, #tpu.memory_space<vmem>>, vector<1x8x128xf32>
    %365 = vector.shape_cast %364 : vector<1x8x128xf32> to vector<8x128xf32>
    %366 = vector.shape_cast %330 : vector<8x128xf32> to vector<1x8x128xf32>
    tpu.vector_store %arg5[%363, %c0_96, %c0_97], %366 {strides = array<i32>} : memref<8x8x256xf32, #tpu.memory_space<vmem>>, vector<1x8x128xf32>,
    %c7_i32_98 = arith.constant 7 : i32
    %367 = arith.subi %c7_i32_98, %c4_i32 : i32
    %368 = arith.index_cast %367 : i32 to index
    %c0_99 = arith.constant 0 : index
    %c128_100 = arith.constant 128 : index
    %369 = vector.load %arg5[%368, %c0_99, %c128_100] : memref<8x8x256xf32, #tpu.memory_space<vmem>>, vector<1x8x128xf32>
    %370 = vector.shape_cast %369 : vector<1x8x128xf32> to vector<8x128xf32>
    %371 = vector.shape_cast %362 : vector<8x128xf32> to vector<1x8x128xf32>
    tpu.vector_store %arg5[%368, %c0_99, %c128_100], %371 {strides = array<i32>} : memref<8x8x256xf32, #tpu.memory_space<vmem>>, vector<1x8x128xf32>,
    %c5_i32 = arith.constant 5 : i32
    %372 = arith.index_cast %c5_i32 : i32 to index
    %c0_101 = arith.constant 0 : index
    %c0_102 = arith.constant 0 : index
    %373 = vector.load %arg8[%372, %c0_101, %c0_102] : memref<8x8x1024xf32, #tpu.memory_space<vmem>>, vector<1x8x512xf32>
    %374 = vector.shape_cast %373 : vector<1x8x512xf32> to vector<8x512xf32>
    %375 = arith.truncf %330 : vector<8x128xf32> to vector<8x128xbf16>
    %cst_103 = arith.constant dense<0.000000e+00> : vector<8x512xf32>
    %376 = tpu.matmul %375, %9, %cst_103 {dimension_numbers = #tpu.dot_dimension_numbers<[1], [0], [0], [1], [0, 0, 1, 1], [], []>} : vector<8x128xbf16>, vector<128x512xbf16>, vector<8x512xf32> -> vector<8x512xf32>
    %377 = arith.addf %374, %376 : vector<8x512xf32>
    %378 = vector.extract_strided_slice %377 {offsets = [0, 0], sizes = [8, 128], strides = [1, 1]} : vector<8x512xf32> to vector<8x128xf32>
    %379 = arith.negf %378 : vector<8x128xf32>
    %380 = math.exp %379 : vector<8x128xf32>
    %cst_104 = arith.constant 1.000000e+00 : f32
    %381 = vector.broadcast %cst_104 : f32 to vector<8x128xf32>
    %382 = arith.addf %381, %380 : vector<8x128xf32>
    %383 = arith.divf %381, %382 : vector<8x128xf32>
    %384 = vector.extract_strided_slice %377 {offsets = [0, 128], sizes = [8, 128], strides = [1, 1]} : vector<8x512xf32> to vector<8x128xf32>
    %385 = arith.negf %384 : vector<8x128xf32>
    %386 = math.exp %385 : vector<8x128xf32>
    %cst_105 = arith.constant 1.000000e+00 : f32
    %387 = vector.broadcast %cst_105 : f32 to vector<8x128xf32>
    %388 = arith.addf %387, %386 : vector<8x128xf32>
    %389 = arith.divf %387, %388 : vector<8x128xf32>
    %390 = vector.extract_strided_slice %377 {offsets = [0, 256], sizes = [8, 128], strides = [1, 1]} : vector<8x512xf32> to vector<8x128xf32>
    %391 = math.tanh %390 : vector<8x128xf32>
    %392 = vector.extract_strided_slice %377 {offsets = [0, 384], sizes = [8, 128], strides = [1, 1]} : vector<8x512xf32> to vector<8x128xf32>
    %393 = arith.negf %392 : vector<8x128xf32>
    %394 = math.exp %393 : vector<8x128xf32>
    %cst_106 = arith.constant 1.000000e+00 : f32
    %395 = vector.broadcast %cst_106 : f32 to vector<8x128xf32>
    %396 = arith.addf %395, %394 : vector<8x128xf32>
    %397 = arith.divf %395, %396 : vector<8x128xf32>
    %398 = arith.mulf %389, %328 : vector<8x128xf32>
    %399 = arith.mulf %383, %391 : vector<8x128xf32>
    %400 = arith.addf %398, %399 : vector<8x128xf32>
    %401 = math.tanh %400 : vector<8x128xf32>
    %402 = arith.mulf %397, %401 : vector<8x128xf32>
    %c7_i32_107 = arith.constant 7 : i32
    %403 = arith.subi %c7_i32_107, %c5_i32 : i32
    %404 = arith.index_cast %403 : i32 to index
    %c0_108 = arith.constant 0 : index
    %c512_109 = arith.constant 512 : index
    %405 = vector.load %arg8[%404, %c0_108, %c512_109] : memref<8x8x1024xf32, #tpu.memory_space<vmem>>, vector<1x8x512xf32>
    %406 = vector.shape_cast %405 : vector<1x8x512xf32> to vector<8x512xf32>
    %407 = arith.truncf %362 : vector<8x128xf32> to vector<8x128xbf16>
    %cst_110 = arith.constant dense<0.000000e+00> : vector<8x512xf32>
    %408 = tpu.matmul %407, %10, %cst_110 {dimension_numbers = #tpu.dot_dimension_numbers<[1], [0], [0], [1], [0, 0, 1, 1], [], []>} : vector<8x128xbf16>, vector<128x512xbf16>, vector<8x512xf32> -> vector<8x512xf32>
    %409 = arith.addf %406, %408 : vector<8x512xf32>
    %410 = vector.extract_strided_slice %409 {offsets = [0, 0], sizes = [8, 128], strides = [1, 1]} : vector<8x512xf32> to vector<8x128xf32>
    %411 = arith.negf %410 : vector<8x128xf32>
    %412 = math.exp %411 : vector<8x128xf32>
    %cst_111 = arith.constant 1.000000e+00 : f32
    %413 = vector.broadcast %cst_111 : f32 to vector<8x128xf32>
    %414 = arith.addf %413, %412 : vector<8x128xf32>
    %415 = arith.divf %413, %414 : vector<8x128xf32>
    %416 = vector.extract_strided_slice %409 {offsets = [0, 128], sizes = [8, 128], strides = [1, 1]} : vector<8x512xf32> to vector<8x128xf32>
    %417 = arith.negf %416 : vector<8x128xf32>
    %418 = math.exp %417 : vector<8x128xf32>
    %cst_112 = arith.constant 1.000000e+00 : f32
    %419 = vector.broadcast %cst_112 : f32 to vector<8x128xf32>
    %420 = arith.addf %419, %418 : vector<8x128xf32>
    %421 = arith.divf %419, %420 : vector<8x128xf32>
    %422 = vector.extract_strided_slice %409 {offsets = [0, 256], sizes = [8, 128], strides = [1, 1]} : vector<8x512xf32> to vector<8x128xf32>
    %423 = math.tanh %422 : vector<8x128xf32>
    %424 = vector.extract_strided_slice %409 {offsets = [0, 384], sizes = [8, 128], strides = [1, 1]} : vector<8x512xf32> to vector<8x128xf32>
    %425 = arith.negf %424 : vector<8x128xf32>
    %426 = math.exp %425 : vector<8x128xf32>
    %cst_113 = arith.constant 1.000000e+00 : f32
    %427 = vector.broadcast %cst_113 : f32 to vector<8x128xf32>
    %428 = arith.addf %427, %426 : vector<8x128xf32>
    %429 = arith.divf %427, %428 : vector<8x128xf32>
    %430 = arith.mulf %421, %360 : vector<8x128xf32>
    %431 = arith.mulf %415, %423 : vector<8x128xf32>
    %432 = arith.addf %430, %431 : vector<8x128xf32>
    %433 = math.tanh %432 : vector<8x128xf32>
    %434 = arith.mulf %429, %433 : vector<8x128xf32>
    %435 = arith.index_cast %c5_i32 : i32 to index
    %c0_114 = arith.constant 0 : index
    %c0_115 = arith.constant 0 : index
    %436 = vector.load %arg5[%435, %c0_114, %c0_115] : memref<8x8x256xf32, #tpu.memory_space<vmem>>, vector<1x8x128xf32>
    %437 = vector.shape_cast %436 : vector<1x8x128xf32> to vector<8x128xf32>
    %438 = vector.shape_cast %402 : vector<8x128xf32> to vector<1x8x128xf32>
    tpu.vector_store %arg5[%435, %c0_114, %c0_115], %438 {strides = array<i32>} : memref<8x8x256xf32, #tpu.memory_space<vmem>>, vector<1x8x128xf32>,
    %c7_i32_116 = arith.constant 7 : i32
    %439 = arith.subi %c7_i32_116, %c5_i32 : i32
    %440 = arith.index_cast %439 : i32 to index
    %c0_117 = arith.constant 0 : index
    %c128_118 = arith.constant 128 : index
    %441 = vector.load %arg5[%440, %c0_117, %c128_118] : memref<8x8x256xf32, #tpu.memory_space<vmem>>, vector<1x8x128xf32>
    %442 = vector.shape_cast %441 : vector<1x8x128xf32> to vector<8x128xf32>
    %443 = vector.shape_cast %434 : vector<8x128xf32> to vector<1x8x128xf32>
    tpu.vector_store %arg5[%440, %c0_117, %c128_118], %443 {strides = array<i32>} : memref<8x8x256xf32, #tpu.memory_space<vmem>>, vector<1x8x128xf32>,
    %c6_i32 = arith.constant 6 : i32
    %444 = arith.index_cast %c6_i32 : i32 to index
    %c0_119 = arith.constant 0 : index
    %c0_120 = arith.constant 0 : index
    %445 = vector.load %arg8[%444, %c0_119, %c0_120] : memref<8x8x1024xf32, #tpu.memory_space<vmem>>, vector<1x8x512xf32>
    %446 = vector.shape_cast %445 : vector<1x8x512xf32> to vector<8x512xf32>
    %447 = arith.truncf %402 : vector<8x128xf32> to vector<8x128xbf16>
    %cst_121 = arith.constant dense<0.000000e+00> : vector<8x512xf32>
    %448 = tpu.matmul %447, %9, %cst_121 {dimension_numbers = #tpu.dot_dimension_numbers<[1], [0], [0], [1], [0, 0, 1, 1], [], []>} : vector<8x128xbf16>, vector<128x512xbf16>, vector<8x512xf32> -> vector<8x512xf32>
    %449 = arith.addf %446, %448 : vector<8x512xf32>
    %450 = vector.extract_strided_slice %449 {offsets = [0, 0], sizes = [8, 128], strides = [1, 1]} : vector<8x512xf32> to vector<8x128xf32>
    %451 = arith.negf %450 : vector<8x128xf32>
    %452 = math.exp %451 : vector<8x128xf32>
    %cst_122 = arith.constant 1.000000e+00 : f32
    %453 = vector.broadcast %cst_122 : f32 to vector<8x128xf32>
    %454 = arith.addf %453, %452 : vector<8x128xf32>
    %455 = arith.divf %453, %454 : vector<8x128xf32>
    %456 = vector.extract_strided_slice %449 {offsets = [0, 128], sizes = [8, 128], strides = [1, 1]} : vector<8x512xf32> to vector<8x128xf32>
    %457 = arith.negf %456 : vector<8x128xf32>
    %458 = math.exp %457 : vector<8x128xf32>
    %cst_123 = arith.constant 1.000000e+00 : f32
    %459 = vector.broadcast %cst_123 : f32 to vector<8x128xf32>
    %460 = arith.addf %459, %458 : vector<8x128xf32>
    %461 = arith.divf %459, %460 : vector<8x128xf32>
    %462 = vector.extract_strided_slice %449 {offsets = [0, 256], sizes = [8, 128], strides = [1, 1]} : vector<8x512xf32> to vector<8x128xf32>
    %463 = math.tanh %462 : vector<8x128xf32>
    %464 = vector.extract_strided_slice %449 {offsets = [0, 384], sizes = [8, 128], strides = [1, 1]} : vector<8x512xf32> to vector<8x128xf32>
    %465 = arith.negf %464 : vector<8x128xf32>
    %466 = math.exp %465 : vector<8x128xf32>
    %cst_124 = arith.constant 1.000000e+00 : f32
    %467 = vector.broadcast %cst_124 : f32 to vector<8x128xf32>
    %468 = arith.addf %467, %466 : vector<8x128xf32>
    %469 = arith.divf %467, %468 : vector<8x128xf32>
    %470 = arith.mulf %461, %400 : vector<8x128xf32>
    %471 = arith.mulf %455, %463 : vector<8x128xf32>
    %472 = arith.addf %470, %471 : vector<8x128xf32>
    %473 = math.tanh %472 : vector<8x128xf32>
    %474 = arith.mulf %469, %473 : vector<8x128xf32>
    %c7_i32_125 = arith.constant 7 : i32
    %475 = arith.subi %c7_i32_125, %c6_i32 : i32
    %476 = arith.index_cast %475 : i32 to index
    %c0_126 = arith.constant 0 : index
    %c512_127 = arith.constant 512 : index
    %477 = vector.load %arg8[%476, %c0_126, %c512_127] : memref<8x8x1024xf32, #tpu.memory_space<vmem>>, vector<1x8x512xf32>
    %478 = vector.shape_cast %477 : vector<1x8x512xf32> to vector<8x512xf32>
    %479 = arith.truncf %434 : vector<8x128xf32> to vector<8x128xbf16>
    %cst_128 = arith.constant dense<0.000000e+00> : vector<8x512xf32>
    %480 = tpu.matmul %479, %10, %cst_128 {dimension_numbers = #tpu.dot_dimension_numbers<[1], [0], [0], [1], [0, 0, 1, 1], [], []>} : vector<8x128xbf16>, vector<128x512xbf16>, vector<8x512xf32> -> vector<8x512xf32>
    %481 = arith.addf %478, %480 : vector<8x512xf32>
    %482 = vector.extract_strided_slice %481 {offsets = [0, 0], sizes = [8, 128], strides = [1, 1]} : vector<8x512xf32> to vector<8x128xf32>
    %483 = arith.negf %482 : vector<8x128xf32>
    %484 = math.exp %483 : vector<8x128xf32>
    %cst_129 = arith.constant 1.000000e+00 : f32
    %485 = vector.broadcast %cst_129 : f32 to vector<8x128xf32>
    %486 = arith.addf %485, %484 : vector<8x128xf32>
    %487 = arith.divf %485, %486 : vector<8x128xf32>
    %488 = vector.extract_strided_slice %481 {offsets = [0, 128], sizes = [8, 128], strides = [1, 1]} : vector<8x512xf32> to vector<8x128xf32>
    %489 = arith.negf %488 : vector<8x128xf32>
    %490 = math.exp %489 : vector<8x128xf32>
    %cst_130 = arith.constant 1.000000e+00 : f32
    %491 = vector.broadcast %cst_130 : f32 to vector<8x128xf32>
    %492 = arith.addf %491, %490 : vector<8x128xf32>
    %493 = arith.divf %491, %492 : vector<8x128xf32>
    %494 = vector.extract_strided_slice %481 {offsets = [0, 256], sizes = [8, 128], strides = [1, 1]} : vector<8x512xf32> to vector<8x128xf32>
    %495 = math.tanh %494 : vector<8x128xf32>
    %496 = vector.extract_strided_slice %481 {offsets = [0, 384], sizes = [8, 128], strides = [1, 1]} : vector<8x512xf32> to vector<8x128xf32>
    %497 = arith.negf %496 : vector<8x128xf32>
    %498 = math.exp %497 : vector<8x128xf32>
    %cst_131 = arith.constant 1.000000e+00 : f32
    %499 = vector.broadcast %cst_131 : f32 to vector<8x128xf32>
    %500 = arith.addf %499, %498 : vector<8x128xf32>
    %501 = arith.divf %499, %500 : vector<8x128xf32>
    %502 = arith.mulf %493, %432 : vector<8x128xf32>
    %503 = arith.mulf %487, %495 : vector<8x128xf32>
    %504 = arith.addf %502, %503 : vector<8x128xf32>
    %505 = math.tanh %504 : vector<8x128xf32>
    %506 = arith.mulf %501, %505 : vector<8x128xf32>
    %507 = arith.index_cast %c6_i32 : i32 to index
    %c0_132 = arith.constant 0 : index
    %c0_133 = arith.constant 0 : index
    %508 = vector.load %arg5[%507, %c0_132, %c0_133] : memref<8x8x256xf32, #tpu.memory_space<vmem>>, vector<1x8x128xf32>
    %509 = vector.shape_cast %508 : vector<1x8x128xf32> to vector<8x128xf32>
    %510 = vector.shape_cast %474 : vector<8x128xf32> to vector<1x8x128xf32>
    tpu.vector_store %arg5[%507, %c0_132, %c0_133], %510 {strides = array<i32>} : memref<8x8x256xf32, #tpu.memory_space<vmem>>, vector<1x8x128xf32>,
    %c7_i32_134 = arith.constant 7 : i32
    %511 = arith.subi %c7_i32_134, %c6_i32 : i32
    %512 = arith.index_cast %511 : i32 to index
    %c0_135 = arith.constant 0 : index
    %c128_136 = arith.constant 128 : index
    %513 = vector.load %arg5[%512, %c0_135, %c128_136] : memref<8x8x256xf32, #tpu.memory_space<vmem>>, vector<1x8x128xf32>
    %514 = vector.shape_cast %513 : vector<1x8x128xf32> to vector<8x128xf32>
    %515 = vector.shape_cast %506 : vector<8x128xf32> to vector<1x8x128xf32>
    tpu.vector_store %arg5[%512, %c0_135, %c128_136], %515 {strides = array<i32>} : memref<8x8x256xf32, #tpu.memory_space<vmem>>, vector<1x8x128xf32>,
    %c7_i32_137 = arith.constant 7 : i32
    %516 = arith.index_cast %c7_i32_137 : i32 to index
    %c0_138 = arith.constant 0 : index
    %c0_139 = arith.constant 0 : index
    %517 = vector.load %arg8[%516, %c0_138, %c0_139] : memref<8x8x1024xf32, #tpu.memory_space<vmem>>, vector<1x8x512xf32>
    %518 = vector.shape_cast %517 : vector<1x8x512xf32> to vector<8x512xf32>
    %519 = arith.truncf %474 : vector<8x128xf32> to vector<8x128xbf16>
    %cst_140 = arith.constant dense<0.000000e+00> : vector<8x512xf32>
    %520 = tpu.matmul %519, %9, %cst_140 {dimension_numbers = #tpu.dot_dimension_numbers<[1], [0], [0], [1], [0, 0, 1, 1], [], []>} : vector<8x128xbf16>, vector<128x512xbf16>, vector<8x512xf32> -> vector<8x512xf32>
    %521 = arith.addf %518, %520 : vector<8x512xf32>
    %522 = vector.extract_strided_slice %521 {offsets = [0, 0], sizes = [8, 128], strides = [1, 1]} : vector<8x512xf32> to vector<8x128xf32>
    %523 = arith.negf %522 : vector<8x128xf32>
    %524 = math.exp %523 : vector<8x128xf32>
    %cst_141 = arith.constant 1.000000e+00 : f32
    %525 = vector.broadcast %cst_141 : f32 to vector<8x128xf32>
    %526 = arith.addf %525, %524 : vector<8x128xf32>
    %527 = arith.divf %525, %526 : vector<8x128xf32>
    %528 = vector.extract_strided_slice %521 {offsets = [0, 128], sizes = [8, 128], strides = [1, 1]} : vector<8x512xf32> to vector<8x128xf32>
    %529 = arith.negf %528 : vector<8x128xf32>
    %530 = math.exp %529 : vector<8x128xf32>
    %cst_142 = arith.constant 1.000000e+00 : f32
    %531 = vector.broadcast %cst_142 : f32 to vector<8x128xf32>
    %532 = arith.addf %531, %530 : vector<8x128xf32>
    %533 = arith.divf %531, %532 : vector<8x128xf32>
    %534 = vector.extract_strided_slice %521 {offsets = [0, 256], sizes = [8, 128], strides = [1, 1]} : vector<8x512xf32> to vector<8x128xf32>
    %535 = math.tanh %534 : vector<8x128xf32>
    %536 = vector.extract_strided_slice %521 {offsets = [0, 384], sizes = [8, 128], strides = [1, 1]} : vector<8x512xf32> to vector<8x128xf32>
    %537 = arith.negf %536 : vector<8x128xf32>
    %538 = math.exp %537 : vector<8x128xf32>
    %cst_143 = arith.constant 1.000000e+00 : f32
    %539 = vector.broadcast %cst_143 : f32 to vector<8x128xf32>
    %540 = arith.addf %539, %538 : vector<8x128xf32>
    %541 = arith.divf %539, %540 : vector<8x128xf32>
    %542 = arith.mulf %533, %472 : vector<8x128xf32>
    %543 = arith.mulf %527, %535 : vector<8x128xf32>
    %544 = arith.addf %542, %543 : vector<8x128xf32>
    %545 = math.tanh %544 : vector<8x128xf32>
    %546 = arith.mulf %541, %545 : vector<8x128xf32>
    %c7_i32_144 = arith.constant 7 : i32
    %547 = arith.subi %c7_i32_144, %c7_i32_137 : i32
    %548 = arith.index_cast %547 : i32 to index
    %c0_145 = arith.constant 0 : index
    %c512_146 = arith.constant 512 : index
    %549 = vector.load %arg8[%548, %c0_145, %c512_146] : memref<8x8x1024xf32, #tpu.memory_space<vmem>>, vector<1x8x512xf32>
    %550 = vector.shape_cast %549 : vector<1x8x512xf32> to vector<8x512xf32>
    %551 = arith.truncf %506 : vector<8x128xf32> to vector<8x128xbf16>
    %cst_147 = arith.constant dense<0.000000e+00> : vector<8x512xf32>
    %552 = tpu.matmul %551, %10, %cst_147 {dimension_numbers = #tpu.dot_dimension_numbers<[1], [0], [0], [1], [0, 0, 1, 1], [], []>} : vector<8x128xbf16>, vector<128x512xbf16>, vector<8x512xf32> -> vector<8x512xf32>
    %553 = arith.addf %550, %552 : vector<8x512xf32>
    %554 = vector.extract_strided_slice %553 {offsets = [0, 0], sizes = [8, 128], strides = [1, 1]} : vector<8x512xf32> to vector<8x128xf32>
    %555 = arith.negf %554 : vector<8x128xf32>
    %556 = math.exp %555 : vector<8x128xf32>
    %cst_148 = arith.constant 1.000000e+00 : f32
    %557 = vector.broadcast %cst_148 : f32 to vector<8x128xf32>
    %558 = arith.addf %557, %556 : vector<8x128xf32>
    %559 = arith.divf %557, %558 : vector<8x128xf32>
    %560 = vector.extract_strided_slice %553 {offsets = [0, 128], sizes = [8, 128], strides = [1, 1]} : vector<8x512xf32> to vector<8x128xf32>
    %561 = arith.negf %560 : vector<8x128xf32>
    %562 = math.exp %561 : vector<8x128xf32>
    %cst_149 = arith.constant 1.000000e+00 : f32
    %563 = vector.broadcast %cst_149 : f32 to vector<8x128xf32>
    %564 = arith.addf %563, %562 : vector<8x128xf32>
    %565 = arith.divf %563, %564 : vector<8x128xf32>
    %566 = vector.extract_strided_slice %553 {offsets = [0, 256], sizes = [8, 128], strides = [1, 1]} : vector<8x512xf32> to vector<8x128xf32>
    %567 = math.tanh %566 : vector<8x128xf32>
    %568 = vector.extract_strided_slice %553 {offsets = [0, 384], sizes = [8, 128], strides = [1, 1]} : vector<8x512xf32> to vector<8x128xf32>
    %569 = arith.negf %568 : vector<8x128xf32>
    %570 = math.exp %569 : vector<8x128xf32>
    %cst_150 = arith.constant 1.000000e+00 : f32
    %571 = vector.broadcast %cst_150 : f32 to vector<8x128xf32>
    %572 = arith.addf %571, %570 : vector<8x128xf32>
    %573 = arith.divf %571, %572 : vector<8x128xf32>
    %574 = arith.mulf %565, %504 : vector<8x128xf32>
    %575 = arith.mulf %559, %567 : vector<8x128xf32>
    %576 = arith.addf %574, %575 : vector<8x128xf32>
    %577 = math.tanh %576 : vector<8x128xf32>
    %578 = arith.mulf %573, %577 : vector<8x128xf32>
    %579 = arith.index_cast %c7_i32_137 : i32 to index
    %c0_151 = arith.constant 0 : index
    %c0_152 = arith.constant 0 : index
    %580 = vector.load %arg5[%579, %c0_151, %c0_152] : memref<8x8x256xf32, #tpu.memory_space<vmem>>, vector<1x8x128xf32>
    %581 = vector.shape_cast %580 : vector<1x8x128xf32> to vector<8x128xf32>
    %582 = vector.shape_cast %546 : vector<8x128xf32> to vector<1x8x128xf32>
    tpu.vector_store %arg5[%579, %c0_151, %c0_152], %582 {strides = array<i32>} : memref<8x8x256xf32, #tpu.memory_space<vmem>>, vector<1x8x128xf32>,
    %c7_i32_153 = arith.constant 7 : i32
    %583 = arith.subi %c7_i32_153, %c7_i32_137 : i32
    %584 = arith.index_cast %583 : i32 to index
    %c0_154 = arith.constant 0 : index
    %c128_155 = arith.constant 128 : index
    %585 = vector.load %arg5[%584, %c0_154, %c128_155] : memref<8x8x256xf32, #tpu.memory_space<vmem>>, vector<1x8x128xf32>
    %586 = vector.shape_cast %585 : vector<1x8x128xf32> to vector<8x128xf32>
    %587 = vector.shape_cast %578 : vector<8x128xf32> to vector<1x8x128xf32>
    tpu.vector_store %arg5[%584, %c0_154, %c128_155], %587 {strides = array<i32>} : memref<8x8x256xf32, #tpu.memory_space<vmem>>, vector<1x8x128xf32>,
    %c8_i32 = arith.constant 8 : i32
    %c0_156 = arith.constant 0 : index
    %c0_157 = arith.constant 0 : index
    %588 = vector.load %arg6[%c0_156, %c0_157] : memref<8x256xf32, #tpu.memory_space<vmem>>, vector<8x128xf32>
    tpu.vector_store %arg6[%c0_156, %c0_157], %546 {strides = array<i32>} : memref<8x256xf32, #tpu.memory_space<vmem>>, vector<8x128xf32>,
    %c0_158 = arith.constant 0 : index
    %c128_159 = arith.constant 128 : index
    %589 = vector.load %arg6[%c0_158, %c128_159] : memref<8x256xf32, #tpu.memory_space<vmem>>, vector<8x128xf32>
    tpu.vector_store %arg6[%c0_158, %c128_159], %578 {strides = array<i32>} : memref<8x256xf32, #tpu.memory_space<vmem>>, vector<8x128xf32>,
    %c0_160 = arith.constant 0 : index
    %c0_161 = arith.constant 0 : index
    %590 = vector.load %arg7[%c0_160, %c0_161] : memref<8x256xf32, #tpu.memory_space<vmem>>, vector<8x128xf32>
    tpu.vector_store %arg7[%c0_160, %c0_161], %544 {strides = array<i32>} : memref<8x256xf32, #tpu.memory_space<vmem>>, vector<8x128xf32>,
    %c0_162 = arith.constant 0 : index
    %c128_163 = arith.constant 128 : index
    %591 = vector.load %arg7[%c0_162, %c128_163] : memref<8x256xf32, #tpu.memory_space<vmem>>, vector<8x128xf32>
    tpu.vector_store %arg7[%c0_162, %c128_163], %576 {strides = array<i32>} : memref<8x256xf32, #tpu.memory_space<vmem>>, vector<8x128xf32>,
    return
  }
}

</mosaic_0001>

<llo_original>
// kernel: tpu_custom_call.1
$region0: #{tpu_custom_call.1}
  #allocation0 [shape = 'u32[]', space=smem, size = 0x4, offset = 0x4, fixed_abs, tag = 'smem constant byte address 0x4 - core index']
  #allocation1 [shape = 'u32[144,128]{1,0:T(1,128)}', space=vmem, size = 0x12000, scoped, tag = 'internal scratch']
  #allocation2 [shape = 'f32[8,8,1024]{2,1,0:T(8,128)}', space=vmem, size = 0x40000, scoped, tag = 'scratch operand']
  %s0 = inlined_call_operand.hbm [shape: bf16[8,8,128], index: 0, kind: input, shape index: {}]
  %s1 = inlined_call_operand.hbm [shape: bf16[128,1024], index: 1, kind: input, shape index: {}]
  %s2 = inlined_call_operand.hbm [shape: f32[1,1024], index: 2, kind: input, shape index: {}]
  %s3 = inlined_call_operand.hbm [shape: bf16[128,512], index: 3, kind: input, shape index: {}]
  %s4 = inlined_call_operand.hbm [shape: bf16[128,512], index: 4, kind: input, shape index: {}]
  %s5 = inlined_call_operand.hbm [shape: f32[8,8,256], index: 5, kind: output, shape index: {0}]
  %s6 = inlined_call_operand.hbm [shape: f32[8,256], index: 6, kind: output, shape index: {1}]
  %s7 = inlined_call_operand.hbm [shape: f32[8,256], index: 7, kind: output, shape index: {2}]
  %8 = xla_tuple %s5, %s6, %s7
  %s9 = sld [smem:[#allocation0]]
  $region66: #{tpu_custom_call.1} parent=0
    _
  %s11 = ssub.s32 1, %s9
  %s12 = scalar_select 0, %s11, %s9
  $region1: #{tpu_custom_call.1} parent=0
    #allocation3 [shape = 'u8[16384]{0}', space=vmem, size = 0x4000, scoped, tag = 'input window, operand 0, single buffered']
    #allocation4 [shape = 's32[1]{0}', space=sflag, size = 0x4, scoped, tag = 'scoped memory for tpu_custom_call.1']
    #allocation5 [shape = 's32[1]{0}', space=sflag, size = 0x4, scoped, tag = 'scoped memory for tpu_custom_call.1']
    #allocation6 [shape = 'u8[262144]{0}', space=vmem, size = 0x40000, scoped, tag = 'input window, operand 1, single buffered']
    #allocation7 [shape = 's32[1]{0}', space=sflag, size = 0x4, scoped, tag = 'scoped memory for tpu_custom_call.1']
    #allocation8 [shape = 'u8[4096]{0}', space=vmem, size = 0x1000, scoped, tag = 'input window, operand 2, single buffered']
    #allocation9 [shape = 'u8[131072]{0}', space=vmem, size = 0x20000, scoped, tag = 'input window, operand 3, single buffered']
    #allocation10 [shape = 's32[1]{0}', space=sflag, size = 0x4, scoped, tag = 'scoped memory for tpu_custom_call.1']
    #allocation11 [shape = 'u8[131072]{0}', space=vmem, size = 0x20000, scoped, tag = 'input window, operand 4, single buffered']
    #allocation12 [shape = 'u8[65536]{0}', space=vmem, size = 0x10000, scoped, tag = 'output window, operand 0, single buffered']
    #allocation13 [shape = 'u8[8192]{0}', space=vmem, size = 0x2000, scoped, tag = 'output window, operand 1, single buffered']
    #allocation14 [shape = 's32[1]{0}', space=sflag, size = 0x4, scoped, tag = 'scoped memory for tpu_custom_call.1']
    #allocation15 [shape = 'u8[8192]{0}', space=vmem, size = 0x2000, scoped, tag = 'output window, operand 2, single buffered']
    %13 = vsyncpa [#allocation4], 0
    %14 = vsyncpa [#allocation7], 0
    %15 = vsyncpa [#allocation10], 0
    %16 = vsyncpa [#allocation5], 0
    %17 = vsyncpa [#allocation14], 0
    // Predicated region
    $region2: #{tpu_custom_call.1} parent=1 // pred_check
      _
    $region3: #{tpu_custom_call.1} parent=1 // pred_check_branch
      %19 = sbr.rel (0) target = $region5
    $region4: #{tpu_custom_call.1} parent=1 // pred_region
      %s21 = ssub.s32 512, 512
      %22 = vsyncadd [#allocation4], %s21
      %s23 = sshll.u32 [#allocation3], 4
      %s24 = int_to_ptr.vmem [resolvable:$true] %s23
      %29 = dma.hbm_to_vmem [thread:$0]  %s0, 512, %s24, [#allocation4], 64, 64, 4
    $region5: #{tpu_custom_call.1} parent=1 // pred_fallthru
      _
    // Predicated region
    $region6: #{tpu_custom_call.1} parent=1 // pred_check
      _
    $region7: #{tpu_custom_call.1} parent=1 // pred_check_branch
      %31 = sbr.rel (0) target = $region9
    $region8: #{tpu_custom_call.1} parent=1 // pred_region
      %s33 = ssub.s32 8192, 8192
      %34 = vsyncadd [#allocation7], %s33
      %s35 = sshll.u32 [#allocation6], 4
      %s36 = int_to_ptr.vmem [resolvable:$true] %s35
      %41 = dma.hbm_to_vmem [thread:$0]  %s1, 8192, %s36, [#allocation7], 512, 512, 32
    $region9: #{tpu_custom_call.1} parent=1 // pred_fallthru
      _
    // Predicated region
    $region10: #{tpu_custom_call.1} parent=1 // pred_check
      _
    $region11: #{tpu_custom_call.1} parent=1 // pred_check_branch
      %43 = sbr.rel (0) target = $region13
    $region12: #{tpu_custom_call.1} parent=1 // pred_region
      %s45 = ssub.s32 128, 128
      %46 = vsyncadd [#allocation7], %s45
      %s48 = sshll.u32 [#allocation8], 4
      %s49 = int_to_ptr.vmem [resolvable:$true] %s48
      %51 = dma.hbm_to_vmem [thread:$0]  %s2, 128, %s49, [#allocation7]
    $region13: #{tpu_custom_call.1} parent=1 // pred_fallthru
      _
    // Predicated region
    $region14: #{tpu_custom_call.1} parent=1 // pred_check
      _
    $region15: #{tpu_custom_call.1} parent=1 // pred_check_branch
      %53 = sbr.rel (0) target = $region17
    $region16: #{tpu_custom_call.1} parent=1 // pred_region
      %s55 = ssub.s32 4096, 4096
      %56 = vsyncadd [#allocation10], %s55
      %s57 = sshll.u32 [#allocation9], 4
      %s58 = int_to_ptr.vmem [resolvable:$true] %s57
      %63 = dma.hbm_to_vmem [thread:$0]  %s3, 4096, %s58, [#allocation10], 256, 256, 16
    $region17: #{tpu_custom_call.1} parent=1 // pred_fallthru
      _
    // Predicated region
    $region18: #{tpu_custom_call.1} parent=1 // pred_check
      _
    $region19: #{tpu_custom_call.1} parent=1 // pred_check_branch
      %65 = sbr.rel (0) target = $region21
    $region20: #{tpu_custom_call.1} parent=1 // pred_region
      %s67 = ssub.s32 4096, 4096
      %68 = vsyncadd [#allocation10], %s67
      %s69 = sshll.u32 [#allocation11], 4
      %s70 = int_to_ptr.vmem [resolvable:$true] %s69
      %75 = dma.hbm_to_vmem [thread:$0]  %s4, 4096, %s70, [#allocation10], 256, 256, 16
    $region21: #{tpu_custom_call.1} parent=1 // pred_fallthru
      _
    // Predicated region
    $region22: #{tpu_custom_call.1} parent=1 // pred_check
      _
    $region23: #{tpu_custom_call.1} parent=1 // pred_check_branch
      %77 = sbr.rel (0) target = $region25
    $region24: #{tpu_custom_call.1} parent=1 // pred_region
      %78 = dma.done [#allocation4], 512
    $region25: #{tpu_custom_call.1} parent=1 // pred_fallthru
      _
    // Predicated region
    $region26: #{tpu_custom_call.1} parent=1 // pred_check
      _
    $region27: #{tpu_custom_call.1} parent=1 // pred_check_branch
      %80 = sbr.rel (0) target = $region29
    $region28: #{tpu_custom_call.1} parent=1 // pred_region
      %81 = dma.done [#allocation7], 8192
    $region29: #{tpu_custom_call.1} parent=1 // pred_fallthru
      _
    // Predicated region
    $region30: #{tpu_custom_call.1} parent=1 // pred_check
      _
    $region31: #{tpu_custom_call.1} parent=1 // pred_check_branch
      %83 = sbr.rel (0) target = $region33
    $region32: #{tpu_custom_call.1} parent=1 // pred_region
      %84 = dma.done [#allocation7], 128
    $region33: #{tpu_custom_call.1} parent=1 // pred_fallthru
      _
    // Predicated region
    $region34: #{tpu_custom_call.1} parent=1 // pred_check
      _
    $region35: #{tpu_custom_call.1} parent=1 // pred_check_branch
      %86 = sbr.rel (0) target = $region37
    $region36: #{tpu_custom_call.1} parent=1 // pred_region
      %87 = dma.done [#allocation10], 4096
    $region37: #{tpu_custom_call.1} parent=1 // pred_fallthru
      _
    // Predicated region
    $region38: #{tpu_custom_call.1} parent=1 // pred_check
      _
    $region39: #{tpu_custom_call.1} parent=1 // pred_check_branch
      %89 = sbr.rel (0) target = $region41
    $region40: #{tpu_custom_call.1} parent=1 // pred_region
      %90 = dma.done [#allocation10], 4096
    $region41: #{tpu_custom_call.1} parent=1 // pred_fallthru
      _
    %v92 = vld [vmem:[#allocation3] sm:$0xf]
    %v93 = vld [vmem:[#allocation3 + $0x4] sm:$0xf]
    %v94 = vld [vmem:[#allocation3 + $0x8] sm:$0xf]
    %v95 = vld [vmem:[#allocation3 + $0xc] sm:$0xf]
    %v96 = vld [vmem:[#allocation3 + $0x10] sm:$0xf]
    %v97 = vld [vmem:[#allocation3 + $0x14] sm:$0xf]
    %v98 = vld [vmem:[#allocation3 + $0x18] sm:$0xf]
    %v99 = vld [vmem:[#allocation3 + $0x1c] sm:$0xf]
    %v100 = vld [vmem:[#allocation6] sm:$0xff]
    %v101 = vld [vmem:[#allocation6 + $0x8] sm:$0xff]
    %v102 = vld [vmem:[#allocation6 + $0x10] sm:$0xff]
    %v103 = vld [vmem:[#allocation6 + $0x18] sm:$0xff]
    %v104 = vld [vmem:[#allocation6 + $0x20] sm:$0xff]
    %v105 = vld [vmem:[#allocation6 + $0x28] sm:$0xff]
    %v106 = vld [vmem:[#allocation6 + $0x30] sm:$0xff]
    %v107 = vld [vmem:[#allocation6 + $0x38] sm:$0xff]
    %v108 = vld [vmem:[#allocation6 + $0x40] sm:$0xff]
    %v109 = vld [vmem:[#allocation6 + $0x48] sm:$0xff]
    %v110 = vld [vmem:[#allocation6 + $0x50] sm:$0xff]
    %v111 = vld [vmem:[#allocation6 + $0x58] sm:$0xff]
    %v112 = vld [vmem:[#allocation6 + $0x60] sm:$0xff]
    %v113 = vld [vmem:[#allocation6 + $0x68] sm:$0xff]
    %v114 = vld [vmem:[#allocation6 + $0x70] sm:$0xff]
    %v115 = vld [vmem:[#allocation6 + $0x78] sm:$0xff]
    %v116 = vld [vmem:[#allocation6 + $0x80] sm:$0xff]
    %v117 = vld [vmem:[#allocation6 + $0x88] sm:$0xff]
    %v118 = vld [vmem:[#allocation6 + $0x90] sm:$0xff]
    %v119 = vld [vmem:[#allocation6 + $0x98] sm:$0xff]
    %v120 = vld [vmem:[#allocation6 + $0xa0] sm:$0xff]
    %v121 = vld [vmem:[#allocation6 + $0xa8] sm:$0xff]
    %v122 = vld [vmem:[#allocation6 + $0xb0] sm:$0xff]
    %v123 = vld [vmem:[#allocation6 + $0xb8] sm:$0xff]
    %v124 = vld [vmem:[#allocation6 + $0xc0] sm:$0xff]
    %v125 = vld [vmem:[#allocation6 + $0xc8] sm:$0xff]
    %v126 = vld [vmem:[#allocation6 + $0xd0] sm:$0xff]
    %v127 = vld [vmem:[#allocation6 + $0xd8] sm:$0xff]
    %v128 = vld [vmem:[#allocation6 + $0xe0] sm:$0xff]
    %v129 = vld [vmem:[#allocation6 + $0xe8] sm:$0xff]
    %v130 = vld [vmem:[#allocation6 + $0xf0] sm:$0xff]
    %v131 = vld [vmem:[#allocation6 + $0xf8] sm:$0xff]
    %v132 = vld [vmem:[#allocation6 + $0x100] sm:$0xff]
    %v133 = vld [vmem:[#allocation6 + $0x108] sm:$0xff]
    %v134 = vld [vmem:[#allocation6 + $0x110] sm:$0xff]
    %v135 = vld [vmem:[#allocation6 + $0x118] sm:$0xff]
    %v136 = vld [vmem:[#allocation6 + $0x120] sm:$0xff]
    %v137 = vld [vmem:[#allocation6 + $0x128] sm:$0xff]
    %v138 = vld [vmem:[#allocation6 + $0x130] sm:$0xff]
    %v139 = vld [vmem:[#allocation6 + $0x138] sm:$0xff]
    %v140 = vld [vmem:[#allocation6 + $0x140] sm:$0xff]
    %v141 = vld [vmem:[#allocation6 + $0x148] sm:$0xff]
    %v142 = vld [vmem:[#allocation6 + $0x150] sm:$0xff]
    %v143 = vld [vmem:[#allocation6 + $0x158] sm:$0xff]
    %v144 = vld [vmem:[#allocation6 + $0x160] sm:$0xff]
    %v145 = vld [vmem:[#allocation6 + $0x168] sm:$0xff]
    %v146 = vld [vmem:[#allocation6 + $0x170] sm:$0xff]
    %v147 = vld [vmem:[#allocation6 + $0x178] sm:$0xff]
    %v148 = vld [vmem:[#allocation6 + $0x180] sm:$0xff]
    %v149 = vld [vmem:[#allocation6 + $0x188] sm:$0xff]
    %v150 = vld [vmem:[#allocation6 + $0x190] sm:$0xff]
    %v151 = vld [vmem:[#allocation6 + $0x198] sm:$0xff]
    %v152 = vld [vmem:[#allocation6 + $0x1a0] sm:$0xff]
    %v153 = vld [vmem:[#allocation6 + $0x1a8] sm:$0xff]
    %v154 = vld [vmem:[#allocation6 + $0x1b0] sm:$0xff]
    %v155 = vld [vmem:[#allocation6 + $0x1b8] sm:$0xff]
    %v156 = vld [vmem:[#allocation6 + $0x1c0] sm:$0xff]
    %v157 = vld [vmem:[#allocation6 + $0x1c8] sm:$0xff]
    %v158 = vld [vmem:[#allocation6 + $0x1d0] sm:$0xff]
    %v159 = vld [vmem:[#allocation6 + $0x1d8] sm:$0xff]
    %v160 = vld [vmem:[#allocation6 + $0x1e0] sm:$0xff]
    %v161 = vld [vmem:[#allocation6 + $0x1e8] sm:$0xff]
    %v162 = vld [vmem:[#allocation6 + $0x1f0] sm:$0xff]
    %v163 = vld [vmem:[#allocation6 + $0x1f8] sm:$0xff]
    %v164 = vld [vmem:[#allocation8] sm:$0xff]
    %v166 = vlaneseq
    %v167 = vshrl.u32 %v166, 7
    %v168 = vsub.s32 0, %v167
    %v169 = vrot.slane %v164, %v168
    %v170 = vlaneseq
    %v171 = vshrl.u32 %v170, 7
    %v172 = vsub.s32 1, %v171
    %v173 = vrot.slane %v164, %v172
    %v174 = vlaneseq
    %v175 = vshrl.u32 %v174, 7
    %v176 = vsub.s32 2, %v175
    %v177 = vrot.slane %v164, %v176
    %v178 = vlaneseq
    %v179 = vshrl.u32 %v178, 7
    %v180 = vsub.s32 3, %v179
    %v181 = vrot.slane %v164, %v180
    %v182 = vlaneseq
    %v183 = vshrl.u32 %v182, 7
    %v184 = vsub.s32 4, %v183
    %v185 = vrot.slane %v164, %v184
    %v186 = vlaneseq
    %v187 = vshrl.u32 %v186, 7
    %v188 = vsub.s32 5, %v187
    %v189 = vrot.slane %v164, %v188
    %v190 = vlaneseq
    %v191 = vshrl.u32 %v190, 7
    %v192 = vsub.s32 6, %v191
    %v193 = vrot.slane %v164, %v192
    %v194 = vlaneseq
    %v195 = vshrl.u32 %v194, 7
    %v196 = vsub.s32 7, %v195
    %v197 = vrot.slane %v164, %v196
    %v214 = vunpack.c.l.b16 %v92
    %v215 = vunpack.c.l.b16 %v93
    %v216 = vunpack.c.l.b16 %v94
    %v217 = vunpack.c.l.b16 %v95
    %v218 = vunpack.c.l.b16 %v96
    %v219 = vunpack.c.l.b16 %v97
    %v220 = vunpack.c.l.b16 %v98
    %v221 = vunpack.c.l.b16 %v99
    %v222 = vpack.c.b16 %v215, %v214
    %v223 = vpack.c.b16 %v217, %v216
    %v224 = vpack.c.b16 %v219, %v218
    %v225 = vpack.c.b16 %v221, %v220
    %v294 = vunpack.c.l.b16 %v100
    %v295 = vunpack.c.h.b16 %v100
    %v296 = vunpack.c.l.b16 %v101
    %v297 = vunpack.c.h.b16 %v101
    %v298 = vunpack.c.l.b16 %v102
    %v299 = vunpack.c.h.b16 %v102
    %v300 = vunpack.c.l.b16 %v103
    %v301 = vunpack.c.h.b16 %v103
    %v302 = vunpack.c.l.b16 %v104
    %v303 = vunpack.c.h.b16 %v104
    %v304 = vunpack.c.l.b16 %v105
    %v305 = vunpack.c.h.b16 %v105
    %v306 = vunpack.c.l.b16 %v106
    %v307 = vunpack.c.h.b16 %v106
    %v308 = vunpack.c.l.b16 %v107
    %v309 = vunpack.c.h.b16 %v107
    %v310 = vunpack.c.l.b16 %v108
    %v311 = vunpack.c.h.b16 %v108
    %v312 = vunpack.c.l.b16 %v109
    %v313 = vunpack.c.h.b16 %v109
    %v314 = vunpack.c.l.b16 %v110
    %v315 = vunpack.c.h.b16 %v110
    %v316 = vunpack.c.l.b16 %v111
    %v317 = vunpack.c.h.b16 %v111
    %v318 = vunpack.c.l.b16 %v112
    %v319 = vunpack.c.h.b16 %v112
    %v320 = vunpack.c.l.b16 %v113
    %v321 = vunpack.c.h.b16 %v113
    %v322 = vunpack.c.l.b16 %v114
    %v323 = vunpack.c.h.b16 %v114
    %v324 = vunpack.c.l.b16 %v115
    %v325 = vunpack.c.h.b16 %v115
    %v326 = vunpack.c.l.b16 %v116
    %v327 = vunpack.c.h.b16 %v116
    %v328 = vunpack.c.l.b16 %v117
    %v329 = vunpack.c.h.b16 %v117
    %v330 = vunpack.c.l.b16 %v118
    %v331 = vunpack.c.h.b16 %v118
    %v332 = vunpack.c.l.b16 %v119
    %v333 = vunpack.c.h.b16 %v119
    %v334 = vunpack.c.l.b16 %v120
    %v335 = vunpack.c.h.b16 %v120
    %v336 = vunpack.c.l.b16 %v121
    %v337 = vunpack.c.h.b16 %v121
    %v338 = vunpack.c.l.b16 %v122
    %v339 = vunpack.c.h.b16 %v122
    %v340 = vunpack.c.l.b16 %v123
    %v341 = vunpack.c.h.b16 %v123
    %v342 = vunpack.c.l.b16 %v124
    %v343 = vunpack.c.h.b16 %v124
    %v344 = vunpack.c.l.b16 %v125
    %v345 = vunpack.c.h.b16 %v125
    %v346 = vunpack.c.l.b16 %v126
    %v347 = vunpack.c.h.b16 %v126
    %v348 = vunpack.c.l.b16 %v127
    %v349 = vunpack.c.h.b16 %v127
    %v350 = vunpack.c.l.b16 %v128
    %v351 = vunpack.c.h.b16 %v128
    %v352 = vunpack.c.l.b16 %v129
    %v353 = vunpack.c.h.b16 %v129
    %v354 = vunpack.c.l.b16 %v130
    %v355 = vunpack.c.h.b16 %v130
    %v356 = vunpack.c.l.b16 %v131
    %v357 = vunpack.c.h.b16 %v131
    %v358 = vunpack.c.l.b16 %v132
    %v359 = vunpack.c.h.b16 %v132
    %v360 = vunpack.c.l.b16 %v133
    %v361 = vunpack.c.h.b16 %v133
    %v362 = vunpack.c.l.b16 %v134
    %v363 = vunpack.c.h.b16 %v134
    %v364 = vunpack.c.l.b16 %v135
    %v365 = vunpack.c.h.b16 %v135
    %v366 = vunpack.c.l.b16 %v136
    %v367 = vunpack.c.h.b16 %v136
    %v368 = vunpack.c.l.b16 %v137
    %v369 = vunpack.c.h.b16 %v137
    %v370 = vunpack.c.l.b16 %v138
    %v371 = vunpack.c.h.b16 %v138
    %v372 = vunpack.c.l.b16 %v139
    %v373 = vunpack.c.h.b16 %v139
    %v374 = vunpack.c.l.b16 %v140
    %v375 = vunpack.c.h.b16 %v140
    %v376 = vunpack.c.l.b16 %v141
    %v377 = vunpack.c.h.b16 %v141
    %v378 = vunpack.c.l.b16 %v142
    %v379 = vunpack.c.h.b16 %v142
    %v380 = vunpack.c.l.b16 %v143
    %v381 = vunpack.c.h.b16 %v143
    %v382 = vunpack.c.l.b16 %v144
    %v383 = vunpack.c.h.b16 %v144
    %v384 = vunpack.c.l.b16 %v145
    %v385 = vunpack.c.h.b16 %v145
    %v386 = vunpack.c.l.b16 %v146
    %v387 = vunpack.c.h.b16 %v146
    %v388 = vunpack.c.l.b16 %v147
    %v389 = vunpack.c.h.b16 %v147
    %v390 = vunpack.c.l.b16 %v148
    %v391 = vunpack.c.h.b16 %v148
    %v392 = vunpack.c.l.b16 %v149
    %v393 = vunpack.c.h.b16 %v149
    %v394 = vunpack.c.l.b16 %v150
    %v395 = vunpack.c.h.b16 %v150
    %v396 = vunpack.c.l.b16 %v151
    %v397 = vunpack.c.h.b16 %v151
    %v398 = vunpack.c.l.b16 %v152
    %v399 = vunpack.c.h.b16 %v152
    %v400 = vunpack.c.l.b16 %v153
    %v401 = vunpack.c.h.b16 %v153
    %v402 = vunpack.c.l.b16 %v154
    %v403 = vunpack.c.h.b16 %v154
    %v404 = vunpack.c.l.b16 %v155
    %v405 = vunpack.c.h.b16 %v155
    %v406 = vunpack.c.l.b16 %v156
    %v407 = vunpack.c.h.b16 %v156
    %v408 = vunpack.c.l.b16 %v157
    %v409 = vunpack.c.h.b16 %v157
    %v410 = vunpack.c.l.b16 %v158
    %v411 = vunpack.c.h.b16 %v158
    %v412 = vunpack.c.l.b16 %v159
    %v413 = vunpack.c.h.b16 %v159
    %v414 = vunpack.c.l.b16 %v160
    %v415 = vunpack.c.h.b16 %v160
    %v416 = vunpack.c.l.b16 %v161
    %v417 = vunpack.c.h.b16 %v161
    %v418 = vunpack.c.l.b16 %v162
    %v419 = vunpack.c.h.b16 %v162
    %v420 = vunpack.c.l.b16 %v163
    %v421 = vunpack.c.h.b16 %v163
    %v422 = vpack.c.b16 %v302, %v294
    %v423 = vpack.c.b16 %v303, %v295
    %v424 = vpack.c.b16 %v304, %v296
    %v425 = vpack.c.b16 %v305, %v297
    %v426 = vpack.c.b16 %v306, %v298
    %v427 = vpack.c.b16 %v307, %v299
    %v428 = vpack.c.b16 %v308, %v300
    %v429 = vpack.c.b16 %v309, %v301
    %v430 = vpack.c.b16 %v318, %v310
    %v431 = vpack.c.b16 %v319, %v311
    %v432 = vpack.c.b16 %v320, %v312
    %v433 = vpack.c.b16 %v321, %v313
    %v434 = vpack.c.b16 %v322, %v314
    %v435 = vpack.c.b16 %v323, %v315
    %v436 = vpack.c.b16 %v324, %v316
    %v437 = vpack.c.b16 %v325, %v317
    %v438 = vpack.c.b16 %v334, %v326
    %v439 = vpack.c.b16 %v335, %v327
    %v440 = vpack.c.b16 %v336, %v328
    %v441 = vpack.c.b16 %v337, %v329
    %v442 = vpack.c.b16 %v338, %v330
    %v443 = vpack.c.b16 %v339, %v331
    %v444 = vpack.c.b16 %v340, %v332
    %v445 = vpack.c.b16 %v341, %v333
    %v446 = vpack.c.b16 %v350, %v342
    %v447 = vpack.c.b16 %v351, %v343
    %v448 = vpack.c.b16 %v352, %v344
    %v449 = vpack.c.b16 %v353, %v345
    %v450 = vpack.c.b16 %v354, %v346
    %v451 = vpack.c.b16 %v355, %v347
    %v452 = vpack.c.b16 %v356, %v348
    %v453 = vpack.c.b16 %v357, %v349
    %v454 = vpack.c.b16 %v366, %v358
    %v455 = vpack.c.b16 %v367, %v359
    %v456 = vpack.c.b16 %v368, %v360
    %v457 = vpack.c.b16 %v369, %v361
    %v458 = vpack.c.b16 %v370, %v362
    %v459 = vpack.c.b16 %v371, %v363
    %v460 = vpack.c.b16 %v372, %v364
    %v461 = vpack.c.b16 %v373, %v365
    %v462 = vpack.c.b16 %v382, %v374
    %v463 = vpack.c.b16 %v383, %v375
    %v464 = vpack.c.b16 %v384, %v376
    %v465 = vpack.c.b16 %v385, %v377
    %v466 = vpack.c.b16 %v386, %v378
    %v467 = vpack.c.b16 %v387, %v379
    %v468 = vpack.c.b16 %v388, %v380
    %v469 = vpack.c.b16 %v389, %v381
    %v470 = vpack.c.b16 %v398, %v390
    %v471 = vpack.c.b16 %v399, %v391
    %v472 = vpack.c.b16 %v400, %v392
    %v473 = vpack.c.b16 %v401, %v393
    %v474 = vpack.c.b16 %v402, %v394
    %v475 = vpack.c.b16 %v403, %v395
    %v476 = vpack.c.b16 %v404, %v396
    %v477 = vpack.c.b16 %v405, %v397
    %v478 = vpack.c.b16 %v414, %v406
    %v479 = vpack.c.b16 %v415, %v407
    %v480 = vpack.c.b16 %v416, %v408
    %v481 = vpack.c.b16 %v417, %v409
    %v482 = vpack.c.b16 %v418, %v410
    %v483 = vpack.c.b16 %v419, %v411
    %v484 = vpack.c.b16 %v420, %v412
    %v485 = vpack.c.b16 %v421, %v413
    %550 = vmatprep.subr.bf16.mxu0 %v423
    %551 = vmatpush1.bf16.msra.mxu0 %v422
    %552 = vmatprep.subr.bf16.mxu0 %v431
    %553 = vmatpush1.bf16.msra.mxu0 %v430
    %554 = vmatprep.subr.bf16.mxu0 %v439
    %555 = vmatpush1.bf16.msra.mxu0 %v438
    %556 = vmatprep.subr.bf16.mxu0 %v447
    %557 = vmatpush1.bf16.msra.mxu0 %v446
    %558 = vmatprep.subr.bf16.mxu0 %v455
    %559 = vmatpush1.bf16.msra.mxu0 %v454
    %560 = vmatprep.subr.bf16.mxu0 %v463
    %561 = vmatpush1.bf16.msra.mxu0 %v462
    %562 = vmatprep.subr.bf16.mxu0 %v471
    %563 = vmatpush1.bf16.msra.mxu0 %v470
    %564 = vmatprep.subr.bf16.mxu0 %v479
    %565 = vmatpush1.bf16.msra.mxu0 %v478
    %566 = vmatprep.subr.bf16.mxu0 0
    %567 = vmatpush1.bf16.msra.mxu0 0
    %568 = vmatprep.subr.bf16.mxu0 0
    %569 = vmatpush1.bf16.msra.mxu0 0
    %570 = vmatprep.subr.bf16.mxu0 0
    %571 = vmatpush1.bf16.msra.mxu0 0
    %572 = vmatprep.subr.bf16.mxu0 0
    %573 = vmatpush1.bf16.msra.mxu0 0
    %574 = vmatprep.subr.bf16.mxu0 0
    %575 = vmatpush1.bf16.msra.mxu0 0
    %576 = vmatprep.subr.bf16.mxu0 0
    %577 = vmatpush1.bf16.msra.mxu0 0
    %578 = vmatprep.subr.bf16.mxu0 0
    %579 = vmatpush1.bf16.msra.mxu0 0
    %580 = vmatprep.subr.bf16.mxu0 0
    %581 = vmatpush1.bf16.msra.mxu0 0
    %582 = vmatprep.mubr.bf16.mxu0 0
    %583 = vmatmul.mubr.bf16.gmra.mrb[0].mxu0 %v222
    %v584 = vpop.f32.mrb[0].mxu0
    %v585 = vadd.f32 %v169, %v584
    %v586 = vpop.f32.mrb[0].mxu0
    %v587 = vadd.f32 %v173, %v586
    %v588 = vpop.f32.mrb[0].mxu0
    %v589 = vadd.f32 %v169, %v588
    %v590 = vpop.f32.mrb[0].mxu0
    %v591 = vadd.f32 %v173, %v590
    %592 = vmatprep.mubr.bf16.mxu0 0
    %593 = vmatmul.mubr.bf16.gmra.mrb[0].mxu0 %v223
    %v594 = vpop.f32.mrb[0].mxu0
    %v595 = vadd.f32 %v169, %v594
    %v596 = vpop.f32.mrb[0].mxu0
    %v597 = vadd.f32 %v173, %v596
    %v598 = vpop.f32.mrb[0].mxu0
    %v599 = vadd.f32 %v169, %v598
    %v600 = vpop.f32.mrb[0].mxu0
    %v601 = vadd.f32 %v173, %v600
    %602 = vmatprep.mubr.bf16.mxu0 0
    %603 = vmatmul.mubr.bf16.gmra.mrb[0].mxu0 %v224
    %v604 = vpop.f32.mrb[0].mxu0
    %v605 = vadd.f32 %v169, %v604
    %v606 = vpop.f32.mrb[0].mxu0
    %v607 = vadd.f32 %v173, %v606
    %v608 = vpop.f32.mrb[0].mxu0
    %v609 = vadd.f32 %v169, %v608
    %v610 = vpop.f32.mrb[0].mxu0
    %v611 = vadd.f32 %v173, %v610
    %612 = vmatprep.mubr.bf16.mxu0 0
    %613 = vmatmul.mubr.bf16.gmra.mrb[0].mxu0 %v225
    %v614 = vpop.f32.mrb[0].mxu0
    %v615 = vadd.f32 %v169, %v614
    %v616 = vpop.f32.mrb[0].mxu0
    %v617 = vadd.f32 %v173, %v616
    %v618 = vpop.f32.mrb[0].mxu0
    %v619 = vadd.f32 %v169, %v618
    %v620 = vpop.f32.mrb[0].mxu0
    %v621 = vadd.f32 %v173, %v620
    %622 = vdwg.mxu0
    %623 = vmatprep.subr.bf16.mxu0 %v425
    %624 = vmatpush1.bf16.msra.mxu0 %v424
    %625 = vmatprep.subr.bf16.mxu0 %v433
    %626 = vmatpush1.bf16.msra.mxu0 %v432
    %627 = vmatprep.subr.bf16.mxu0 %v441
    %628 = vmatpush1.bf16.msra.mxu0 %v440
    %629 = vmatprep.subr.bf16.mxu0 %v449
    %630 = vmatpush1.bf16.msra.mxu0 %v448
    %631 = vmatprep.subr.bf16.mxu0 %v457
    %632 = vmatpush1.bf16.msra.mxu0 %v456
    %633 = vmatprep.subr.bf16.mxu0 %v465
    %634 = vmatpush1.bf16.msra.mxu0 %v464
    %635 = vmatprep.subr.bf16.mxu0 %v473
    %636 = vmatpush1.bf16.msra.mxu0 %v472
    %637 = vmatprep.subr.bf16.mxu0 %v481
    %638 = vmatpush1.bf16.msra.mxu0 %v480
    %639 = vmatprep.subr.bf16.mxu0 0
    %640 = vmatpush1.bf16.msra.mxu0 0
    %641 = vmatprep.subr.bf16.mxu0 0
    %642 = vmatpush1.bf16.msra.mxu0 0
    %643 = vmatprep.subr.bf16.mxu0 0
    %644 = vmatpush1.bf16.msra.mxu0 0
    %645 = vmatprep.subr.bf16.mxu0 0
    %646 = vmatpush1.bf16.msra.mxu0 0
    %647 = vmatprep.subr.bf16.mxu0 0
    %648 = vmatpush1.bf16.msra.mxu0 0
    %649 = vmatprep.subr.bf16.mxu0 0
    %650 = vmatpush1.bf16.msra.mxu0 0
    %651 = vmatprep.subr.bf16.mxu0 0
    %652 = vmatpush1.bf16.msra.mxu0 0
    %653 = vmatprep.subr.bf16.mxu0 0
    %654 = vmatpush1.bf16.msra.mxu0 0
    %655 = vmatprep.mubr.bf16.mxu0 0
    %656 = vmatmul.mubr.bf16.gmra.mrb[0].mxu0 %v222
    %v657 = vpop.f32.mrb[0].mxu0
    %v658 = vadd.f32 %v177, %v657
    %v659 = vpop.f32.mrb[0].mxu0
    %v660 = vadd.f32 %v181, %v659
    %v661 = vpop.f32.mrb[0].mxu0
    %v662 = vadd.f32 %v177, %v661
    %v663 = vpop.f32.mrb[0].mxu0
    %v664 = vadd.f32 %v181, %v663
    %665 = vmatprep.mubr.bf16.mxu0 0
    %666 = vmatmul.mubr.bf16.gmra.mrb[0].mxu0 %v223
    %v667 = vpop.f32.mrb[0].mxu0
    %v668 = vadd.f32 %v177, %v667
    %v669 = vpop.f32.mrb[0].mxu0
    %v670 = vadd.f32 %v181, %v669
    %v671 = vpop.f32.mrb[0].mxu0
    %v672 = vadd.f32 %v177, %v671
    %v673 = vpop.f32.mrb[0].mxu0
    %v674 = vadd.f32 %v181, %v673
    %675 = vmatprep.mubr.bf16.mxu0 0
    %676 = vmatmul.mubr.bf16.gmra.mrb[0].mxu0 %v224
    %v677 = vpop.f32.mrb[0].mxu0
    %v678 = vadd.f32 %v177, %v677
    %v679 = vpop.f32.mrb[0].mxu0
    %v680 = vadd.f32 %v181, %v679
    %v681 = vpop.f32.mrb[0].mxu0
    %v682 = vadd.f32 %v177, %v681
    %v683 = vpop.f32.mrb[0].mxu0
    %v684 = vadd.f32 %v181, %v683
    %685 = vmatprep.mubr.bf16.mxu0 0
    %686 = vmatmul.mubr.bf16.gmra.mrb[0].mxu0 %v225
    %v687 = vpop.f32.mrb[0].mxu0
    %v688 = vadd.f32 %v177, %v687
    %v689 = vpop.f32.mrb[0].mxu0
    %v690 = vadd.f32 %v181, %v689
    %v691 = vpop.f32.mrb[0].mxu0
    %v692 = vadd.f32 %v177, %v691
    %v693 = vpop.f32.mrb[0].mxu0
    %v694 = vadd.f32 %v181, %v693
    %695 = vdwg.mxu0
    %696 = vmatprep.subr.bf16.mxu0 %v427
    %697 = vmatpush1.bf16.msra.mxu0 %v426
    %698 = vmatprep.subr.bf16.mxu0 %v435
    %699 = vmatpush1.bf16.msra.mxu0 %v434
    %700 = vmatprep.subr.bf16.mxu0 %v443
    %701 = vmatpush1.bf16.msra.mxu0 %v442
    %702 = vmatprep.subr.bf16.mxu0 %v451
    %703 = vmatpush1.bf16.msra.mxu0 %v450
    %704 = vmatprep.subr.bf16.mxu0 %v459
    %705 = vmatpush1.bf16.msra.mxu0 %v458
    %706 = vmatprep.subr.bf16.mxu0 %v467
    %707 = vmatpush1.bf16.msra.mxu0 %v466
    %708 = vmatprep.subr.bf16.mxu0 %v475
    %709 = vmatpush1.bf16.msra.mxu0 %v474
    %710 = vmatprep.subr.bf16.mxu0 %v483
    %711 = vmatpush1.bf16.msra.mxu0 %v482
    %712 = vmatprep.subr.bf16.mxu0 0
    %713 = vmatpush1.bf16.msra.mxu0 0
    %714 = vmatprep.subr.bf16.mxu0 0
    %715 = vmatpush1.bf16.msra.mxu0 0
    %716 = vmatprep.subr.bf16.mxu0 0
    %717 = vmatpush1.bf16.msra.mxu0 0
    %718 = vmatprep.subr.bf16.mxu0 0
    %719 = vmatpush1.bf16.msra.mxu0 0
    %720 = vmatprep.subr.bf16.mxu0 0
    %721 = vmatpush1.bf16.msra.mxu0 0
    %722 = vmatprep.subr.bf16.mxu0 0
    %723 = vmatpush1.bf16.msra.mxu0 0
    %724 = vmatprep.subr.bf16.mxu0 0
    %725 = vmatpush1.bf16.msra.mxu0 0
    %726 = vmatprep.subr.bf16.mxu0 0
    %727 = vmatpush1.bf16.msra.mxu0 0
    %728 = vmatprep.mubr.bf16.mxu0 0
    %729 = vmatmul.mubr.bf16.gmra.mrb[0].mxu0 %v222
    %v730 = vpop.f32.mrb[0].mxu0
    %v731 = vadd.f32 %v185, %v730
    %v732 = vpop.f32.mrb[0].mxu0
    %v733 = vadd.f32 %v189, %v732
    %v734 = vpop.f32.mrb[0].mxu0
    %v735 = vadd.f32 %v185, %v734
    %v736 = vpop.f32.mrb[0].mxu0
    %v737 = vadd.f32 %v189, %v736
    %738 = vmatprep.mubr.bf16.mxu0 0
    %739 = vmatmul.mubr.bf16.gmra.mrb[0].mxu0 %v223
    %v740 = vpop.f32.mrb[0].mxu0
    %v741 = vadd.f32 %v185, %v740
    %v742 = vpop.f32.mrb[0].mxu0
    %v743 = vadd.f32 %v189, %v742
    %v744 = vpop.f32.mrb[0].mxu0
    %v745 = vadd.f32 %v185, %v744
    %v746 = vpop.f32.mrb[0].mxu0
    %v747 = vadd.f32 %v189, %v746
    %748 = vmatprep.mubr.bf16.mxu0 0
    %749 = vmatmul.mubr.bf16.gmra.mrb[0].mxu0 %v224
    %v750 = vpop.f32.mrb[0].mxu0
    %v751 = vadd.f32 %v185, %v750
    %v752 = vpop.f32.mrb[0].mxu0
    %v753 = vadd.f32 %v189, %v752
    %v754 = vpop.f32.mrb[0].mxu0
    %v755 = vadd.f32 %v185, %v754
    %v756 = vpop.f32.mrb[0].mxu0
    %v757 = vadd.f32 %v189, %v756
    %758 = vmatprep.mubr.bf16.mxu0 0
    %759 = vmatmul.mubr.bf16.gmra.mrb[0].mxu0 %v225
    %v760 = vpop.f32.mrb[0].mxu0
    %v761 = vadd.f32 %v185, %v760
    %v762 = vpop.f32.mrb[0].mxu0
    %v763 = vadd.f32 %v189, %v762
    %v764 = vpop.f32.mrb[0].mxu0
    %v765 = vadd.f32 %v185, %v764
    %v766 = vpop.f32.mrb[0].mxu0
    %v767 = vadd.f32 %v189, %v766
    %768 = vdwg.mxu0
    %769 = vmatprep.subr.bf16.mxu0 %v429
    %770 = vmatpush1.bf16.msra.mxu0 %v428
    %771 = vmatprep.subr.bf16.mxu0 %v437
    %772 = vmatpush1.bf16.msra.mxu0 %v436
    %773 = vmatprep.subr.bf16.mxu0 %v445
    %774 = vmatpush1.bf16.msra.mxu0 %v444
    %775 = vmatprep.subr.bf16.mxu0 %v453
    %776 = vmatpush1.bf16.msra.mxu0 %v452
    %777 = vmatprep.subr.bf16.mxu0 %v461
    %778 = vmatpush1.bf16.msra.mxu0 %v460
    %779 = vmatprep.subr.bf16.mxu0 %v469
    %780 = vmatpush1.bf16.msra.mxu0 %v468
    %781 = vmatprep.subr.bf16.mxu0 %v477
    %782 = vmatpush1.bf16.msra.mxu0 %v476
    %783 = vmatprep.subr.bf16.mxu0 %v485
    %784 = vmatpush1.bf16.msra.mxu0 %v484
    %785 = vmatprep.subr.bf16.mxu0 0
    %786 = vmatpush1.bf16.msra.mxu0 0
    %787 = vmatprep.subr.bf16.mxu0 0
    %788 = vmatpush1.bf16.msra.mxu0 0
    %789 = vmatprep.subr.bf16.mxu0 0
    %790 = vmatpush1.bf16.msra.mxu0 0
    %791 = vmatprep.subr.bf16.mxu0 0
    %792 = vmatpush1.bf16.msra.mxu0 0
    %793 = vmatprep.subr.bf16.mxu0 0
    %794 = vmatpush1.bf16.msra.mxu0 0
    %795 = vmatprep.subr.bf16.mxu0 0
    %796 = vmatpush1.bf16.msra.mxu0 0
    %797 = vmatprep.subr.bf16.mxu0 0
    %798 = vmatpush1.bf16.msra.mxu0 0
    %799 = vmatprep.subr.bf16.mxu0 0
    %800 = vmatpush1.bf16.msra.mxu0 0
    %801 = vmatprep.mubr.bf16.mxu0 0
    %802 = vmatmul.mubr.bf16.gmra.mrb[0].mxu0 %v222
    %v803 = vpop.f32.mrb[0].mxu0
    %v804 = vadd.f32 %v193, %v803
    %v805 = vpop.f32.mrb[0].mxu0
    %v806 = vadd.f32 %v197, %v805
    %v807 = vpop.f32.mrb[0].mxu0
    %v808 = vadd.f32 %v193, %v807
    %v809 = vpop.f32.mrb[0].mxu0
    %v810 = vadd.f32 %v197, %v809
    %811 = vmatprep.mubr.bf16.mxu0 0
    %812 = vmatmul.mubr.bf16.gmra.mrb[0].mxu0 %v223
    %v813 = vpop.f32.mrb[0].mxu0
    %v814 = vadd.f32 %v193, %v813
    %v815 = vpop.f32.mrb[0].mxu0
    %v816 = vadd.f32 %v197, %v815
    %v817 = vpop.f32.mrb[0].mxu0
    %v818 = vadd.f32 %v193, %v817
    %v819 = vpop.f32.mrb[0].mxu0
    %v820 = vadd.f32 %v197, %v819
    %821 = vmatprep.mubr.bf16.mxu0 0
    %822 = vmatmul.mubr.bf16.gmra.mrb[0].mxu0 %v224
    %v823 = vpop.f32.mrb[0].mxu0
    %v824 = vadd.f32 %v193, %v823
    %v825 = vpop.f32.mrb[0].mxu0
    %v826 = vadd.f32 %v197, %v825
    %v827 = vpop.f32.mrb[0].mxu0
    %v828 = vadd.f32 %v193, %v827
    %v829 = vpop.f32.mrb[0].mxu0
    %v830 = vadd.f32 %v197, %v829
    %831 = vmatprep.mubr.bf16.mxu0 0
    %832 = vmatmul.mubr.bf16.gmra.mrb[0].mxu0 %v225
    %v833 = vpop.f32.mrb[0].mxu0
    %v834 = vadd.f32 %v193, %v833
    %v835 = vpop.f32.mrb[0].mxu0
    %v836 = vadd.f32 %v197, %v835
    %v837 = vpop.f32.mrb[0].mxu0
    %v838 = vadd.f32 %v193, %v837
    %v839 = vpop.f32.mrb[0].mxu0
    %v840 = vadd.f32 %v197, %v839
    %841 = vdwg.mxu0
    %842 = vst [vmem:[#allocation2] sm:$0xff] %v585
    %843 = vst [vmem:[#allocation2 + $0x8] sm:$0xff] %v587
    %844 = vst [vmem:[#allocation2 + $0x10] sm:$0xff] %v658
    %845 = vst [vmem:[#allocation2 + $0x18] sm:$0xff] %v660
    %846 = vst [vmem:[#allocation2 + $0x20] sm:$0xff] %v731
    %847 = vst [vmem:[#allocation2 + $0x28] sm:$0xff] %v733
    %848 = vst [vmem:[#allocation2 + $0x30] sm:$0xff] %v804
    %849 = vst [vmem:[#allocation2 + $0x38] sm:$0xff] %v806
    %850 = vst [vmem:[#allocation2 + $0x40] sm:$0xff] %v589
    %851 = vst [vmem:[#allocation2 + $0x48] sm:$0xff] %v591
    %852 = vst [vmem:[#allocation2 + $0x50] sm:$0xff] %v662
    %853 = vst [vmem:[#allocation2 + $0x58] sm:$0xff] %v664
    %854 = vst [vmem:[#allocation2 + $0x60] sm:$0xff] %v735
    %855 = vst [vmem:[#allocation2 + $0x68] sm:$0xff] %v737
    %856 = vst [vmem:[#allocation2 + $0x70] sm:$0xff] %v808
    %857 = vst [vmem:[#allocation2 + $0x78] sm:$0xff] %v810
    %858 = vst [vmem:[#allocation2 + $0x80] sm:$0xff] %v595
    %859 = vst [vmem:[#allocation2 + $0x88] sm:$0xff] %v597
    %860 = vst [vmem:[#allocation2 + $0x90] sm:$0xff] %v668
    %861 = vst [vmem:[#allocation2 + $0x98] sm:$0xff] %v670
    %862 = vst [vmem:[#allocation2 + $0xa0] sm:$0xff] %v741
    %863 = vst [vmem:[#allocation2 + $0xa8] sm:$0xff] %v743
    %864 = vst [vmem:[#allocation2 + $0xb0] sm:$0xff] %v814
    %865 = vst [vmem:[#allocation2 + $0xb8] sm:$0xff] %v816
    %866 = vst [vmem:[#allocation2 + $0xc0] sm:$0xff] %v599
    %867 = vst [vmem:[#allocation2 + $0xc8] sm:$0xff] %v601
    %868 = vst [vmem:[#allocation2 + $0xd0] sm:$0xff] %v672
    %869 = vst [vmem:[#allocation2 + $0xd8] sm:$0xff] %v674
    %870 = vst [vmem:[#allocation2 + $0xe0] sm:$0xff] %v745
    %871 = vst [vmem:[#allocation2 + $0xe8] sm:$0xff] %v747
    %872 = vst [vmem:[#allocation2 + $0xf0] sm:$0xff] %v818
    %873 = vst [vmem:[#allocation2 + $0xf8] sm:$0xff] %v820
    %874 = vst [vmem:[#allocation2 + $0x100] sm:$0xff] %v605
    %875 = vst [vmem:[#allocation2 + $0x108] sm:$0xff] %v607
    %876 = vst [vmem:[#allocation2 + $0x110] sm:$0xff] %v678
    %877 = vst [vmem:[#allocation2 + $0x118] sm:$0xff] %v680
    %878 = vst [vmem:[#allocation2 + $0x120] sm:$0xff] %v751
    %879 = vst [vmem:[#allocation2 + $0x128] sm:$0xff] %v753
    %880 = vst [vmem:[#allocation2 + $0x130] sm:$0xff] %v824
    %881 = vst [vmem:[#allocation2 + $0x138] sm:$0xff] %v826
    %882 = vst [vmem:[#allocation2 + $0x140] sm:$0xff] %v609
    %883 = vst [vmem:[#allocation2 + $0x148] sm:$0xff] %v611
    %884 = vst [vmem:[#allocation2 + $0x150] sm:$0xff] %v682
    %885 = vst [vmem:[#allocation2 + $0x158] sm:$0xff] %v684
    %886 = vst [vmem:[#allocation2 + $0x160] sm:$0xff] %v755
    %887 = vst [vmem:[#allocation2 + $0x168] sm:$0xff] %v757
    %888 = vst [vmem:[#allocation2 + $0x170] sm:$0xff] %v828
    %889 = vst [vmem:[#allocation2 + $0x178] sm:$0xff] %v830
    %890 = vst [vmem:[#allocation2 + $0x180] sm:$0xff] %v615
    %891 = vst [vmem:[#allocation2 + $0x188] sm:$0xff] %v617
    %892 = vst [vmem:[#allocation2 + $0x190] sm:$0xff] %v688
    %893 = vst [vmem:[#allocation2 + $0x198] sm:$0xff] %v690
    %894 = vst [vmem:[#allocation2 + $0x1a0] sm:$0xff] %v761
    %895 = vst [vmem:[#allocation2 + $0x1a8] sm:$0xff] %v763
    %896 = vst [vmem:[#allocation2 + $0x1b0] sm:$0xff] %v834
    %897 = vst [vmem:[#allocation2 + $0x1b8] sm:$0xff] %v836
    %898 = vst [vmem:[#allocation2 + $0x1c0] sm:$0xff] %v619
    %899 = vst [vmem:[#allocation2 + $0x1c8] sm:$0xff] %v621
    %900 = vst [vmem:[#allocation2 + $0x1d0] sm:$0xff] %v692
    %901 = vst [vmem:[#allocation2 + $0x1d8] sm:$0xff] %v694
    %902 = vst [vmem:[#allocation2 + $0x1e0] sm:$0xff] %v765
    %903 = vst [vmem:[#allocation2 + $0x1e8] sm:$0xff] %v767
    %904 = vst [vmem:[#allocation2 + $0x1f0] sm:$0xff] %v838
    %905 = vst [vmem:[#allocation2 + $0x1f8] sm:$0xff] %v840
    %v906 = vld [vmem:[#allocation9] sm:$0xff]
    %v907 = vld [vmem:[#allocation9 + $0x8] sm:$0xff]
    %v908 = vld [vmem:[#allocation9 + $0x10] sm:$0xff]
    %v909 = vld [vmem:[#allocation9 + $0x18] sm:$0xff]
    %v910 = vld [vmem:[#allocation9 + $0x20] sm:$0xff]
    %v911 = vld [vmem:[#allocation9 + $0x28] sm:$0xff]
    %v912 = vld [vmem:[#allocation9 + $0x30] sm:$0xff]
    %v913 = vld [vmem:[#allocation9 + $0x38] sm:$0xff]
    %v914 = vld [vmem:[#allocation9 + $0x40] sm:$0xff]
    %v915 = vld [vmem:[#allocation9 + $0x48] sm:$0xff]
    %v916 = vld [vmem:[#allocation9 + $0x50] sm:$0xff]
    %v917 = vld [vmem:[#allocation9 + $0x58] sm:$0xff]
    %v918 = vld [vmem:[#allocation9 + $0x60] sm:$0xff]
    %v919 = vld [vmem:[#allocation9 + $0x68] sm:$0xff]
    %v920 = vld [vmem:[#allocation9 + $0x70] sm:$0xff]
    %v921 = vld [vmem:[#allocation9 + $0x78] sm:$0xff]
    %v922 = vld [vmem:[#allocation9 + $0x80] sm:$0xff]
    %v923 = vld [vmem:[#allocation9 + $0x88] sm:$0xff]
    %v924 = vld [vmem:[#allocation9 + $0x90] sm:$0xff]
    %v925 = vld [vmem:[#allocation9 + $0x98] sm:$0xff]
    %v926 = vld [vmem:[#allocation9 + $0xa0] sm:$0xff]
    %v927 = vld [vmem:[#allocation9 + $0xa8] sm:$0xff]
    %v928 = vld [vmem:[#allocation9 + $0xb0] sm:$0xff]
    %v929 = vld [vmem:[#allocation9 + $0xb8] sm:$0xff]
    %v930 = vld [vmem:[#allocation9 + $0xc0] sm:$0xff]
    %v931 = vld [vmem:[#allocation9 + $0xc8] sm:$0xff]
    %v932 = vld [vmem:[#allocation9 + $0xd0] sm:$0xff]
    %v933 = vld [vmem:[#allocation9 + $0xd8] sm:$0xff]
    %v934 = vld [vmem:[#allocation9 + $0xe0] sm:$0xff]
    %v935 = vld [vmem:[#allocation9 + $0xe8] sm:$0xff]
    %v936 = vld [vmem:[#allocation9 + $0xf0] sm:$0xff]
    %v937 = vld [vmem:[#allocation9 + $0xf8] sm:$0xff]
    %v938 = vld [vmem:[#allocation11] sm:$0xff]
    %v939 = vld [vmem:[#allocation11 + $0x8] sm:$0xff]
    %v940 = vld [vmem:[#allocation11 + $0x10] sm:$0xff]
    %v941 = vld [vmem:[#allocation11 + $0x18] sm:$0xff]
    %v942 = vld [vmem:[#allocation11 + $0x20] sm:$0xff]
    %v943 = vld [vmem:[#allocation11 + $0x28] sm:$0xff]
    %v944 = vld [vmem:[#allocation11 + $0x30] sm:$0xff]
    %v945 = vld [vmem:[#allocation11 + $0x38] sm:$0xff]
    %v946 = vld [vmem:[#allocation11 + $0x40] sm:$0xff]
    %v947 = vld [vmem:[#allocation11 + $0x48] sm:$0xff]
    %v948 = vld [vmem:[#allocation11 + $0x50] sm:$0xff]
    %v949 = vld [vmem:[#allocation11 + $0x58] sm:$0xff]
    %v950 = vld [vmem:[#allocation11 + $0x60] sm:$0xff]
    %v951 = vld [vmem:[#allocation11 + $0x68] sm:$0xff]
    %v952 = vld [vmem:[#allocation11 + $0x70] sm:$0xff]
    %v953 = vld [vmem:[#allocation11 + $0x78] sm:$0xff]
    %v954 = vld [vmem:[#allocation11 + $0x80] sm:$0xff]
    %v955 = vld [vmem:[#allocation11 + $0x88] sm:$0xff]
    %v956 = vld [vmem:[#allocation11 + $0x90] sm:$0xff]
    %v957 = vld [vmem:[#allocation11 + $0x98] sm:$0xff]
    %v958 = vld [vmem:[#allocation11 + $0xa0] sm:$0xff]
    %v959 = vld [vmem:[#allocation11 + $0xa8] sm:$0xff]
    %v960 = vld [vmem:[#allocation11 + $0xb0] sm:$0xff]
    %v961 = vld [vmem:[#allocation11 + $0xb8] sm:$0xff]
    %v962 = vld [vmem:[#allocation11 + $0xc0] sm:$0xff]
    %v963 = vld [vmem:[#allocation11 + $0xc8] sm:$0xff]
    %v964 = vld [vmem:[#allocation11 + $0xd0] sm:$0xff]
    %v965 = vld [vmem:[#allocation11 + $0xd8] sm:$0xff]
    %v966 = vld [vmem:[#allocation11 + $0xe0] sm:$0xff]
    %v967 = vld [vmem:[#allocation11 + $0xe8] sm:$0xff]
    %v968 = vld [vmem:[#allocation11 + $0xf0] sm:$0xff]
    %v969 = vld [vmem:[#allocation11 + $0xf8] sm:$0xff]
    %v970 = vld [vmem:[#allocation2] sm:$0xff]
    %v971 = vld [vmem:[#allocation2 + $0x8] sm:$0xff]
    %v972 = vld [vmem:[#allocation2 + $0x10] sm:$0xff]
    %v973 = vld [vmem:[#allocation2 + $0x18] sm:$0xff]
    %v1006 = vunpack.c.l.b16 %v906
    %v1007 = vunpack.c.h.b16 %v906
    %v1008 = vunpack.c.l.b16 %v907
    %v1009 = vunpack.c.h.b16 %v907
    %v1010 = vunpack.c.l.b16 %v908
    %v1011 = vunpack.c.h.b16 %v908
    %v1012 = vunpack.c.l.b16 %v909
    %v1013 = vunpack.c.h.b16 %v909
    %v1014 = vunpack.c.l.b16 %v910
    %v1015 = vunpack.c.h.b16 %v910
    %v1016 = vunpack.c.l.b16 %v911
    %v1017 = vunpack.c.h.b16 %v911
    %v1018 = vunpack.c.l.b16 %v912
    %v1019 = vunpack.c.h.b16 %v912
    %v1020 = vunpack.c.l.b16 %v913
    %v1021 = vunpack.c.h.b16 %v913
    %v1022 = vunpack.c.l.b16 %v914
    %v1023 = vunpack.c.h.b16 %v914
    %v1024 = vunpack.c.l.b16 %v915
    %v1025 = vunpack.c.h.b16 %v915
    %v1026 = vunpack.c.l.b16 %v916
    %v1027 = vunpack.c.h.b16 %v916
    %v1028 = vunpack.c.l.b16 %v917
    %v1029 = vunpack.c.h.b16 %v917
    %v1030 = vunpack.c.l.b16 %v918
    %v1031 = vunpack.c.h.b16 %v918
    %v1032 = vunpack.c.l.b16 %v919
    %v1033 = vunpack.c.h.b16 %v919
    %v1034 = vunpack.c.l.b16 %v920
    %v1035 = vunpack.c.h.b16 %v920
    %v1036 = vunpack.c.l.b16 %v921
    %v1037 = vunpack.c.h.b16 %v921
    %v1038 = vunpack.c.l.b16 %v922
    %v1039 = vunpack.c.h.b16 %v922
    %v1040 = vunpack.c.l.b16 %v923
    %v1041 = vunpack.c.h.b16 %v923
    %v1042 = vunpack.c.l.b16 %v924
    %v1043 = vunpack.c.h.b16 %v924
    %v1044 = vunpack.c.l.b16 %v925
    %v1045 = vunpack.c.h.b16 %v925
    %v1046 = vunpack.c.l.b16 %v926
    %v1047 = vunpack.c.h.b16 %v926
    %v1048 = vunpack.c.l.b16 %v927
    %v1049 = vunpack.c.h.b16 %v927
    %v1050 = vunpack.c.l.b16 %v928
    %v1051 = vunpack.c.h.b16 %v928
    %v1052 = vunpack.c.l.b16 %v929
    %v1053 = vunpack.c.h.b16 %v929
    %v1054 = vunpack.c.l.b16 %v930
    %v1055 = vunpack.c.h.b16 %v930
    %v1056 = vunpack.c.l.b16 %v931
    %v1057 = vunpack.c.h.b16 %v931
    %v1058 = vunpack.c.l.b16 %v932
    %v1059 = vunpack.c.h.b16 %v932
    %v1060 = vunpack.c.l.b16 %v933
    %v1061 = vunpack.c.h.b16 %v933
    %v1062 = vunpack.c.l.b16 %v934
    %v1063 = vunpack.c.h.b16 %v934
    %v1064 = vunpack.c.l.b16 %v935
    %v1065 = vunpack.c.h.b16 %v935
    %v1066 = vunpack.c.l.b16 %v936
    %v1067 = vunpack.c.h.b16 %v936
    %v1068 = vunpack.c.l.b16 %v937
    %v1069 = vunpack.c.h.b16 %v937
    %v1070 = vpack.c.b16 %v1010, %v1006
    %v1071 = vpack.c.b16 %v1011, %v1007
    %v1072 = vpack.c.b16 %v1012, %v1008
    %v1073 = vpack.c.b16 %v1013, %v1009
    %v1074 = vpack.c.b16 %v1018, %v1014
    %v1075 = vpack.c.b16 %v1019, %v1015
    %v1076 = vpack.c.b16 %v1020, %v1016
    %v1077 = vpack.c.b16 %v1021, %v1017
    %v1078 = vpack.c.b16 %v1026, %v1022
    %v1079 = vpack.c.b16 %v1027, %v1023
    %v1080 = vpack.c.b16 %v1028, %v1024
    %v1081 = vpack.c.b16 %v1029, %v1025
    %v1082 = vpack.c.b16 %v1034, %v1030
    %v1083 = vpack.c.b16 %v1035, %v1031
    %v1084 = vpack.c.b16 %v1036, %v1032
    %v1085 = vpack.c.b16 %v1037, %v1033
    %v1086 = vpack.c.b16 %v1042, %v1038
    %v1087 = vpack.c.b16 %v1043, %v1039
    %v1088 = vpack.c.b16 %v1044, %v1040
    %v1089 = vpack.c.b16 %v1045, %v1041
    %v1090 = vpack.c.b16 %v1050, %v1046
    %v1091 = vpack.c.b16 %v1051, %v1047
    %v1092 = vpack.c.b16 %v1052, %v1048
    %v1093 = vpack.c.b16 %v1053, %v1049
    %v1094 = vpack.c.b16 %v1058, %v1054
    %v1095 = vpack.c.b16 %v1059, %v1055
    %v1096 = vpack.c.b16 %v1060, %v1056
    %v1097 = vpack.c.b16 %v1061, %v1057
    %v1098 = vpack.c.b16 %v1066, %v1062
    %v1099 = vpack.c.b16 %v1067, %v1063
    %v1100 = vpack.c.b16 %v1068, %v1064
    %v1101 = vpack.c.b16 %v1069, %v1065
    %1134 = vmatprep.subr.bf16.mxu0 %v1071
    %1135 = vmatpush1.bf16.msra.mxu0 %v1070
    %1136 = vmatprep.subr.bf16.mxu0 %v1075
    %1137 = vmatpush1.bf16.msra.mxu0 %v1074
    %1138 = vmatprep.subr.bf16.mxu0 %v1079
    %1139 = vmatpush1.bf16.msra.mxu0 %v1078
    %1140 = vmatprep.subr.bf16.mxu0 %v1083
    %1141 = vmatpush1.bf16.msra.mxu0 %v1082
    %1142 = vmatprep.subr.bf16.mxu0 %v1087
    %1143 = vmatpush1.bf16.msra.mxu0 %v1086
    %1144 = vmatprep.subr.bf16.mxu0 %v1091
    %1145 = vmatpush1.bf16.msra.mxu0 %v1090
    %1146 = vmatprep.subr.bf16.mxu0 %v1095
    %1147 = vmatpush1.bf16.msra.mxu0 %v1094
    %1148 = vmatprep.subr.bf16.mxu0 %v1099
    %1149 = vmatpush1.bf16.msra.mxu0 %v1098
    %1150 = vmatprep.subr.bf16.mxu0 0
    %1151 = vmatpush1.bf16.msra.mxu0 0
    %1152 = vmatprep.subr.bf16.mxu0 0
    %1153 = vmatpush1.bf16.msra.mxu0 0
    %1154 = vmatprep.subr.bf16.mxu0 0
    %1155 = vmatpush1.bf16.msra.mxu0 0
    %1156 = vmatprep.subr.bf16.mxu0 0
    %1157 = vmatpush1.bf16.msra.mxu0 0
    %1158 = vmatprep.subr.bf16.mxu0 0
    %1159 = vmatpush1.bf16.msra.mxu0 0
    %1160 = vmatprep.subr.bf16.mxu0 0
    %1161 = vmatpush1.bf16.msra.mxu0 0
    %1162 = vmatprep.subr.bf16.mxu0 0
    %1163 = vmatpush1.bf16.msra.mxu0 0
    %1164 = vmatprep.subr.bf16.mxu0 0
    %1165 = vmatpush1.bf16.msra.mxu0 0
    %1166 = vmatprep.mubr.bf16.mxu0 0
    %1167 = vmatmul.mubr.bf16.gmra.mrb[0].mxu0 0
    %v1168 = vpop.f32.mrb[0].mxu0
    %v1169 = vadd.f32 0.0, %v1168
    %v1170 = vpop.f32.mrb[0].mxu0
    %v1171 = vadd.f32 0.0, %v1170
    %v1172 = vpop.f32.mrb[0].mxu0
    %v1173 = vpop.f32.mrb[0].mxu0
    %1174 = vdwg.mxu0
    %1175 = vmatprep.subr.bf16.mxu0 %v1073
    %1176 = vmatpush1.bf16.msra.mxu0 %v1072
    %1177 = vmatprep.subr.bf16.mxu0 %v1077
    %1178 = vmatpush1.bf16.msra.mxu0 %v1076
    %1179 = vmatprep.subr.bf16.mxu0 %v1081
    %1180 = vmatpush1.bf16.msra.mxu0 %v1080
    %1181 = vmatprep.subr.bf16.mxu0 %v1085
    %1182 = vmatpush1.bf16.msra.mxu0 %v1084
    %1183 = vmatprep.subr.bf16.mxu0 %v1089
    %1184 = vmatpush1.bf16.msra.mxu0 %v1088
    %1185 = vmatprep.subr.bf16.mxu0 %v1093
    %1186 = vmatpush1.bf16.msra.mxu0 %v1092
    %1187 = vmatprep.subr.bf16.mxu0 %v1097
    %1188 = vmatpush1.bf16.msra.mxu0 %v1096
    %1189 = vmatprep.subr.bf16.mxu0 %v1101
    %1190 = vmatpush1.bf16.msra.mxu0 %v1100
    %1191 = vmatprep.subr.bf16.mxu0 0
    %1192 = vmatpush1.bf16.msra.mxu0 0
    %1193 = vmatprep.subr.bf16.mxu0 0
    %1194 = vmatpush1.bf16.msra.mxu0 0
    %1195 = vmatprep.subr.bf16.mxu0 0
    %1196 = vmatpush1.bf16.msra.mxu0 0
    %1197 = vmatprep.subr.bf16.mxu0 0
    %1198 = vmatpush1.bf16.msra.mxu0 0
    %1199 = vmatprep.subr.bf16.mxu0 0
    %1200 = vmatpush1.bf16.msra.mxu0 0
    %1201 = vmatprep.subr.bf16.mxu0 0
    %1202 = vmatpush1.bf16.msra.mxu0 0
    %1203 = vmatprep.subr.bf16.mxu0 0
    %1204 = vmatpush1.bf16.msra.mxu0 0
    %1205 = vmatprep.subr.bf16.mxu0 0
    %1206 = vmatpush1.bf16.msra.mxu0 0
    %1207 = vmatprep.mubr.bf16.mxu0 0
    %1208 = vmatmul.mubr.bf16.gmra.mrb[0].mxu0 0
    %v1209 = vpop.f32.mrb[0].mxu0
    %v1210 = vadd.f32 0.0, %v1209
    %v1211 = vpop.f32.mrb[0].mxu0
    %v1212 = vadd.f32 0.0, %v1211
    %v1213 = vpop.f32.mrb[0].mxu0
    %v1214 = vpop.f32.mrb[0].mxu0
    %1215 = vdwg.mxu0
    %v1216 = vadd.f32 %v970, %v1169
    %v1217 = vadd.f32 %v971, %v1171
    %v1218 = vadd.f32 %v972, %v1210
    %v1219 = vadd.f32 %v973, %v1212
    %v1220 = vxor.u32 %v1216, 2147483648
    %v1221 = vmul.f32 %v1220, 1.442695
    %v1222 = vpow.pop %v1221
    %v1223 = vadd.f32 %v1222, 1.0
    %v1224 = vrcp.pop %v1223
    %v1225 = vmul.f32 1.0, %v1224
    %v1226 = vxor.u32 %v1217, 2147483648
    %v1227 = vmul.f32 %v1226, 1.442695
    %v1228 = vpow.pop %v1227
    %v1229 = vadd.f32 %v1228, 1.0
    %v1230 = vrcp.pop %v1229
    %v1231 = vmul.f32 1.0, %v1230
    %v1232 = vtanh.pop %v1218
    %v1233 = vxor.u32 %v1219, 2147483648
    %v1234 = vmul.f32 %v1233, 1.442695
    %v1235 = vpow.pop %v1234
    %v1236 = vadd.f32 %v1235, 1.0
    %v1237 = vrcp.pop %v1236
    %v1238 = vmul.f32 1.0, %v1237
    %v1239 = vmul.f32 %v1231, 0.0
    %v1240 = vmul.f32 %v1225, %v1232
    %v1241 = vadd.f32 %v1239, %v1240
    %v1242 = vtanh.pop %v1241
    %v1243 = vmul.f32 %v1238, %v1242
    %s1244 = scalar_lea.vmem [#allocation2], 448
    %v1245 = vld [vmem:[%s1244 + $0x20] sm:$0xff]
    %v1246 = vld [vmem:[%s1244 + $0x28] sm:$0xff]
    %v1247 = vld [vmem:[%s1244 + $0x30] sm:$0xff]
    %v1248 = vld [vmem:[%s1244 + $0x38] sm:$0xff]
    %v1281 = vunpack.c.l.b16 %v938
    %v1282 = vunpack.c.h.b16 %v938
    %v1283 = vunpack.c.l.b16 %v939
    %v1284 = vunpack.c.h.b16 %v939
    %v1285 = vunpack.c.l.b16 %v940
    %v1286 = vunpack.c.h.b16 %v940
    %v1287 = vunpack.c.l.b16 %v941
    %v1288 = vunpack.c.h.b16 %v941
    %v1289 = vunpack.c.l.b16 %v942
    %v1290 = vunpack.c.h.b16 %v942
    %v1291 = vunpack.c.l.b16 %v943
    %v1292 = vunpack.c.h.b16 %v943
    %v1293 = vunpack.c.l.b16 %v944
    %v1294 = vunpack.c.h.b16 %v944
    %v1295 = vunpack.c.l.b16 %v945
    %v1296 = vunpack.c.h.b16 %v945
    %v1297 = vunpack.c.l.b16 %v946
    %v1298 = vunpack.c.h.b16 %v946
    %v1299 = vunpack.c.l.b16 %v947
    %v1300 = vunpack.c.h.b16 %v947
    %v1301 = vunpack.c.l.b16 %v948
    %v1302 = vunpack.c.h.b16 %v948
    %v1303 = vunpack.c.l.b16 %v949
    %v1304 = vunpack.c.h.b16 %v949
    %v1305 = vunpack.c.l.b16 %v950
    %v1306 = vunpack.c.h.b16 %v950
    %v1307 = vunpack.c.l.b16 %v951
    %v1308 = vunpack.c.h.b16 %v951
    %v1309 = vunpack.c.l.b16 %v952
    %v1310 = vunpack.c.h.b16 %v952
    %v1311 = vunpack.c.l.b16 %v953
    %v1312 = vunpack.c.h.b16 %v953
    %v1313 = vunpack.c.l.b16 %v954
    %v1314 = vunpack.c.h.b16 %v954
    %v1315 = vunpack.c.l.b16 %v955
    %v1316 = vunpack.c.h.b16 %v955
    %v1317 = vunpack.c.l.b16 %v956
    %v1318 = vunpack.c.h.b16 %v956
    %v1319 = vunpack.c.l.b16 %v957
    %v1320 = vunpack.c.h.b16 %v957
    %v1321 = vunpack.c.l.b16 %v958
    %v1322 = vunpack.c.h.b16 %v958
    %v1323 = vunpack.c.l.b16 %v959
    %v1324 = vunpack.c.h.b16 %v959
    %v1325 = vunpack.c.l.b16 %v960
    %v1326 = vunpack.c.h.b16 %v960
    %v1327 = vunpack.c.l.b16 %v961
    %v1328 = vunpack.c.h.b16 %v961
    %v1329 = vunpack.c.l.b16 %v962
    %v1330 = vunpack.c.h.b16 %v962
    %v1331 = vunpack.c.l.b16 %v963
    %v1332 = vunpack.c.h.b16 %v963
    %v1333 = vunpack.c.l.b16 %v964
    %v1334 = vunpack.c.h.b16 %v964
    %v1335 = vunpack.c.l.b16 %v965
    %v1336 = vunpack.c.h.b16 %v965
    %v1337 = vunpack.c.l.b16 %v966
    %v1338 = vunpack.c.h.b16 %v966
    %v1339 = vunpack.c.l.b16 %v967
    %v1340 = vunpack.c.h.b16 %v967
    %v1341 = vunpack.c.l.b16 %v968
    %v1342 = vunpack.c.h.b16 %v968
    %v1343 = vunpack.c.l.b16 %v969
    %v1344 = vunpack.c.h.b16 %v969
    %v1345 = vpack.c.b16 %v1285, %v1281
    %v1346 = vpack.c.b16 %v1286, %v1282
    %v1347 = vpack.c.b16 %v1287, %v1283
    %v1348 = vpack.c.b16 %v1288, %v1284
    %v1349 = vpack.c.b16 %v1293, %v1289
    %v1350 = vpack.c.b16 %v1294, %v1290
    %v1351 = vpack.c.b16 %v1295, %v1291
    %v1352 = vpack.c.b16 %v1296, %v1292
    %v1353 = vpack.c.b16 %v1301, %v1297
    %v1354 = vpack.c.b16 %v1302, %v1298
    %v1355 = vpack.c.b16 %v1303, %v1299
    %v1356 = vpack.c.b16 %v1304, %v1300
    %v1357 = vpack.c.b16 %v1309, %v1305
    %v1358 = vpack.c.b16 %v1310, %v1306
    %v1359 = vpack.c.b16 %v1311, %v1307
    %v1360 = vpack.c.b16 %v1312, %v1308
    %v1361 = vpack.c.b16 %v1317, %v1313
    %v1362 = vpack.c.b16 %v1318, %v1314
    %v1363 = vpack.c.b16 %v1319, %v1315
    %v1364 = vpack.c.b16 %v1320, %v1316
    %v1365 = vpack.c.b16 %v1325, %v1321
    %v1366 = vpack.c.b16 %v1326, %v1322
    %v1367 = vpack.c.b16 %v1327, %v1323
    %v1368 = vpack.c.b16 %v1328, %v1324
    %v1369 = vpack.c.b16 %v1333, %v1329
    %v1370 = vpack.c.b16 %v1334, %v1330
    %v1371 = vpack.c.b16 %v1335, %v1331
    %v1372 = vpack.c.b16 %v1336, %v1332
    %v1373 = vpack.c.b16 %v1341, %v1337
    %v1374 = vpack.c.b16 %v1342, %v1338
    %v1375 = vpack.c.b16 %v1343, %v1339
    %v1376 = vpack.c.b16 %v1344, %v1340
    %1409 = vmatprep.subr.bf16.mxu0 %v1346
    %1410 = vmatpush1.bf16.msra.mxu0 %v1345
    %1411 = vmatprep.subr.bf16.mxu0 %v1350
    %1412 = vmatpush1.bf16.msra.mxu0 %v1349
    %1413 = vmatprep.subr.bf16.mxu0 %v1354
    %1414 = vmatpush1.bf16.msra.mxu0 %v1353
    %1415 = vmatprep.subr.bf16.mxu0 %v1358
    %1416 = vmatpush1.bf16.msra.mxu0 %v1357
    %1417 = vmatprep.subr.bf16.mxu0 %v1362
    %1418 = vmatpush1.bf16.msra.mxu0 %v1361
    %1419 = vmatprep.subr.bf16.mxu0 %v1366
    %1420 = vmatpush1.bf16.msra.mxu0 %v1365
    %1421 = vmatprep.subr.bf16.mxu0 %v1370
    %1422 = vmatpush1.bf16.msra.mxu0 %v1369
    %1423 = vmatprep.subr.bf16.mxu0 %v1374
    %1424 = vmatpush1.bf16.msra.mxu0 %v1373
    %1425 = vmatprep.subr.bf16.mxu0 0
    %1426 = vmatpush1.bf16.msra.mxu0 0
    %1427 = vmatprep.subr.bf16.mxu0 0
    %1428 = vmatpush1.bf16.msra.mxu0 0
    %1429 = vmatprep.subr.bf16.mxu0 0
    %1430 = vmatpush1.bf16.msra.mxu0 0
    %1431 = vmatprep.subr.bf16.mxu0 0
    %1432 = vmatpush1.bf16.msra.mxu0 0
    %1433 = vmatprep.subr.bf16.mxu0 0
    %1434 = vmatpush1.bf16.msra.mxu0 0
    %1435 = vmatprep.subr.bf16.mxu0 0
    %1436 = vmatpush1.bf16.msra.mxu0 0
    %1437 = vmatprep.subr.bf16.mxu0 0
    %1438 = vmatpush1.bf16.msra.mxu0 0
    %1439 = vmatprep.subr.bf16.mxu0 0
    %1440 = vmatpush1.bf16.msra.mxu0 0
    %1441 = vmatprep.mubr.bf16.mxu0 0
    %1442 = vmatmul.mubr.bf16.gmra.mrb[0].mxu0 0
    %v1443 = vpop.f32.mrb[0].mxu0
    %v1444 = vadd.f32 0.0, %v1443
    %v1445 = vpop.f32.mrb[0].mxu0
    %v1446 = vadd.f32 0.0, %v1445
    %v1447 = vpop.f32.mrb[0].mxu0
    %v1448 = vpop.f32.mrb[0].mxu0
    %1449 = vdwg.mxu0
    %1450 = vmatprep.subr.bf16.mxu0 %v1348
    %1451 = vmatpush1.bf16.msra.mxu0 %v1347
    %1452 = vmatprep.subr.bf16.mxu0 %v1352
    %1453 = vmatpush1.bf16.msra.mxu0 %v1351
    %1454 = vmatprep.subr.bf16.mxu0 %v1356
    %1455 = vmatpush1.bf16.msra.mxu0 %v1355
    %1456 = vmatprep.subr.bf16.mxu0 %v1360
    %1457 = vmatpush1.bf16.msra.mxu0 %v1359
    %1458 = vmatprep.subr.bf16.mxu0 %v1364
    %1459 = vmatpush1.bf16.msra.mxu0 %v1363
    %1460 = vmatprep.subr.bf16.mxu0 %v1368
    %1461 = vmatpush1.bf16.msra.mxu0 %v1367
    %1462 = vmatprep.subr.bf16.mxu0 %v1372
    %1463 = vmatpush1.bf16.msra.mxu0 %v1371
    %1464 = vmatprep.subr.bf16.mxu0 %v1376
    %1465 = vmatpush1.bf16.msra.mxu0 %v1375
    %1466 = vmatprep.subr.bf16.mxu0 0
    %1467 = vmatpush1.bf16.msra.mxu0 0
    %1468 = vmatprep.subr.bf16.mxu0 0
    %1469 = vmatpush1.bf16.msra.mxu0 0
    %1470 = vmatprep.subr.bf16.mxu0 0
    %1471 = vmatpush1.bf16.msra.mxu0 0
    %1472 = vmatprep.subr.bf16.mxu0 0
    %1473 = vmatpush1.bf16.msra.mxu0 0
    %1474 = vmatprep.subr.bf16.mxu0 0
    %1475 = vmatpush1.bf16.msra.mxu0 0
    %1476 = vmatprep.subr.bf16.mxu0 0
    %1477 = vmatpush1.bf16.msra.mxu0 0
    %1478 = vmatprep.subr.bf16.mxu0 0
    %1479 = vmatpush1.bf16.msra.mxu0 0
    %1480 = vmatprep.subr.bf16.mxu0 0
    %1481 = vmatpush1.bf16.msra.mxu0 0
    %1482 = vmatprep.mubr.bf16.mxu0 0
    %1483 = vmatmul.mubr.bf16.gmra.mrb[0].mxu0 0
    %v1484 = vpop.f32.mrb[0].mxu0
    %v1485 = vadd.f32 0.0, %v1484
    %v1486 = vpop.f32.mrb[0].mxu0
    %v1487 = vadd.f32 0.0, %v1486
    %v1488 = vpop.f32.mrb[0].mxu0
    %v1489 = vpop.f32.mrb[0].mxu0
    %1490 = vdwg.mxu0
    %v1491 = vadd.f32 %v1245, %v1444
    %v1492 = vadd.f32 %v1246, %v1446
    %v1493 = vadd.f32 %v1247, %v1485
    %v1494 = vadd.f32 %v1248, %v1487
    %v1495 = vxor.u32 %v1491, 2147483648
    %v1496 = vmul.f32 %v1495, 1.442695
    %v1497 = vpow.pop %v1496
    %v1498 = vadd.f32 %v1497, 1.0
    %v1499 = vrcp.pop %v1498
    %v1500 = vmul.f32 1.0, %v1499
    %v1501 = vxor.u32 %v1492, 2147483648
    %v1502 = vmul.f32 %v1501, 1.442695
    %v1503 = vpow.pop %v1502
    %v1504 = vadd.f32 %v1503, 1.0
    %v1505 = vrcp.pop %v1504
    %v1506 = vmul.f32 1.0, %v1505
    %v1507 = vtanh.pop %v1493
    %v1508 = vxor.u32 %v1494, 2147483648
    %v1509 = vmul.f32 %v1508, 1.442695
    %v1510 = vpow.pop %v1509
    %v1511 = vadd.f32 %v1510, 1.0
    %v1512 = vrcp.pop %v1511
    %v1513 = vmul.f32 1.0, %v1512
    %v1514 = vmul.f32 %v1506, 0.0
    %v1515 = vmul.f32 %v1500, %v1507
    %v1516 = vadd.f32 %v1514, %v1515
    %v1517 = vtanh.pop %v1516
    %v1518 = vmul.f32 %v1513, %v1517
    %1519 = vst [vmem:[#allocation12] sm:$0xff] %v1243
    %s1520 = scalar_lea.vmem [#allocation12], 112
    %1521 = vst [vmem:[%s1520 + $0x8] sm:$0xff] %v1518
    %s1522 = scalar_lea.vmem [#allocation2], 64
    %v1523 = vld [vmem:[%s1522] sm:$0xff]
    %v1524 = vld [vmem:[%s1522 + $0x8] sm:$0xff]
    %v1525 = vld [vmem:[%s1522 + $0x10] sm:$0xff]
    %v1526 = vld [vmem:[%s1522 + $0x18] sm:$0xff]
    %v1527 = vpack.c.bf16 %v1243, %v1243
    %1528 = vmatprep.subr.bf16.mxu0 %v1071
    %1529 = vmatpush1.bf16.msra.mxu0 %v1070
    %1530 = vmatprep.subr.bf16.mxu0 %v1075
    %1531 = vmatpush1.bf16.msra.mxu0 %v1074
    %1532 = vmatprep.subr.bf16.mxu0 %v1079
    %1533 = vmatpush1.bf16.msra.mxu0 %v1078
    %1534 = vmatprep.subr.bf16.mxu0 %v1083
    %1535 = vmatpush1.bf16.msra.mxu0 %v1082
    %1536 = vmatprep.subr.bf16.mxu0 %v1087
    %1537 = vmatpush1.bf16.msra.mxu0 %v1086
    %1538 = vmatprep.subr.bf16.mxu0 %v1091
    %1539 = vmatpush1.bf16.msra.mxu0 %v1090
    %1540 = vmatprep.subr.bf16.mxu0 %v1095
    %1541 = vmatpush1.bf16.msra.mxu0 %v1094
    %1542 = vmatprep.subr.bf16.mxu0 %v1099
    %1543 = vmatpush1.bf16.msra.mxu0 %v1098
    %1544 = vmatprep.subr.bf16.mxu0 0
    %1545 = vmatpush1.bf16.msra.mxu0 0
    %1546 = vmatprep.subr.bf16.mxu0 0
    %1547 = vmatpush1.bf16.msra.mxu0 0
    %1548 = vmatprep.subr.bf16.mxu0 0
    %1549 = vmatpush1.bf16.msra.mxu0 0
    %1550 = vmatprep.subr.bf16.mxu0 0
    %1551 = vmatpush1.bf16.msra.mxu0 0
    %1552 = vmatprep.subr.bf16.mxu0 0
    %1553 = vmatpush1.bf16.msra.mxu0 0
    %1554 = vmatprep.subr.bf16.mxu0 0
    %1555 = vmatpush1.bf16.msra.mxu0 0
    %1556 = vmatprep.subr.bf16.mxu0 0
    %1557 = vmatpush1.bf16.msra.mxu0 0
    %1558 = vmatprep.subr.bf16.mxu0 0
    %1559 = vmatpush1.bf16.msra.mxu0 0
    %1560 = vmatprep.mubr.bf16.mxu0 0
    %1561 = vmatmul.mubr.bf16.gmra.mrb[0].mxu0 %v1527
    %v1562 = vpop.f32.mrb[0].mxu0
    %v1563 = vadd.f32 0.0, %v1562
    %v1564 = vpop.f32.mrb[0].mxu0
    %v1565 = vadd.f32 0.0, %v1564
    %v1566 = vpop.f32.mrb[0].mxu0
    %v1567 = vpop.f32.mrb[0].mxu0
    %1568 = vdwg.mxu0
    %1569 = vmatprep.subr.bf16.mxu0 %v1073
    %1570 = vmatpush1.bf16.msra.mxu0 %v1072
    %1571 = vmatprep.subr.bf16.mxu0 %v1077
    %1572 = vmatpush1.bf16.msra.mxu0 %v1076
    %1573 = vmatprep.subr.bf16.mxu0 %v1081
    %1574 = vmatpush1.bf16.msra.mxu0 %v1080
    %1575 = vmatprep.subr.bf16.mxu0 %v1085
    %1576 = vmatpush1.bf16.msra.mxu0 %v1084
    %1577 = vmatprep.subr.bf16.mxu0 %v1089
    %1578 = vmatpush1.bf16.msra.mxu0 %v1088
    %1579 = vmatprep.subr.bf16.mxu0 %v1093
    %1580 = vmatpush1.bf16.msra.mxu0 %v1092
    %1581 = vmatprep.subr.bf16.mxu0 %v1097
    %1582 = vmatpush1.bf16.msra.mxu0 %v1096
    %1583 = vmatprep.subr.bf16.mxu0 %v1101
    %1584 = vmatpush1.bf16.msra.mxu0 %v1100
    %1585 = vmatprep.subr.bf16.mxu0 0
    %1586 = vmatpush1.bf16.msra.mxu0 0
    %1587 = vmatprep.subr.bf16.mxu0 0
    %1588 = vmatpush1.bf16.msra.mxu0 0
    %1589 = vmatprep.subr.bf16.mxu0 0
    %1590 = vmatpush1.bf16.msra.mxu0 0
    %1591 = vmatprep.subr.bf16.mxu0 0
    %1592 = vmatpush1.bf16.msra.mxu0 0
    %1593 = vmatprep.subr.bf16.mxu0 0
    %1594 = vmatpush1.bf16.msra.mxu0 0
    %1595 = vmatprep.subr.bf16.mxu0 0
    %1596 = vmatpush1.bf16.msra.mxu0 0
    %1597 = vmatprep.subr.bf16.mxu0 0
    %1598 = vmatpush1.bf16.msra.mxu0 0
    %1599 = vmatprep.subr.bf16.mxu0 0
    %1600 = vmatpush1.bf16.msra.mxu0 0
    %1601 = vmatprep.mubr.bf16.mxu0 0
    %1602 = vmatmul.mubr.bf16.gmra.mrb[0].mxu0 %v1527
    %v1603 = vpop.f32.mrb[0].mxu0
    %v1604 = vadd.f32 0.0, %v1603
    %v1605 = vpop.f32.mrb[0].mxu0
    %v1606 = vadd.f32 0.0, %v1605
    %v1607 = vpop.f32.mrb[0].mxu0
    %v1608 = vpop.f32.mrb[0].mxu0
    %1609 = vdwg.mxu0
    %v1610 = vadd.f32 %v1523, %v1563
    %v1611 = vadd.f32 %v1524, %v1565
    %v1612 = vadd.f32 %v1525, %v1604
    %v1613 = vadd.f32 %v1526, %v1606
    %v1614 = vxor.u32 %v1610, 2147483648
    %v1615 = vmul.f32 %v1614, 1.442695
    %v1616 = vpow.pop %v1615
    %v1617 = vadd.f32 %v1616, 1.0
    %v1618 = vrcp.pop %v1617
    %v1619 = vmul.f32 1.0, %v1618
    %v1620 = vxor.u32 %v1611, 2147483648
    %v1621 = vmul.f32 %v1620, 1.442695
    %v1622 = vpow.pop %v1621
    %v1623 = vadd.f32 %v1622, 1.0
    %v1624 = vrcp.pop %v1623
    %v1625 = vmul.f32 1.0, %v1624
    %v1626 = vtanh.pop %v1612
    %v1627 = vxor.u32 %v1613, 2147483648
    %v1628 = vmul.f32 %v1627, 1.442695
    %v1629 = vpow.pop %v1628
    %v1630 = vadd.f32 %v1629, 1.0
    %v1631 = vrcp.pop %v1630
    %v1632 = vmul.f32 1.0, %v1631
    %v1633 = vmul.f32 %v1625, %v1241
    %v1634 = vmul.f32 %v1619, %v1626
    %v1635 = vadd.f32 %v1633, %v1634
    %v1636 = vtanh.pop %v1635
    %v1637 = vmul.f32 %v1632, %v1636
    %s1638 = scalar_lea.vmem [#allocation2], 384
    %v1639 = vld [vmem:[%s1638 + $0x20] sm:$0xff]
    %v1640 = vld [vmem:[%s1638 + $0x28] sm:$0xff]
    %v1641 = vld [vmem:[%s1638 + $0x30] sm:$0xff]
    %v1642 = vld [vmem:[%s1638 + $0x38] sm:$0xff]
    %v1643 = vpack.c.bf16 %v1518, %v1518
    %1644 = vmatprep.subr.bf16.mxu0 %v1346
    %1645 = vmatpush1.bf16.msra.mxu0 %v1345
    %1646 = vmatprep.subr.bf16.mxu0 %v1350
    %1647 = vmatpush1.bf16.msra.mxu0 %v1349
    %1648 = vmatprep.subr.bf16.mxu0 %v1354
    %1649 = vmatpush1.bf16.msra.mxu0 %v1353
    %1650 = vmatprep.subr.bf16.mxu0 %v1358
    %1651 = vmatpush1.bf16.msra.mxu0 %v1357
    %1652 = vmatprep.subr.bf16.mxu0 %v1362
    %1653 = vmatpush1.bf16.msra.mxu0 %v1361
    %1654 = vmatprep.subr.bf16.mxu0 %v1366
    %1655 = vmatpush1.bf16.msra.mxu0 %v1365
    %1656 = vmatprep.subr.bf16.mxu0 %v1370
    %1657 = vmatpush1.bf16.msra.mxu0 %v1369
    %1658 = vmatprep.subr.bf16.mxu0 %v1374
    %1659 = vmatpush1.bf16.msra.mxu0 %v1373
    %1660 = vmatprep.subr.bf16.mxu0 0
    %1661 = vmatpush1.bf16.msra.mxu0 0
    %1662 = vmatprep.subr.bf16.mxu0 0
    %1663 = vmatpush1.bf16.msra.mxu0 0
    %1664 = vmatprep.subr.bf16.mxu0 0
    %1665 = vmatpush1.bf16.msra.mxu0 0
    %1666 = vmatprep.subr.bf16.mxu0 0
    %1667 = vmatpush1.bf16.msra.mxu0 0
    %1668 = vmatprep.subr.bf16.mxu0 0
    %1669 = vmatpush1.bf16.msra.mxu0 0
    %1670 = vmatprep.subr.bf16.mxu0 0
    %1671 = vmatpush1.bf16.msra.mxu0 0
    %1672 = vmatprep.subr.bf16.mxu0 0
    %1673 = vmatpush1.bf16.msra.mxu0 0
    %1674 = vmatprep.subr.bf16.mxu0 0
    %1675 = vmatpush1.bf16.msra.mxu0 0
    %1676 = vmatprep.mubr.bf16.mxu0 0
    %1677 = vmatmul.mubr.bf16.gmra.mrb[0].mxu0 %v1643
    %v1678 = vpop.f32.mrb[0].mxu0
    %v1679 = vadd.f32 0.0, %v1678
    %v1680 = vpop.f32.mrb[0].mxu0
    %v1681 = vadd.f32 0.0, %v1680
    %v1682 = vpop.f32.mrb[0].mxu0
    %v1683 = vpop.f32.mrb[0].mxu0
    %1684 = vdwg.mxu0
    %1685 = vmatprep.subr.bf16.mxu0 %v1348
    %1686 = vmatpush1.bf16.msra.mxu0 %v1347
    %1687 = vmatprep.subr.bf16.mxu0 %v1352
    %1688 = vmatpush1.bf16.msra.mxu0 %v1351
    %1689 = vmatprep.subr.bf16.mxu0 %v1356
    %1690 = vmatpush1.bf16.msra.mxu0 %v1355
    %1691 = vmatprep.subr.bf16.mxu0 %v1360
    %1692 = vmatpush1.bf16.msra.mxu0 %v1359
    %1693 = vmatprep.subr.bf16.mxu0 %v1364
    %1694 = vmatpush1.bf16.msra.mxu0 %v1363
    %1695 = vmatprep.subr.bf16.mxu0 %v1368
    %1696 = vmatpush1.bf16.msra.mxu0 %v1367
    %1697 = vmatprep.subr.bf16.mxu0 %v1372
    %1698 = vmatpush1.bf16.msra.mxu0 %v1371
    %1699 = vmatprep.subr.bf16.mxu0 %v1376
    %1700 = vmatpush1.bf16.msra.mxu0 %v1375
    %1701 = vmatprep.subr.bf16.mxu0 0
    %1702 = vmatpush1.bf16.msra.mxu0 0
    %1703 = vmatprep.subr.bf16.mxu0 0
    %1704 = vmatpush1.bf16.msra.mxu0 0
    %1705 = vmatprep.subr.bf16.mxu0 0
    %1706 = vmatpush1.bf16.msra.mxu0 0
    %1707 = vmatprep.subr.bf16.mxu0 0
    %1708 = vmatpush1.bf16.msra.mxu0 0
    %1709 = vmatprep.subr.bf16.mxu0 0
    %1710 = vmatpush1.bf16.msra.mxu0 0
    %1711 = vmatprep.subr.bf16.mxu0 0
    %1712 = vmatpush1.bf16.msra.mxu0 0
    %1713 = vmatprep.subr.bf16.mxu0 0
    %1714 = vmatpush1.bf16.msra.mxu0 0
    %1715 = vmatprep.subr.bf16.mxu0 0
    %1716 = vmatpush1.bf16.msra.mxu0 0
    %1717 = vmatprep.mubr.bf16.mxu0 0
    %1718 = vmatmul.mubr.bf16.gmra.mrb[0].mxu0 %v1643
    %v1719 = vpop.f32.mrb[0].mxu0
    %v1720 = vadd.f32 0.0, %v1719
    %v1721 = vpop.f32.mrb[0].mxu0
    %v1722 = vadd.f32 0.0, %v1721
    %v1723 = vpop.f32.mrb[0].mxu0
    %v1724 = vpop.f32.mrb[0].mxu0
    %1725 = vdwg.mxu0
    %v1726 = vadd.f32 %v1639, %v1679
    %v1727 = vadd.f32 %v1640, %v1681
    %v1728 = vadd.f32 %v1641, %v1720
    %v1729 = vadd.f32 %v1642, %v1722
    %v1730 = vxor.u32 %v1726, 2147483648
    %v1731 = vmul.f32 %v1730, 1.442695
    %v1732 = vpow.pop %v1731
    %v1733 = vadd.f32 %v1732, 1.0
    %v1734 = vrcp.pop %v1733
    %v1735 = vmul.f32 1.0, %v1734
    %v1736 = vxor.u32 %v1727, 2147483648
    %v1737 = vmul.f32 %v1736, 1.442695
    %v1738 = vpow.pop %v1737
    %v1739 = vadd.f32 %v1738, 1.0
    %v1740 = vrcp.pop %v1739
    %v1741 = vmul.f32 1.0, %v1740
    %v1742 = vtanh.pop %v1728
    %v1743 = vxor.u32 %v1729, 2147483648
    %v1744 = vmul.f32 %v1743, 1.442695
    %v1745 = vpow.pop %v1744
    %v1746 = vadd.f32 %v1745, 1.0
    %v1747 = vrcp.pop %v1746
    %v1748 = vmul.f32 1.0, %v1747
    %v1749 = vmul.f32 %v1741, %v1516
    %v1750 = vmul.f32 %v1735, %v1742
    %v1751 = vadd.f32 %v1749, %v1750
    %v1752 = vtanh.pop %v1751
    %v1753 = vmul.f32 %v1748, %v1752
    %s1754 = scalar_lea.vmem [#allocation12], 16
    %1755 = vst [vmem:[%s1754] sm:$0xff] %v1637
    %s1756 = scalar_lea.vmem [#allocation12], 96
    %1757 = vst [vmem:[%s1756 + $0x8] sm:$0xff] %v1753
    %s1758 = scalar_lea.vmem [#allocation2], 128
    %v1759 = vld [vmem:[%s1758] sm:$0xff]
    %v1760 = vld [vmem:[%s1758 + $0x8] sm:$0xff]
    %v1761 = vld [vmem:[%s1758 + $0x10] sm:$0xff]
    %v1762 = vld [vmem:[%s1758 + $0x18] sm:$0xff]
    %v1763 = vpack.c.bf16 %v1637, %v1637
    %1764 = vmatprep.subr.bf16.mxu0 %v1071
    %1765 = vmatpush1.bf16.msra.mxu0 %v1070
    %1766 = vmatprep.subr.bf16.mxu0 %v1075
    %1767 = vmatpush1.bf16.msra.mxu0 %v1074
    %1768 = vmatprep.subr.bf16.mxu0 %v1079
    %1769 = vmatpush1.bf16.msra.mxu0 %v1078
    %1770 = vmatprep.subr.bf16.mxu0 %v1083
    %1771 = vmatpush1.bf16.msra.mxu0 %v1082
    %1772 = vmatprep.subr.bf16.mxu0 %v1087
    %1773 = vmatpush1.bf16.msra.mxu0 %v1086
    %1774 = vmatprep.subr.bf16.mxu0 %v1091
    %1775 = vmatpush1.bf16.msra.mxu0 %v1090
    %1776 = vmatprep.subr.bf16.mxu0 %v1095
    %1777 = vmatpush1.bf16.msra.mxu0 %v1094
    %1778 = vmatprep.subr.bf16.mxu0 %v1099
    %1779 = vmatpush1.bf16.msra.mxu0 %v1098
    %1780 = vmatprep.subr.bf16.mxu0 0
    %1781 = vmatpush1.bf16.msra.mxu0 0
    %1782 = vmatprep.subr.bf16.mxu0 0
    %1783 = vmatpush1.bf16.msra.mxu0 0
    %1784 = vmatprep.subr.bf16.mxu0 0
    %1785 = vmatpush1.bf16.msra.mxu0 0
    %1786 = vmatprep.subr.bf16.mxu0 0
    %1787 = vmatpush1.bf16.msra.mxu0 0
    %1788 = vmatprep.subr.bf16.mxu0 0
    %1789 = vmatpush1.bf16.msra.mxu0 0
    %1790 = vmatprep.subr.bf16.mxu0 0
    %1791 = vmatpush1.bf16.msra.mxu0 0
    %1792 = vmatprep.subr.bf16.mxu0 0
    %1793 = vmatpush1.bf16.msra.mxu0 0
    %1794 = vmatprep.subr.bf16.mxu0 0
    %1795 = vmatpush1.bf16.msra.mxu0 0
    %1796 = vmatprep.mubr.bf16.mxu0 0
    %1797 = vmatmul.mubr.bf16.gmra.mrb[0].mxu0 %v1763
    %v1798 = vpop.f32.mrb[0].mxu0
    %v1799 = vadd.f32 0.0, %v1798
    %v1800 = vpop.f32.mrb[0].mxu0
    %v1801 = vadd.f32 0.0, %v1800
    %v1802 = vpop.f32.mrb[0].mxu0
    %v1803 = vpop.f32.mrb[0].mxu0
    %1804 = vdwg.mxu0
    %1805 = vmatprep.subr.bf16.mxu0 %v1073
    %1806 = vmatpush1.bf16.msra.mxu0 %v1072
    %1807 = vmatprep.subr.bf16.mxu0 %v1077
    %1808 = vmatpush1.bf16.msra.mxu0 %v1076
    %1809 = vmatprep.subr.bf16.mxu0 %v1081
    %1810 = vmatpush1.bf16.msra.mxu0 %v1080
    %1811 = vmatprep.subr.bf16.mxu0 %v1085
    %1812 = vmatpush1.bf16.msra.mxu0 %v1084
    %1813 = vmatprep.subr.bf16.mxu0 %v1089
    %1814 = vmatpush1.bf16.msra.mxu0 %v1088
    %1815 = vmatprep.subr.bf16.mxu0 %v1093
    %1816 = vmatpush1.bf16.msra.mxu0 %v1092
    %1817 = vmatprep.subr.bf16.mxu0 %v1097
    %1818 = vmatpush1.bf16.msra.mxu0 %v1096
    %1819 = vmatprep.subr.bf16.mxu0 %v1101
    %1820 = vmatpush1.bf16.msra.mxu0 %v1100
    %1821 = vmatprep.subr.bf16.mxu0 0
    %1822 = vmatpush1.bf16.msra.mxu0 0
    %1823 = vmatprep.subr.bf16.mxu0 0
    %1824 = vmatpush1.bf16.msra.mxu0 0
    %1825 = vmatprep.subr.bf16.mxu0 0
    %1826 = vmatpush1.bf16.msra.mxu0 0
    %1827 = vmatprep.subr.bf16.mxu0 0
    %1828 = vmatpush1.bf16.msra.mxu0 0
    %1829 = vmatprep.subr.bf16.mxu0 0
    %1830 = vmatpush1.bf16.msra.mxu0 0
    %1831 = vmatprep.subr.bf16.mxu0 0
    %1832 = vmatpush1.bf16.msra.mxu0 0
    %1833 = vmatprep.subr.bf16.mxu0 0
    %1834 = vmatpush1.bf16.msra.mxu0 0
    %1835 = vmatprep.subr.bf16.mxu0 0
    %1836 = vmatpush1.bf16.msra.mxu0 0
    %1837 = vmatprep.mubr.bf16.mxu0 0
    %1838 = vmatmul.mubr.bf16.gmra.mrb[0].mxu0 %v1763
    %v1839 = vpop.f32.mrb[0].mxu0
    %v1840 = vadd.f32 0.0, %v1839
    %v1841 = vpop.f32.mrb[0].mxu0
    %v1842 = vadd.f32 0.0, %v1841
    %v1843 = vpop.f32.mrb[0].mxu0
    %v1844 = vpop.f32.mrb[0].mxu0
    %1845 = vdwg.mxu0
    %v1846 = vadd.f32 %v1759, %v1799
    %v1847 = vadd.f32 %v1760, %v1801
    %v1848 = vadd.f32 %v1761, %v1840
    %v1849 = vadd.f32 %v1762, %v1842
    %v1850 = vxor.u32 %v1846, 2147483648
    %v1851 = vmul.f32 %v1850, 1.442695
    %v1852 = vpow.pop %v1851
    %v1853 = vadd.f32 %v1852, 1.0
    %v1854 = vrcp.pop %v1853
    %v1855 = vmul.f32 1.0, %v1854
    %v1856 = vxor.u32 %v1847, 2147483648
    %v1857 = vmul.f32 %v1856, 1.442695
    %v1858 = vpow.pop %v1857
    %v1859 = vadd.f32 %v1858, 1.0
    %v1860 = vrcp.pop %v1859
    %v1861 = vmul.f32 1.0, %v1860
    %v1862 = vtanh.pop %v1848
    %v1863 = vxor.u32 %v1849, 2147483648
    %v1864 = vmul.f32 %v1863, 1.442695
    %v1865 = vpow.pop %v1864
    %v1866 = vadd.f32 %v1865, 1.0
    %v1867 = vrcp.pop %v1866
    %v1868 = vmul.f32 1.0, %v1867
    %v1869 = vmul.f32 %v1861, %v1635
    %v1870 = vmul.f32 %v1855, %v1862
    %v1871 = vadd.f32 %v1869, %v1870
    %v1872 = vtanh.pop %v1871
    %v1873 = vmul.f32 %v1868, %v1872
    %s1874 = scalar_lea.vmem [#allocation2], 320
    %v1875 = vld [vmem:[%s1874 + $0x20] sm:$0xff]
    %v1876 = vld [vmem:[%s1874 + $0x28] sm:$0xff]
    %v1877 = vld [vmem:[%s1874 + $0x30] sm:$0xff]
    %v1878 = vld [vmem:[%s1874 + $0x38] sm:$0xff]
    %v1879 = vpack.c.bf16 %v1753, %v1753
    %1880 = vmatprep.subr.bf16.mxu0 %v1346
    %1881 = vmatpush1.bf16.msra.mxu0 %v1345
    %1882 = vmatprep.subr.bf16.mxu0 %v1350
    %1883 = vmatpush1.bf16.msra.mxu0 %v1349
    %1884 = vmatprep.subr.bf16.mxu0 %v1354
    %1885 = vmatpush1.bf16.msra.mxu0 %v1353
    %1886 = vmatprep.subr.bf16.mxu0 %v1358
    %1887 = vmatpush1.bf16.msra.mxu0 %v1357
    %1888 = vmatprep.subr.bf16.mxu0 %v1362
    %1889 = vmatpush1.bf16.msra.mxu0 %v1361
    %1890 = vmatprep.subr.bf16.mxu0 %v1366
    %1891 = vmatpush1.bf16.msra.mxu0 %v1365
    %1892 = vmatprep.subr.bf16.mxu0 %v1370
    %1893 = vmatpush1.bf16.msra.mxu0 %v1369
    %1894 = vmatprep.subr.bf16.mxu0 %v1374
    %1895 = vmatpush1.bf16.msra.mxu0 %v1373
    %1896 = vmatprep.subr.bf16.mxu0 0
    %1897 = vmatpush1.bf16.msra.mxu0 0
    %1898 = vmatprep.subr.bf16.mxu0 0
    %1899 = vmatpush1.bf16.msra.mxu0 0
    %1900 = vmatprep.subr.bf16.mxu0 0
    %1901 = vmatpush1.bf16.msra.mxu0 0
    %1902 = vmatprep.subr.bf16.mxu0 0
    %1903 = vmatpush1.bf16.msra.mxu0 0
    %1904 = vmatprep.subr.bf16.mxu0 0
    %1905 = vmatpush1.bf16.msra.mxu0 0
    %1906 = vmatprep.subr.bf16.mxu0 0
    %1907 = vmatpush1.bf16.msra.mxu0 0
    %1908 = vmatprep.subr.bf16.mxu0 0
    %1909 = vmatpush1.bf16.msra.mxu0 0
    %1910 = vmatprep.subr.bf16.mxu0 0
    %1911 = vmatpush1.bf16.msra.mxu0 0
    %1912 = vmatprep.mubr.bf16.mxu0 0
    %1913 = vmatmul.mubr.bf16.gmra.mrb[0].mxu0 %v1879
    %v1914 = vpop.f32.mrb[0].mxu0
    %v1915 = vadd.f32 0.0, %v1914
    %v1916 = vpop.f32.mrb[0].mxu0
    %v1917 = vadd.f32 0.0, %v1916
    %v1918 = vpop.f32.mrb[0].mxu0
    %v1919 = vpop.f32.mrb[0].mxu0
    %1920 = vdwg.mxu0
    %1921 = vmatprep.subr.bf16.mxu0 %v1348
    %1922 = vmatpush1.bf16.msra.mxu0 %v1347
    %1923 = vmatprep.subr.bf16.mxu0 %v1352
    %1924 = vmatpush1.bf16.msra.mxu0 %v1351
    %1925 = vmatprep.subr.bf16.mxu0 %v1356
    %1926 = vmatpush1.bf16.msra.mxu0 %v1355
    %1927 = vmatprep.subr.bf16.mxu0 %v1360
    %1928 = vmatpush1.bf16.msra.mxu0 %v1359
    %1929 = vmatprep.subr.bf16.mxu0 %v1364
    %1930 = vmatpush1.bf16.msra.mxu0 %v1363
    %1931 = vmatprep.subr.bf16.mxu0 %v1368
    %1932 = vmatpush1.bf16.msra.mxu0 %v1367
    %1933 = vmatprep.subr.bf16.mxu0 %v1372
    %1934 = vmatpush1.bf16.msra.mxu0 %v1371
    %1935 = vmatprep.subr.bf16.mxu0 %v1376
    %1936 = vmatpush1.bf16.msra.mxu0 %v1375
    %1937 = vmatprep.subr.bf16.mxu0 0
    %1938 = vmatpush1.bf16.msra.mxu0 0
    %1939 = vmatprep.subr.bf16.mxu0 0
    %1940 = vmatpush1.bf16.msra.mxu0 0
    %1941 = vmatprep.subr.bf16.mxu0 0
    %1942 = vmatpush1.bf16.msra.mxu0 0
    %1943 = vmatprep.subr.bf16.mxu0 0
    %1944 = vmatpush1.bf16.msra.mxu0 0
    %1945 = vmatprep.subr.bf16.mxu0 0
    %1946 = vmatpush1.bf16.msra.mxu0 0
    %1947 = vmatprep.subr.bf16.mxu0 0
    %1948 = vmatpush1.bf16.msra.mxu0 0
    %1949 = vmatprep.subr.bf16.mxu0 0
    %1950 = vmatpush1.bf16.msra.mxu0 0
    %1951 = vmatprep.subr.bf16.mxu0 0
    %1952 = vmatpush1.bf16.msra.mxu0 0
    %1953 = vmatprep.mubr.bf16.mxu0 0
    %1954 = vmatmul.mubr.bf16.gmra.mrb[0].mxu0 %v1879
    %v1955 = vpop.f32.mrb[0].mxu0
    %v1956 = vadd.f32 0.0, %v1955
    %v1957 = vpop.f32.mrb[0].mxu0
    %v1958 = vadd.f32 0.0, %v1957
    %v1959 = vpop.f32.mrb[0].mxu0
    %v1960 = vpop.f32.mrb[0].mxu0
    %1961 = vdwg.mxu0
    %v1962 = vadd.f32 %v1875, %v1915
    %v1963 = vadd.f32 %v1876, %v1917
    %v1964 = vadd.f32 %v1877, %v1956
    %v1965 = vadd.f32 %v1878, %v1958
    %v1966 = vxor.u32 %v1962, 2147483648
    %v1967 = vmul.f32 %v1966, 1.442695
    %v1968 = vpow.pop %v1967
    %v1969 = vadd.f32 %v1968, 1.0
    %v1970 = vrcp.pop %v1969
    %v1971 = vmul.f32 1.0, %v1970
    %v1972 = vxor.u32 %v1963, 2147483648
    %v1973 = vmul.f32 %v1972, 1.442695
    %v1974 = vpow.pop %v1973
    %v1975 = vadd.f32 %v1974, 1.0
    %v1976 = vrcp.pop %v1975
    %v1977 = vmul.f32 1.0, %v1976
    %v1978 = vtanh.pop %v1964
    %v1979 = vxor.u32 %v1965, 2147483648
    %v1980 = vmul.f32 %v1979, 1.442695
    %v1981 = vpow.pop %v1980
    %v1982 = vadd.f32 %v1981, 1.0
    %v1983 = vrcp.pop %v1982
    %v1984 = vmul.f32 1.0, %v1983
    %v1985 = vmul.f32 %v1977, %v1751
    %v1986 = vmul.f32 %v1971, %v1978
    %v1987 = vadd.f32 %v1985, %v1986
    %v1988 = vtanh.pop %v1987
    %v1989 = vmul.f32 %v1984, %v1988
    %s1990 = scalar_lea.vmem [#allocation12], 32
    %1991 = vst [vmem:[%s1990] sm:$0xff] %v1873
    %s1992 = scalar_lea.vmem [#allocation12], 80
    %1993 = vst [vmem:[%s1992 + $0x8] sm:$0xff] %v1989
    %s1994 = scalar_lea.vmem [#allocation2], 192
    %v1995 = vld [vmem:[%s1994] sm:$0xff]
    %v1996 = vld [vmem:[%s1994 + $0x8] sm:$0xff]
    %v1997 = vld [vmem:[%s1994 + $0x10] sm:$0xff]
    %v1998 = vld [vmem:[%s1994 + $0x18] sm:$0xff]
    %v1999 = vpack.c.bf16 %v1873, %v1873
    %2000 = vmatprep.subr.bf16.mxu0 %v1071
    %2001 = vmatpush1.bf16.msra.mxu0 %v1070
    %2002 = vmatprep.subr.bf16.mxu0 %v1075
    %2003 = vmatpush1.bf16.msra.mxu0 %v1074
    %2004 = vmatprep.subr.bf16.mxu0 %v1079
    %2005 = vmatpush1.bf16.msra.mxu0 %v1078
    %2006 = vmatprep.subr.bf16.mxu0 %v1083
    %2007 = vmatpush1.bf16.msra.mxu0 %v1082
    %2008 = vmatprep.subr.bf16.mxu0 %v1087
    %2009 = vmatpush1.bf16.msra.mxu0 %v1086
    %2010 = vmatprep.subr.bf16.mxu0 %v1091
    %2011 = vmatpush1.bf16.msra.mxu0 %v1090
    %2012 = vmatprep.subr.bf16.mxu0 %v1095
    %2013 = vmatpush1.bf16.msra.mxu0 %v1094
    %2014 = vmatprep.subr.bf16.mxu0 %v1099
    %2015 = vmatpush1.bf16.msra.mxu0 %v1098
    %2016 = vmatprep.subr.bf16.mxu0 0
    %2017 = vmatpush1.bf16.msra.mxu0 0
    %2018 = vmatprep.subr.bf16.mxu0 0
    %2019 = vmatpush1.bf16.msra.mxu0 0
    %2020 = vmatprep.subr.bf16.mxu0 0
    %2021 = vmatpush1.bf16.msra.mxu0 0
    %2022 = vmatprep.subr.bf16.mxu0 0
    %2023 = vmatpush1.bf16.msra.mxu0 0
    %2024 = vmatprep.subr.bf16.mxu0 0
    %2025 = vmatpush1.bf16.msra.mxu0 0
    %2026 = vmatprep.subr.bf16.mxu0 0
    %2027 = vmatpush1.bf16.msra.mxu0 0
    %2028 = vmatprep.subr.bf16.mxu0 0
    %2029 = vmatpush1.bf16.msra.mxu0 0
    %2030 = vmatprep.subr.bf16.mxu0 0
    %2031 = vmatpush1.bf16.msra.mxu0 0
    %2032 = vmatprep.mubr.bf16.mxu0 0
    %2033 = vmatmul.mubr.bf16.gmra.mrb[0].mxu0 %v1999
    %v2034 = vpop.f32.mrb[0].mxu0
    %v2035 = vadd.f32 0.0, %v2034
    %v2036 = vpop.f32.mrb[0].mxu0
    %v2037 = vadd.f32 0.0, %v2036
    %v2038 = vpop.f32.mrb[0].mxu0
    %v2039 = vpop.f32.mrb[0].mxu0
    %2040 = vdwg.mxu0
    %2041 = vmatprep.subr.bf16.mxu0 %v1073
    %2042 = vmatpush1.bf16.msra.mxu0 %v1072
    %2043 = vmatprep.subr.bf16.mxu0 %v1077
    %2044 = vmatpush1.bf16.msra.mxu0 %v1076
    %2045 = vmatprep.subr.bf16.mxu0 %v1081
    %2046 = vmatpush1.bf16.msra.mxu0 %v1080
    %2047 = vmatprep.subr.bf16.mxu0 %v1085
    %2048 = vmatpush1.bf16.msra.mxu0 %v1084
    %2049 = vmatprep.subr.bf16.mxu0 %v1089
    %2050 = vmatpush1.bf16.msra.mxu0 %v1088
    %2051 = vmatprep.subr.bf16.mxu0 %v1093
    %2052 = vmatpush1.bf16.msra.mxu0 %v1092
    %2053 = vmatprep.subr.bf16.mxu0 %v1097
    %2054 = vmatpush1.bf16.msra.mxu0 %v1096
    %2055 = vmatprep.subr.bf16.mxu0 %v1101
    %2056 = vmatpush1.bf16.msra.mxu0 %v1100
    %2057 = vmatprep.subr.bf16.mxu0 0
    %2058 = vmatpush1.bf16.msra.mxu0 0
    %2059 = vmatprep.subr.bf16.mxu0 0
    %2060 = vmatpush1.bf16.msra.mxu0 0
    %2061 = vmatprep.subr.bf16.mxu0 0
    %2062 = vmatpush1.bf16.msra.mxu0 0
    %2063 = vmatprep.subr.bf16.mxu0 0
    %2064 = vmatpush1.bf16.msra.mxu0 0
    %2065 = vmatprep.subr.bf16.mxu0 0
    %2066 = vmatpush1.bf16.msra.mxu0 0
    %2067 = vmatprep.subr.bf16.mxu0 0
    %2068 = vmatpush1.bf16.msra.mxu0 0
    %2069 = vmatprep.subr.bf16.mxu0 0
    %2070 = vmatpush1.bf16.msra.mxu0 0
    %2071 = vmatprep.subr.bf16.mxu0 0
    %2072 = vmatpush1.bf16.msra.mxu0 0
    %2073 = vmatprep.mubr.bf16.mxu0 0
    %2074 = vmatmul.mubr.bf16.gmra.mrb[0].mxu0 %v1999
    %v2075 = vpop.f32.mrb[0].mxu0
    %v2076 = vadd.f32 0.0, %v2075
    %v2077 = vpop.f32.mrb[0].mxu0
    %v2078 = vadd.f32 0.0, %v2077
    %v2079 = vpop.f32.mrb[0].mxu0
    %v2080 = vpop.f32.mrb[0].mxu0
    %2081 = vdwg.mxu0
    %v2082 = vadd.f32 %v1995, %v2035
    %v2083 = vadd.f32 %v1996, %v2037
    %v2084 = vadd.f32 %v1997, %v2076
    %v2085 = vadd.f32 %v1998, %v2078
    %v2086 = vxor.u32 %v2082, 2147483648
    %v2087 = vmul.f32 %v2086, 1.442695
    %v2088 = vpow.pop %v2087
    %v2089 = vadd.f32 %v2088, 1.0
    %v2090 = vrcp.pop %v2089
    %v2091 = vmul.f32 1.0, %v2090
    %v2092 = vxor.u32 %v2083, 2147483648
    %v2093 = vmul.f32 %v2092, 1.442695
    %v2094 = vpow.pop %v2093
    %v2095 = vadd.f32 %v2094, 1.0
    %v2096 = vrcp.pop %v2095
    %v2097 = vmul.f32 1.0, %v2096
    %v2098 = vtanh.pop %v2084
    %v2099 = vxor.u32 %v2085, 2147483648
    %v2100 = vmul.f32 %v2099, 1.442695
    %v2101 = vpow.pop %v2100
    %v2102 = vadd.f32 %v2101, 1.0
    %v2103 = vrcp.pop %v2102
    %v2104 = vmul.f32 1.0, %v2103
    %v2105 = vmul.f32 %v2097, %v1871
    %v2106 = vmul.f32 %v2091, %v2098
    %v2107 = vadd.f32 %v2105, %v2106
    %v2108 = vtanh.pop %v2107
    %v2109 = vmul.f32 %v2104, %v2108
    %s2110 = scalar_lea.vmem [#allocation2], 256
    %v2111 = vld [vmem:[%s2110 + $0x20] sm:$0xff]
    %v2112 = vld [vmem:[%s2110 + $0x28] sm:$0xff]
    %v2113 = vld [vmem:[%s2110 + $0x30] sm:$0xff]
    %v2114 = vld [vmem:[%s2110 + $0x38] sm:$0xff]
    %v2115 = vpack.c.bf16 %v1989, %v1989
    %2116 = vmatprep.subr.bf16.mxu0 %v1346
    %2117 = vmatpush1.bf16.msra.mxu0 %v1345
    %2118 = vmatprep.subr.bf16.mxu0 %v1350
    %2119 = vmatpush1.bf16.msra.mxu0 %v1349
    %2120 = vmatprep.subr.bf16.mxu0 %v1354
    %2121 = vmatpush1.bf16.msra.mxu0 %v1353
    %2122 = vmatprep.subr.bf16.mxu0 %v1358
    %2123 = vmatpush1.bf16.msra.mxu0 %v1357
    %2124 = vmatprep.subr.bf16.mxu0 %v1362
    %2125 = vmatpush1.bf16.msra.mxu0 %v1361
    %2126 = vmatprep.subr.bf16.mxu0 %v1366
    %2127 = vmatpush1.bf16.msra.mxu0 %v1365
    %2128 = vmatprep.subr.bf16.mxu0 %v1370
    %2129 = vmatpush1.bf16.msra.mxu0 %v1369
    %2130 = vmatprep.subr.bf16.mxu0 %v1374
    %2131 = vmatpush1.bf16.msra.mxu0 %v1373
    %2132 = vmatprep.subr.bf16.mxu0 0
    %2133 = vmatpush1.bf16.msra.mxu0 0
    %2134 = vmatprep.subr.bf16.mxu0 0
    %2135 = vmatpush1.bf16.msra.mxu0 0
    %2136 = vmatprep.subr.bf16.mxu0 0
    %2137 = vmatpush1.bf16.msra.mxu0 0
    %2138 = vmatprep.subr.bf16.mxu0 0
    %2139 = vmatpush1.bf16.msra.mxu0 0
    %2140 = vmatprep.subr.bf16.mxu0 0
    %2141 = vmatpush1.bf16.msra.mxu0 0
    %2142 = vmatprep.subr.bf16.mxu0 0
    %2143 = vmatpush1.bf16.msra.mxu0 0
    %2144 = vmatprep.subr.bf16.mxu0 0
    %2145 = vmatpush1.bf16.msra.mxu0 0
    %2146 = vmatprep.subr.bf16.mxu0 0
    %2147 = vmatpush1.bf16.msra.mxu0 0
    %2148 = vmatprep.mubr.bf16.mxu0 0
    %2149 = vmatmul.mubr.bf16.gmra.mrb[0].mxu0 %v2115
    %v2150 = vpop.f32.mrb[0].mxu0
    %v2151 = vadd.f32 0.0, %v2150
    %v2152 = vpop.f32.mrb[0].mxu0
    %v2153 = vadd.f32 0.0, %v2152
    %v2154 = vpop.f32.mrb[0].mxu0
    %v2155 = vpop.f32.mrb[0].mxu0
    %2156 = vdwg.mxu0
    %2157 = vmatprep.subr.bf16.mxu0 %v1348
    %2158 = vmatpush1.bf16.msra.mxu0 %v1347
    %2159 = vmatprep.subr.bf16.mxu0 %v1352
    %2160 = vmatpush1.bf16.msra.mxu0 %v1351
    %2161 = vmatprep.subr.bf16.mxu0 %v1356
    %2162 = vmatpush1.bf16.msra.mxu0 %v1355
    %2163 = vmatprep.subr.bf16.mxu0 %v1360
    %2164 = vmatpush1.bf16.msra.mxu0 %v1359
    %2165 = vmatprep.subr.bf16.mxu0 %v1364
    %2166 = vmatpush1.bf16.msra.mxu0 %v1363
    %2167 = vmatprep.subr.bf16.mxu0 %v1368
    %2168 = vmatpush1.bf16.msra.mxu0 %v1367
    %2169 = vmatprep.subr.bf16.mxu0 %v1372
    %2170 = vmatpush1.bf16.msra.mxu0 %v1371
    %2171 = vmatprep.subr.bf16.mxu0 %v1376
    %2172 = vmatpush1.bf16.msra.mxu0 %v1375
    %2173 = vmatprep.subr.bf16.mxu0 0
    %2174 = vmatpush1.bf16.msra.mxu0 0
    %2175 = vmatprep.subr.bf16.mxu0 0
    %2176 = vmatpush1.bf16.msra.mxu0 0
    %2177 = vmatprep.subr.bf16.mxu0 0
    %2178 = vmatpush1.bf16.msra.mxu0 0
    %2179 = vmatprep.subr.bf16.mxu0 0
    %2180 = vmatpush1.bf16.msra.mxu0 0
    %2181 = vmatprep.subr.bf16.mxu0 0
    %2182 = vmatpush1.bf16.msra.mxu0 0
    %2183 = vmatprep.subr.bf16.mxu0 0
    %2184 = vmatpush1.bf16.msra.mxu0 0
    %2185 = vmatprep.subr.bf16.mxu0 0
    %2186 = vmatpush1.bf16.msra.mxu0 0
    %2187 = vmatprep.subr.bf16.mxu0 0
    %2188 = vmatpush1.bf16.msra.mxu0 0
    %2189 = vmatprep.mubr.bf16.mxu0 0
    %2190 = vmatmul.mubr.bf16.gmra.mrb[0].mxu0 %v2115
    %v2191 = vpop.f32.mrb[0].mxu0
    %v2192 = vadd.f32 0.0, %v2191
    %v2193 = vpop.f32.mrb[0].mxu0
    %v2194 = vadd.f32 0.0, %v2193
    %v2195 = vpop.f32.mrb[0].mxu0
    %v2196 = vpop.f32.mrb[0].mxu0
    %2197 = vdwg.mxu0
    %v2198 = vadd.f32 %v2111, %v2151
    %v2199 = vadd.f32 %v2112, %v2153
    %v2200 = vadd.f32 %v2113, %v2192
    %v2201 = vadd.f32 %v2114, %v2194
    %v2202 = vxor.u32 %v2198, 2147483648
    %v2203 = vmul.f32 %v2202, 1.442695
    %v2204 = vpow.pop %v2203
    %v2205 = vadd.f32 %v2204, 1.0
    %v2206 = vrcp.pop %v2205
    %v2207 = vmul.f32 1.0, %v2206
    %v2208 = vxor.u32 %v2199, 2147483648
    %v2209 = vmul.f32 %v2208, 1.442695
    %v2210 = vpow.pop %v2209
    %v2211 = vadd.f32 %v2210, 1.0
    %v2212 = vrcp.pop %v2211
    %v2213 = vmul.f32 1.0, %v2212
    %v2214 = vtanh.pop %v2200
    %v2215 = vxor.u32 %v2201, 2147483648
    %v2216 = vmul.f32 %v2215, 1.442695
    %v2217 = vpow.pop %v2216
    %v2218 = vadd.f32 %v2217, 1.0
    %v2219 = vrcp.pop %v2218
    %v2220 = vmul.f32 1.0, %v2219
    %v2221 = vmul.f32 %v2213, %v1987
    %v2222 = vmul.f32 %v2207, %v2214
    %v2223 = vadd.f32 %v2221, %v2222
    %v2224 = vtanh.pop %v2223
    %v2225 = vmul.f32 %v2220, %v2224
    %s2226 = scalar_lea.vmem [#allocation12], 48
    %2227 = vst [vmem:[%s2226] sm:$0xff] %v2109
    %s2228 = scalar_lea.vmem [#allocation12], 64
    %2229 = vst [vmem:[%s2228 + $0x8] sm:$0xff] %v2225
    %v2230 = vld [vmem:[%s2110] sm:$0xff]
    %v2231 = vld [vmem:[%s2110 + $0x8] sm:$0xff]
    %v2232 = vld [vmem:[%s2110 + $0x10] sm:$0xff]
    %v2233 = vld [vmem:[%s2110 + $0x18] sm:$0xff]
    %v2234 = vpack.c.bf16 %v2109, %v2109
    %2235 = vmatprep.subr.bf16.mxu0 %v1071
    %2236 = vmatpush1.bf16.msra.mxu0 %v1070
    %2237 = vmatprep.subr.bf16.mxu0 %v1075
    %2238 = vmatpush1.bf16.msra.mxu0 %v1074
    %2239 = vmatprep.subr.bf16.mxu0 %v1079
    %2240 = vmatpush1.bf16.msra.mxu0 %v1078
    %2241 = vmatprep.subr.bf16.mxu0 %v1083
    %2242 = vmatpush1.bf16.msra.mxu0 %v1082
    %2243 = vmatprep.subr.bf16.mxu0 %v1087
    %2244 = vmatpush1.bf16.msra.mxu0 %v1086
    %2245 = vmatprep.subr.bf16.mxu0 %v1091
    %2246 = vmatpush1.bf16.msra.mxu0 %v1090
    %2247 = vmatprep.subr.bf16.mxu0 %v1095
    %2248 = vmatpush1.bf16.msra.mxu0 %v1094
    %2249 = vmatprep.subr.bf16.mxu0 %v1099
    %2250 = vmatpush1.bf16.msra.mxu0 %v1098
    %2251 = vmatprep.subr.bf16.mxu0 0
    %2252 = vmatpush1.bf16.msra.mxu0 0
    %2253 = vmatprep.subr.bf16.mxu0 0
    %2254 = vmatpush1.bf16.msra.mxu0 0
    %2255 = vmatprep.subr.bf16.mxu0 0
    %2256 = vmatpush1.bf16.msra.mxu0 0
    %2257 = vmatprep.subr.bf16.mxu0 0
    %2258 = vmatpush1.bf16.msra.mxu0 0
    %2259 = vmatprep.subr.bf16.mxu0 0
    %2260 = vmatpush1.bf16.msra.mxu0 0
    %2261 = vmatprep.subr.bf16.mxu0 0
    %2262 = vmatpush1.bf16.msra.mxu0 0
    %2263 = vmatprep.subr.bf16.mxu0 0
    %2264 = vmatpush1.bf16.msra.mxu0 0
    %2265 = vmatprep.subr.bf16.mxu0 0
    %2266 = vmatpush1.bf16.msra.mxu0 0
    %2267 = vmatprep.mubr.bf16.mxu0 0
    %2268 = vmatmul.mubr.bf16.gmra.mrb[0].mxu0 %v2234
    %v2269 = vpop.f32.mrb[0].mxu0
    %v2270 = vadd.f32 0.0, %v2269
    %v2271 = vpop.f32.mrb[0].mxu0
    %v2272 = vadd.f32 0.0, %v2271
    %v2273 = vpop.f32.mrb[0].mxu0
    %v2274 = vpop.f32.mrb[0].mxu0
    %2275 = vdwg.mxu0
    %2276 = vmatprep.subr.bf16.mxu0 %v1073
    %2277 = vmatpush1.bf16.msra.mxu0 %v1072
    %2278 = vmatprep.subr.bf16.mxu0 %v1077
    %2279 = vmatpush1.bf16.msra.mxu0 %v1076
    %2280 = vmatprep.subr.bf16.mxu0 %v1081
    %2281 = vmatpush1.bf16.msra.mxu0 %v1080
    %2282 = vmatprep.subr.bf16.mxu0 %v1085
    %2283 = vmatpush1.bf16.msra.mxu0 %v1084
    %2284 = vmatprep.subr.bf16.mxu0 %v1089
    %2285 = vmatpush1.bf16.msra.mxu0 %v1088
    %2286 = vmatprep.subr.bf16.mxu0 %v1093
    %2287 = vmatpush1.bf16.msra.mxu0 %v1092
    %2288 = vmatprep.subr.bf16.mxu0 %v1097
    %2289 = vmatpush1.bf16.msra.mxu0 %v1096
    %2290 = vmatprep.subr.bf16.mxu0 %v1101
    %2291 = vmatpush1.bf16.msra.mxu0 %v1100
    %2292 = vmatprep.subr.bf16.mxu0 0
    %2293 = vmatpush1.bf16.msra.mxu0 0
    %2294 = vmatprep.subr.bf16.mxu0 0
    %2295 = vmatpush1.bf16.msra.mxu0 0
    %2296 = vmatprep.subr.bf16.mxu0 0
    %2297 = vmatpush1.bf16.msra.mxu0 0
    %2298 = vmatprep.subr.bf16.mxu0 0
    %2299 = vmatpush1.bf16.msra.mxu0 0
    %2300 = vmatprep.subr.bf16.mxu0 0
    %2301 = vmatpush1.bf16.msra.mxu0 0
    %2302 = vmatprep.subr.bf16.mxu0 0
    %2303 = vmatpush1.bf16.msra.mxu0 0
    %2304 = vmatprep.subr.bf16.mxu0 0
    %2305 = vmatpush1.bf16.msra.mxu0 0
    %2306 = vmatprep.subr.bf16.mxu0 0
    %2307 = vmatpush1.bf16.msra.mxu0 0
    %2308 = vmatprep.mubr.bf16.mxu0 0
    %2309 = vmatmul.mubr.bf16.gmra.mrb[0].mxu0 %v2234
    %v2310 = vpop.f32.mrb[0].mxu0
    %v2311 = vadd.f32 0.0, %v2310
    %v2312 = vpop.f32.mrb[0].mxu0
    %v2313 = vadd.f32 0.0, %v2312
    %v2314 = vpop.f32.mrb[0].mxu0
    %v2315 = vpop.f32.mrb[0].mxu0
    %2316 = vdwg.mxu0
    %v2317 = vadd.f32 %v2230, %v2270
    %v2318 = vadd.f32 %v2231, %v2272
    %v2319 = vadd.f32 %v2232, %v2311
    %v2320 = vadd.f32 %v2233, %v2313
    %v2321 = vxor.u32 %v2317, 2147483648
    %v2322 = vmul.f32 %v2321, 1.442695
    %v2323 = vpow.pop %v2322
    %v2324 = vadd.f32 %v2323, 1.0
    %v2325 = vrcp.pop %v2324
    %v2326 = vmul.f32 1.0, %v2325
    %v2327 = vxor.u32 %v2318, 2147483648
    %v2328 = vmul.f32 %v2327, 1.442695
    %v2329 = vpow.pop %v2328
    %v2330 = vadd.f32 %v2329, 1.0
    %v2331 = vrcp.pop %v2330
    %v2332 = vmul.f32 1.0, %v2331
    %v2333 = vtanh.pop %v2319
    %v2334 = vxor.u32 %v2320, 2147483648
    %v2335 = vmul.f32 %v2334, 1.442695
    %v2336 = vpow.pop %v2335
    %v2337 = vadd.f32 %v2336, 1.0
    %v2338 = vrcp.pop %v2337
    %v2339 = vmul.f32 1.0, %v2338
    %v2340 = vmul.f32 %v2332, %v2107
    %v2341 = vmul.f32 %v2326, %v2333
    %v2342 = vadd.f32 %v2340, %v2341
    %v2343 = vtanh.pop %v2342
    %v2344 = vmul.f32 %v2339, %v2343
    %v2345 = vld [vmem:[%s1994 + $0x20] sm:$0xff]
    %v2346 = vld [vmem:[%s1994 + $0x28] sm:$0xff]
    %v2347 = vld [vmem:[%s1994 + $0x30] sm:$0xff]
    %v2348 = vld [vmem:[%s1994 + $0x38] sm:$0xff]
    %v2349 = vpack.c.bf16 %v2225, %v2225
    %2350 = vmatprep.subr.bf16.mxu0 %v1346
    %2351 = vmatpush1.bf16.msra.mxu0 %v1345
    %2352 = vmatprep.subr.bf16.mxu0 %v1350
    %2353 = vmatpush1.bf16.msra.mxu0 %v1349
    %2354 = vmatprep.subr.bf16.mxu0 %v1354
    %2355 = vmatpush1.bf16.msra.mxu0 %v1353
    %2356 = vmatprep.subr.bf16.mxu0 %v1358
    %2357 = vmatpush1.bf16.msra.mxu0 %v1357
    %2358 = vmatprep.subr.bf16.mxu0 %v1362
    %2359 = vmatpush1.bf16.msra.mxu0 %v1361
    %2360 = vmatprep.subr.bf16.mxu0 %v1366
    %2361 = vmatpush1.bf16.msra.mxu0 %v1365
    %2362 = vmatprep.subr.bf16.mxu0 %v1370
    %2363 = vmatpush1.bf16.msra.mxu0 %v1369
    %2364 = vmatprep.subr.bf16.mxu0 %v1374
    %2365 = vmatpush1.bf16.msra.mxu0 %v1373
    %2366 = vmatprep.subr.bf16.mxu0 0
    %2367 = vmatpush1.bf16.msra.mxu0 0
    %2368 = vmatprep.subr.bf16.mxu0 0
    %2369 = vmatpush1.bf16.msra.mxu0 0
    %2370 = vmatprep.subr.bf16.mxu0 0
    %2371 = vmatpush1.bf16.msra.mxu0 0
    %2372 = vmatprep.subr.bf16.mxu0 0
    %2373 = vmatpush1.bf16.msra.mxu0 0
    %2374 = vmatprep.subr.bf16.mxu0 0
    %2375 = vmatpush1.bf16.msra.mxu0 0
    %2376 = vmatprep.subr.bf16.mxu0 0
    %2377 = vmatpush1.bf16.msra.mxu0 0
    %2378 = vmatprep.subr.bf16.mxu0 0
    %2379 = vmatpush1.bf16.msra.mxu0 0
    %2380 = vmatprep.subr.bf16.mxu0 0
    %2381 = vmatpush1.bf16.msra.mxu0 0
    %2382 = vmatprep.mubr.bf16.mxu0 0
    %2383 = vmatmul.mubr.bf16.gmra.mrb[0].mxu0 %v2349
    %v2384 = vpop.f32.mrb[0].mxu0
    %v2385 = vadd.f32 0.0, %v2384
    %v2386 = vpop.f32.mrb[0].mxu0
    %v2387 = vadd.f32 0.0, %v2386
    %v2388 = vpop.f32.mrb[0].mxu0
    %v2389 = vpop.f32.mrb[0].mxu0
    %2390 = vdwg.mxu0
    %2391 = vmatprep.subr.bf16.mxu0 %v1348
    %2392 = vmatpush1.bf16.msra.mxu0 %v1347
    %2393 = vmatprep.subr.bf16.mxu0 %v1352
    %2394 = vmatpush1.bf16.msra.mxu0 %v1351
    %2395 = vmatprep.subr.bf16.mxu0 %v1356
    %2396 = vmatpush1.bf16.msra.mxu0 %v1355
    %2397 = vmatprep.subr.bf16.mxu0 %v1360
    %2398 = vmatpush1.bf16.msra.mxu0 %v1359
    %2399 = vmatprep.subr.bf16.mxu0 %v1364
    %2400 = vmatpush1.bf16.msra.mxu0 %v1363
    %2401 = vmatprep.subr.bf16.mxu0 %v1368
    %2402 = vmatpush1.bf16.msra.mxu0 %v1367
    %2403 = vmatprep.subr.bf16.mxu0 %v1372
    %2404 = vmatpush1.bf16.msra.mxu0 %v1371
    %2405 = vmatprep.subr.bf16.mxu0 %v1376
    %2406 = vmatpush1.bf16.msra.mxu0 %v1375
    %2407 = vmatprep.subr.bf16.mxu0 0
    %2408 = vmatpush1.bf16.msra.mxu0 0
    %2409 = vmatprep.subr.bf16.mxu0 0
    %2410 = vmatpush1.bf16.msra.mxu0 0
    %2411 = vmatprep.subr.bf16.mxu0 0
    %2412 = vmatpush1.bf16.msra.mxu0 0
    %2413 = vmatprep.subr.bf16.mxu0 0
    %2414 = vmatpush1.bf16.msra.mxu0 0
    %2415 = vmatprep.subr.bf16.mxu0 0
    %2416 = vmatpush1.bf16.msra.mxu0 0
    %2417 = vmatprep.subr.bf16.mxu0 0
    %2418 = vmatpush1.bf16.msra.mxu0 0
    %2419 = vmatprep.subr.bf16.mxu0 0
    %2420 = vmatpush1.bf16.msra.mxu0 0
    %2421 = vmatprep.subr.bf16.mxu0 0
    %2422 = vmatpush1.bf16.msra.mxu0 0
    %2423 = vmatprep.mubr.bf16.mxu0 0
    %2424 = vmatmul.mubr.bf16.gmra.mrb[0].mxu0 %v2349
    %v2425 = vpop.f32.mrb[0].mxu0
    %v2426 = vadd.f32 0.0, %v2425
    %v2427 = vpop.f32.mrb[0].mxu0
    %v2428 = vadd.f32 0.0, %v2427
    %v2429 = vpop.f32.mrb[0].mxu0
    %v2430 = vpop.f32.mrb[0].mxu0
    %2431 = vdwg.mxu0
    %v2432 = vadd.f32 %v2345, %v2385
    %v2433 = vadd.f32 %v2346, %v2387
    %v2434 = vadd.f32 %v2347, %v2426
    %v2435 = vadd.f32 %v2348, %v2428
    %v2436 = vxor.u32 %v2432, 2147483648
    %v2437 = vmul.f32 %v2436, 1.442695
    %v2438 = vpow.pop %v2437
    %v2439 = vadd.f32 %v2438, 1.0
    %v2440 = vrcp.pop %v2439
    %v2441 = vmul.f32 1.0, %v2440
    %v2442 = vxor.u32 %v2433, 2147483648
    %v2443 = vmul.f32 %v2442, 1.442695
    %v2444 = vpow.pop %v2443
    %v2445 = vadd.f32 %v2444, 1.0
    %v2446 = vrcp.pop %v2445
    %v2447 = vmul.f32 1.0, %v2446
    %v2448 = vtanh.pop %v2434
    %v2449 = vxor.u32 %v2435, 2147483648
    %v2450 = vmul.f32 %v2449, 1.442695
    %v2451 = vpow.pop %v2450
    %v2452 = vadd.f32 %v2451, 1.0
    %v2453 = vrcp.pop %v2452
    %v2454 = vmul.f32 1.0, %v2453
    %v2455 = vmul.f32 %v2447, %v2223
    %v2456 = vmul.f32 %v2441, %v2448
    %v2457 = vadd.f32 %v2455, %v2456
    %v2458 = vtanh.pop %v2457
    %v2459 = vmul.f32 %v2454, %v2458
    %2460 = vst [vmem:[%s2228] sm:$0xff] %v2344
    %2461 = vst [vmem:[%s2226 + $0x8] sm:$0xff] %v2459
    %v2462 = vld [vmem:[%s1874] sm:$0xff]
    %v2463 = vld [vmem:[%s1874 + $0x8] sm:$0xff]
    %v2464 = vld [vmem:[%s1874 + $0x10] sm:$0xff]
    %v2465 = vld [vmem:[%s1874 + $0x18] sm:$0xff]
    %v2466 = vpack.c.bf16 %v2344, %v2344
    %2467 = vmatprep.subr.bf16.mxu0 %v1071
    %2468 = vmatpush1.bf16.msra.mxu0 %v1070
    %2469 = vmatprep.subr.bf16.mxu0 %v1075
    %2470 = vmatpush1.bf16.msra.mxu0 %v1074
    %2471 = vmatprep.subr.bf16.mxu0 %v1079
    %2472 = vmatpush1.bf16.msra.mxu0 %v1078
    %2473 = vmatprep.subr.bf16.mxu0 %v1083
    %2474 = vmatpush1.bf16.msra.mxu0 %v1082
    %2475 = vmatprep.subr.bf16.mxu0 %v1087
    %2476 = vmatpush1.bf16.msra.mxu0 %v1086
    %2477 = vmatprep.subr.bf16.mxu0 %v1091
    %2478 = vmatpush1.bf16.msra.mxu0 %v1090
    %2479 = vmatprep.subr.bf16.mxu0 %v1095
    %2480 = vmatpush1.bf16.msra.mxu0 %v1094
    %2481 = vmatprep.subr.bf16.mxu0 %v1099
    %2482 = vmatpush1.bf16.msra.mxu0 %v1098
    %2483 = vmatprep.subr.bf16.mxu0 0
    %2484 = vmatpush1.bf16.msra.mxu0 0
    %2485 = vmatprep.subr.bf16.mxu0 0
    %2486 = vmatpush1.bf16.msra.mxu0 0
    %2487 = vmatprep.subr.bf16.mxu0 0
    %2488 = vmatpush1.bf16.msra.mxu0 0
    %2489 = vmatprep.subr.bf16.mxu0 0
    %2490 = vmatpush1.bf16.msra.mxu0 0
    %2491 = vmatprep.subr.bf16.mxu0 0
    %2492 = vmatpush1.bf16.msra.mxu0 0
    %2493 = vmatprep.subr.bf16.mxu0 0
    %2494 = vmatpush1.bf16.msra.mxu0 0
    %2495 = vmatprep.subr.bf16.mxu0 0
    %2496 = vmatpush1.bf16.msra.mxu0 0
    %2497 = vmatprep.subr.bf16.mxu0 0
    %2498 = vmatpush1.bf16.msra.mxu0 0
    %2499 = vmatprep.mubr.bf16.mxu0 0
    %2500 = vmatmul.mubr.bf16.gmra.mrb[0].mxu0 %v2466
    %v2501 = vpop.f32.mrb[0].mxu0
    %v2502 = vadd.f32 0.0, %v2501
    %v2503 = vpop.f32.mrb[0].mxu0
    %v2504 = vadd.f32 0.0, %v2503
    %v2505 = vpop.f32.mrb[0].mxu0
    %v2506 = vpop.f32.mrb[0].mxu0
    %2507 = vdwg.mxu0
    %2508 = vmatprep.subr.bf16.mxu0 %v1073
    %2509 = vmatpush1.bf16.msra.mxu0 %v1072
    %2510 = vmatprep.subr.bf16.mxu0 %v1077
    %2511 = vmatpush1.bf16.msra.mxu0 %v1076
    %2512 = vmatprep.subr.bf16.mxu0 %v1081
    %2513 = vmatpush1.bf16.msra.mxu0 %v1080
    %2514 = vmatprep.subr.bf16.mxu0 %v1085
    %2515 = vmatpush1.bf16.msra.mxu0 %v1084
    %2516 = vmatprep.subr.bf16.mxu0 %v1089
    %2517 = vmatpush1.bf16.msra.mxu0 %v1088
    %2518 = vmatprep.subr.bf16.mxu0 %v1093
    %2519 = vmatpush1.bf16.msra.mxu0 %v1092
    %2520 = vmatprep.subr.bf16.mxu0 %v1097
    %2521 = vmatpush1.bf16.msra.mxu0 %v1096
    %2522 = vmatprep.subr.bf16.mxu0 %v1101
    %2523 = vmatpush1.bf16.msra.mxu0 %v1100
    %2524 = vmatprep.subr.bf16.mxu0 0
    %2525 = vmatpush1.bf16.msra.mxu0 0
    %2526 = vmatprep.subr.bf16.mxu0 0
    %2527 = vmatpush1.bf16.msra.mxu0 0
    %2528 = vmatprep.subr.bf16.mxu0 0
    %2529 = vmatpush1.bf16.msra.mxu0 0
    %2530 = vmatprep.subr.bf16.mxu0 0
    %2531 = vmatpush1.bf16.msra.mxu0 0
    %2532 = vmatprep.subr.bf16.mxu0 0
    %2533 = vmatpush1.bf16.msra.mxu0 0
    %2534 = vmatprep.subr.bf16.mxu0 0
    %2535 = vmatpush1.bf16.msra.mxu0 0
    %2536 = vmatprep.subr.bf16.mxu0 0
    %2537 = vmatpush1.bf16.msra.mxu0 0
    %2538 = vmatprep.subr.bf16.mxu0 0
    %2539 = vmatpush1.bf16.msra.mxu0 0
    %2540 = vmatprep.mubr.bf16.mxu0 0
    %2541 = vmatmul.mubr.bf16.gmra.mrb[0].mxu0 %v2466
    %v2542 = vpop.f32.mrb[0].mxu0
    %v2543 = vadd.f32 0.0, %v2542
    %v2544 = vpop.f32.mrb[0].mxu0
    %v2545 = vadd.f32 0.0, %v2544
    %v2546 = vpop.f32.mrb[0].mxu0
    %v2547 = vpop.f32.mrb[0].mxu0
    %2548 = vdwg.mxu0
    %v2549 = vadd.f32 %v2462, %v2502
    %v2550 = vadd.f32 %v2463, %v2504
    %v2551 = vadd.f32 %v2464, %v2543
    %v2552 = vadd.f32 %v2465, %v2545
    %v2553 = vxor.u32 %v2549, 2147483648
    %v2554 = vmul.f32 %v2553, 1.442695
    %v2555 = vpow.pop %v2554
    %v2556 = vadd.f32 %v2555, 1.0
    %v2557 = vrcp.pop %v2556
    %v2558 = vmul.f32 1.0, %v2557
    %v2559 = vxor.u32 %v2550, 2147483648
    %v2560 = vmul.f32 %v2559, 1.442695
    %v2561 = vpow.pop %v2560
    %v2562 = vadd.f32 %v2561, 1.0
    %v2563 = vrcp.pop %v2562
    %v2564 = vmul.f32 1.0, %v2563
    %v2565 = vtanh.pop %v2551
    %v2566 = vxor.u32 %v2552, 2147483648
    %v2567 = vmul.f32 %v2566, 1.442695
    %v2568 = vpow.pop %v2567
    %v2569 = vadd.f32 %v2568, 1.0
    %v2570 = vrcp.pop %v2569
    %v2571 = vmul.f32 1.0, %v2570
    %v2572 = vmul.f32 %v2564, %v2342
    %v2573 = vmul.f32 %v2558, %v2565
    %v2574 = vadd.f32 %v2572, %v2573
    %v2575 = vtanh.pop %v2574
    %v2576 = vmul.f32 %v2571, %v2575
    %v2577 = vld [vmem:[%s1758 + $0x20] sm:$0xff]
    %v2578 = vld [vmem:[%s1758 + $0x28] sm:$0xff]
    %v2579 = vld [vmem:[%s1758 + $0x30] sm:$0xff]
    %v2580 = vld [vmem:[%s1758 + $0x38] sm:$0xff]
    %v2581 = vpack.c.bf16 %v2459, %v2459
    %2582 = vmatprep.subr.bf16.mxu0 %v1346
    %2583 = vmatpush1.bf16.msra.mxu0 %v1345
    %2584 = vmatprep.subr.bf16.mxu0 %v1350
    %2585 = vmatpush1.bf16.msra.mxu0 %v1349
    %2586 = vmatprep.subr.bf16.mxu0 %v1354
    %2587 = vmatpush1.bf16.msra.mxu0 %v1353
    %2588 = vmatprep.subr.bf16.mxu0 %v1358
    %2589 = vmatpush1.bf16.msra.mxu0 %v1357
    %2590 = vmatprep.subr.bf16.mxu0 %v1362
    %2591 = vmatpush1.bf16.msra.mxu0 %v1361
    %2592 = vmatprep.subr.bf16.mxu0 %v1366
    %2593 = vmatpush1.bf16.msra.mxu0 %v1365
    %2594 = vmatprep.subr.bf16.mxu0 %v1370
    %2595 = vmatpush1.bf16.msra.mxu0 %v1369
    %2596 = vmatprep.subr.bf16.mxu0 %v1374
    %2597 = vmatpush1.bf16.msra.mxu0 %v1373
    %2598 = vmatprep.subr.bf16.mxu0 0
    %2599 = vmatpush1.bf16.msra.mxu0 0
    %2600 = vmatprep.subr.bf16.mxu0 0
    %2601 = vmatpush1.bf16.msra.mxu0 0
    %2602 = vmatprep.subr.bf16.mxu0 0
    %2603 = vmatpush1.bf16.msra.mxu0 0
    %2604 = vmatprep.subr.bf16.mxu0 0
    %2605 = vmatpush1.bf16.msra.mxu0 0
    %2606 = vmatprep.subr.bf16.mxu0 0
    %2607 = vmatpush1.bf16.msra.mxu0 0
    %2608 = vmatprep.subr.bf16.mxu0 0
    %2609 = vmatpush1.bf16.msra.mxu0 0
    %2610 = vmatprep.subr.bf16.mxu0 0
    %2611 = vmatpush1.bf16.msra.mxu0 0
    %2612 = vmatprep.subr.bf16.mxu0 0
    %2613 = vmatpush1.bf16.msra.mxu0 0
    %2614 = vmatprep.mubr.bf16.mxu0 0
    %2615 = vmatmul.mubr.bf16.gmra.mrb[0].mxu0 %v2581
    %v2616 = vpop.f32.mrb[0].mxu0
    %v2617 = vadd.f32 0.0, %v2616
    %v2618 = vpop.f32.mrb[0].mxu0
    %v2619 = vadd.f32 0.0, %v2618
    %v2620 = vpop.f32.mrb[0].mxu0
    %v2621 = vpop.f32.mrb[0].mxu0
    %2622 = vdwg.mxu0
    %2623 = vmatprep.subr.bf16.mxu0 %v1348
    %2624 = vmatpush1.bf16.msra.mxu0 %v1347
    %2625 = vmatprep.subr.bf16.mxu0 %v1352
    %2626 = vmatpush1.bf16.msra.mxu0 %v1351
    %2627 = vmatprep.subr.bf16.mxu0 %v1356
    %2628 = vmatpush1.bf16.msra.mxu0 %v1355
    %2629 = vmatprep.subr.bf16.mxu0 %v1360
    %2630 = vmatpush1.bf16.msra.mxu0 %v1359
    %2631 = vmatprep.subr.bf16.mxu0 %v1364
    %2632 = vmatpush1.bf16.msra.mxu0 %v1363
    %2633 = vmatprep.subr.bf16.mxu0 %v1368
    %2634 = vmatpush1.bf16.msra.mxu0 %v1367
    %2635 = vmatprep.subr.bf16.mxu0 %v1372
    %2636 = vmatpush1.bf16.msra.mxu0 %v1371
    %2637 = vmatprep.subr.bf16.mxu0 %v1376
    %2638 = vmatpush1.bf16.msra.mxu0 %v1375
    %2639 = vmatprep.subr.bf16.mxu0 0
    %2640 = vmatpush1.bf16.msra.mxu0 0
    %2641 = vmatprep.subr.bf16.mxu0 0
    %2642 = vmatpush1.bf16.msra.mxu0 0
    %2643 = vmatprep.subr.bf16.mxu0 0
    %2644 = vmatpush1.bf16.msra.mxu0 0
    %2645 = vmatprep.subr.bf16.mxu0 0
    %2646 = vmatpush1.bf16.msra.mxu0 0
    %2647 = vmatprep.subr.bf16.mxu0 0
    %2648 = vmatpush1.bf16.msra.mxu0 0
    %2649 = vmatprep.subr.bf16.mxu0 0
    %2650 = vmatpush1.bf16.msra.mxu0 0
    %2651 = vmatprep.subr.bf16.mxu0 0
    %2652 = vmatpush1.bf16.msra.mxu0 0
    %2653 = vmatprep.subr.bf16.mxu0 0
    %2654 = vmatpush1.bf16.msra.mxu0 0
    %2655 = vmatprep.mubr.bf16.mxu0 0
    %2656 = vmatmul.mubr.bf16.gmra.mrb[0].mxu0 %v2581
    %v2657 = vpop.f32.mrb[0].mxu0
    %v2658 = vadd.f32 0.0, %v2657
    %v2659 = vpop.f32.mrb[0].mxu0
    %v2660 = vadd.f32 0.0, %v2659
    %v2661 = vpop.f32.mrb[0].mxu0
    %v2662 = vpop.f32.mrb[0].mxu0
    %2663 = vdwg.mxu0
    %v2664 = vadd.f32 %v2577, %v2617
    %v2665 = vadd.f32 %v2578, %v2619
    %v2666 = vadd.f32 %v2579, %v2658
    %v2667 = vadd.f32 %v2580, %v2660
    %v2668 = vxor.u32 %v2664, 2147483648
    %v2669 = vmul.f32 %v2668, 1.442695
    %v2670 = vpow.pop %v2669
    %v2671 = vadd.f32 %v2670, 1.0
    %v2672 = vrcp.pop %v2671
    %v2673 = vmul.f32 1.0, %v2672
    %v2674 = vxor.u32 %v2665, 2147483648
    %v2675 = vmul.f32 %v2674, 1.442695
    %v2676 = vpow.pop %v2675
    %v2677 = vadd.f32 %v2676, 1.0
    %v2678 = vrcp.pop %v2677
    %v2679 = vmul.f32 1.0, %v2678
    %v2680 = vtanh.pop %v2666
    %v2681 = vxor.u32 %v2667, 2147483648
    %v2682 = vmul.f32 %v2681, 1.442695
    %v2683 = vpow.pop %v2682
    %v2684 = vadd.f32 %v2683, 1.0
    %v2685 = vrcp.pop %v2684
    %v2686 = vmul.f32 1.0, %v2685
    %v2687 = vmul.f32 %v2679, %v2457
    %v2688 = vmul.f32 %v2673, %v2680
    %v2689 = vadd.f32 %v2687, %v2688
    %v2690 = vtanh.pop %v2689
    %v2691 = vmul.f32 %v2686, %v2690
    %2692 = vst [vmem:[%s1992] sm:$0xff] %v2576
    %2693 = vst [vmem:[%s1990 + $0x8] sm:$0xff] %v2691
    %v2694 = vld [vmem:[%s1638] sm:$0xff]
    %v2695 = vld [vmem:[%s1638 + $0x8] sm:$0xff]
    %v2696 = vld [vmem:[%s1638 + $0x10] sm:$0xff]
    %v2697 = vld [vmem:[%s1638 + $0x18] sm:$0xff]
    %v2698 = vpack.c.bf16 %v2576, %v2576
    %2699 = vmatprep.subr.bf16.mxu0 %v1071
    %2700 = vmatpush1.bf16.msra.mxu0 %v1070
    %2701 = vmatprep.subr.bf16.mxu0 %v1075
    %2702 = vmatpush1.bf16.msra.mxu0 %v1074
    %2703 = vmatprep.subr.bf16.mxu0 %v1079
    %2704 = vmatpush1.bf16.msra.mxu0 %v1078
    %2705 = vmatprep.subr.bf16.mxu0 %v1083
    %2706 = vmatpush1.bf16.msra.mxu0 %v1082
    %2707 = vmatprep.subr.bf16.mxu0 %v1087
    %2708 = vmatpush1.bf16.msra.mxu0 %v1086
    %2709 = vmatprep.subr.bf16.mxu0 %v1091
    %2710 = vmatpush1.bf16.msra.mxu0 %v1090
    %2711 = vmatprep.subr.bf16.mxu0 %v1095
    %2712 = vmatpush1.bf16.msra.mxu0 %v1094
    %2713 = vmatprep.subr.bf16.mxu0 %v1099
    %2714 = vmatpush1.bf16.msra.mxu0 %v1098
    %2715 = vmatprep.subr.bf16.mxu0 0
    %2716 = vmatpush1.bf16.msra.mxu0 0
    %2717 = vmatprep.subr.bf16.mxu0 0
    %2718 = vmatpush1.bf16.msra.mxu0 0
    %2719 = vmatprep.subr.bf16.mxu0 0
    %2720 = vmatpush1.bf16.msra.mxu0 0
    %2721 = vmatprep.subr.bf16.mxu0 0
    %2722 = vmatpush1.bf16.msra.mxu0 0
    %2723 = vmatprep.subr.bf16.mxu0 0
    %2724 = vmatpush1.bf16.msra.mxu0 0
    %2725 = vmatprep.subr.bf16.mxu0 0
    %2726 = vmatpush1.bf16.msra.mxu0 0
    %2727 = vmatprep.subr.bf16.mxu0 0
    %2728 = vmatpush1.bf16.msra.mxu0 0
    %2729 = vmatprep.subr.bf16.mxu0 0
    %2730 = vmatpush1.bf16.msra.mxu0 0
    %2731 = vmatprep.mubr.bf16.mxu0 0
    %2732 = vmatmul.mubr.bf16.gmra.mrb[0].mxu0 %v2698
    %v2733 = vpop.f32.mrb[0].mxu0
    %v2734 = vadd.f32 0.0, %v2733
    %v2735 = vpop.f32.mrb[0].mxu0
    %v2736 = vadd.f32 0.0, %v2735
    %v2737 = vpop.f32.mrb[0].mxu0
    %v2738 = vpop.f32.mrb[0].mxu0
    %2739 = vdwg.mxu0
    %2740 = vmatprep.subr.bf16.mxu0 %v1073
    %2741 = vmatpush1.bf16.msra.mxu0 %v1072
    %2742 = vmatprep.subr.bf16.mxu0 %v1077
    %2743 = vmatpush1.bf16.msra.mxu0 %v1076
    %2744 = vmatprep.subr.bf16.mxu0 %v1081
    %2745 = vmatpush1.bf16.msra.mxu0 %v1080
    %2746 = vmatprep.subr.bf16.mxu0 %v1085
    %2747 = vmatpush1.bf16.msra.mxu0 %v1084
    %2748 = vmatprep.subr.bf16.mxu0 %v1089
    %2749 = vmatpush1.bf16.msra.mxu0 %v1088
    %2750 = vmatprep.subr.bf16.mxu0 %v1093
    %2751 = vmatpush1.bf16.msra.mxu0 %v1092
    %2752 = vmatprep.subr.bf16.mxu0 %v1097
    %2753 = vmatpush1.bf16.msra.mxu0 %v1096
    %2754 = vmatprep.subr.bf16.mxu0 %v1101
    %2755 = vmatpush1.bf16.msra.mxu0 %v1100
    %2756 = vmatprep.subr.bf16.mxu0 0
    %2757 = vmatpush1.bf16.msra.mxu0 0
    %2758 = vmatprep.subr.bf16.mxu0 0
    %2759 = vmatpush1.bf16.msra.mxu0 0
    %2760 = vmatprep.subr.bf16.mxu0 0
    %2761 = vmatpush1.bf16.msra.mxu0 0
    %2762 = vmatprep.subr.bf16.mxu0 0
    %2763 = vmatpush1.bf16.msra.mxu0 0
    %2764 = vmatprep.subr.bf16.mxu0 0
    %2765 = vmatpush1.bf16.msra.mxu0 0
    %2766 = vmatprep.subr.bf16.mxu0 0
    %2767 = vmatpush1.bf16.msra.mxu0 0
    %2768 = vmatprep.subr.bf16.mxu0 0
    %2769 = vmatpush1.bf16.msra.mxu0 0
    %2770 = vmatprep.subr.bf16.mxu0 0
    %2771 = vmatpush1.bf16.msra.mxu0 0
    %2772 = vmatprep.mubr.bf16.mxu0 0
    %2773 = vmatmul.mubr.bf16.gmra.mrb[0].mxu0 %v2698
    %v2774 = vpop.f32.mrb[0].mxu0
    %v2775 = vadd.f32 0.0, %v2774
    %v2776 = vpop.f32.mrb[0].mxu0
    %v2777 = vadd.f32 0.0, %v2776
    %v2778 = vpop.f32.mrb[0].mxu0
    %v2779 = vpop.f32.mrb[0].mxu0
    %2780 = vdwg.mxu0
    %v2781 = vadd.f32 %v2694, %v2734
    %v2782 = vadd.f32 %v2695, %v2736
    %v2783 = vadd.f32 %v2696, %v2775
    %v2784 = vadd.f32 %v2697, %v2777
    %v2785 = vxor.u32 %v2781, 2147483648
    %v2786 = vmul.f32 %v2785, 1.442695
    %v2787 = vpow.pop %v2786
    %v2788 = vadd.f32 %v2787, 1.0
    %v2789 = vrcp.pop %v2788
    %v2790 = vmul.f32 1.0, %v2789
    %v2791 = vxor.u32 %v2782, 2147483648
    %v2792 = vmul.f32 %v2791, 1.442695
    %v2793 = vpow.pop %v2792
    %v2794 = vadd.f32 %v2793, 1.0
    %v2795 = vrcp.pop %v2794
    %v2796 = vmul.f32 1.0, %v2795
    %v2797 = vtanh.pop %v2783
    %v2798 = vxor.u32 %v2784, 2147483648
    %v2799 = vmul.f32 %v2798, 1.442695
    %v2800 = vpow.pop %v2799
    %v2801 = vadd.f32 %v2800, 1.0
    %v2802 = vrcp.pop %v2801
    %v2803 = vmul.f32 1.0, %v2802
    %v2804 = vmul.f32 %v2796, %v2574
    %v2805 = vmul.f32 %v2790, %v2797
    %v2806 = vadd.f32 %v2804, %v2805
    %v2807 = vtanh.pop %v2806
    %v2808 = vmul.f32 %v2803, %v2807
    %v2809 = vld [vmem:[%s1522 + $0x20] sm:$0xff]
    %v2810 = vld [vmem:[%s1522 + $0x28] sm:$0xff]
    %v2811 = vld [vmem:[%s1522 + $0x30] sm:$0xff]
    %v2812 = vld [vmem:[%s1522 + $0x38] sm:$0xff]
    %v2813 = vpack.c.bf16 %v2691, %v2691
    %2814 = vmatprep.subr.bf16.mxu0 %v1346
    %2815 = vmatpush1.bf16.msra.mxu0 %v1345
    %2816 = vmatprep.subr.bf16.mxu0 %v1350
    %2817 = vmatpush1.bf16.msra.mxu0 %v1349
    %2818 = vmatprep.subr.bf16.mxu0 %v1354
    %2819 = vmatpush1.bf16.msra.mxu0 %v1353
    %2820 = vmatprep.subr.bf16.mxu0 %v1358
    %2821 = vmatpush1.bf16.msra.mxu0 %v1357
    %2822 = vmatprep.subr.bf16.mxu0 %v1362
    %2823 = vmatpush1.bf16.msra.mxu0 %v1361
    %2824 = vmatprep.subr.bf16.mxu0 %v1366
    %2825 = vmatpush1.bf16.msra.mxu0 %v1365
    %2826 = vmatprep.subr.bf16.mxu0 %v1370
    %2827 = vmatpush1.bf16.msra.mxu0 %v1369
    %2828 = vmatprep.subr.bf16.mxu0 %v1374
    %2829 = vmatpush1.bf16.msra.mxu0 %v1373
    %2830 = vmatprep.subr.bf16.mxu0 0
    %2831 = vmatpush1.bf16.msra.mxu0 0
    %2832 = vmatprep.subr.bf16.mxu0 0
    %2833 = vmatpush1.bf16.msra.mxu0 0
    %2834 = vmatprep.subr.bf16.mxu0 0
    %2835 = vmatpush1.bf16.msra.mxu0 0
    %2836 = vmatprep.subr.bf16.mxu0 0
    %2837 = vmatpush1.bf16.msra.mxu0 0
    %2838 = vmatprep.subr.bf16.mxu0 0
    %2839 = vmatpush1.bf16.msra.mxu0 0
    %2840 = vmatprep.subr.bf16.mxu0 0
    %2841 = vmatpush1.bf16.msra.mxu0 0
    %2842 = vmatprep.subr.bf16.mxu0 0
    %2843 = vmatpush1.bf16.msra.mxu0 0
    %2844 = vmatprep.subr.bf16.mxu0 0
    %2845 = vmatpush1.bf16.msra.mxu0 0
    %2846 = vmatprep.mubr.bf16.mxu0 0
    %2847 = vmatmul.mubr.bf16.gmra.mrb[0].mxu0 %v2813
    %v2848 = vpop.f32.mrb[0].mxu0
    %v2849 = vadd.f32 0.0, %v2848
    %v2850 = vpop.f32.mrb[0].mxu0
    %v2851 = vadd.f32 0.0, %v2850
    %v2852 = vpop.f32.mrb[0].mxu0
    %v2853 = vpop.f32.mrb[0].mxu0
    %2854 = vdwg.mxu0
    %2855 = vmatprep.subr.bf16.mxu0 %v1348
    %2856 = vmatpush1.bf16.msra.mxu0 %v1347
    %2857 = vmatprep.subr.bf16.mxu0 %v1352
    %2858 = vmatpush1.bf16.msra.mxu0 %v1351
    %2859 = vmatprep.subr.bf16.mxu0 %v1356
    %2860 = vmatpush1.bf16.msra.mxu0 %v1355
    %2861 = vmatprep.subr.bf16.mxu0 %v1360
    %2862 = vmatpush1.bf16.msra.mxu0 %v1359
    %2863 = vmatprep.subr.bf16.mxu0 %v1364
    %2864 = vmatpush1.bf16.msra.mxu0 %v1363
    %2865 = vmatprep.subr.bf16.mxu0 %v1368
    %2866 = vmatpush1.bf16.msra.mxu0 %v1367
    %2867 = vmatprep.subr.bf16.mxu0 %v1372
    %2868 = vmatpush1.bf16.msra.mxu0 %v1371
    %2869 = vmatprep.subr.bf16.mxu0 %v1376
    %2870 = vmatpush1.bf16.msra.mxu0 %v1375
    %2871 = vmatprep.subr.bf16.mxu0 0
    %2872 = vmatpush1.bf16.msra.mxu0 0
    %2873 = vmatprep.subr.bf16.mxu0 0
    %2874 = vmatpush1.bf16.msra.mxu0 0
    %2875 = vmatprep.subr.bf16.mxu0 0
    %2876 = vmatpush1.bf16.msra.mxu0 0
    %2877 = vmatprep.subr.bf16.mxu0 0
    %2878 = vmatpush1.bf16.msra.mxu0 0
    %2879 = vmatprep.subr.bf16.mxu0 0
    %2880 = vmatpush1.bf16.msra.mxu0 0
    %2881 = vmatprep.subr.bf16.mxu0 0
    %2882 = vmatpush1.bf16.msra.mxu0 0
    %2883 = vmatprep.subr.bf16.mxu0 0
    %2884 = vmatpush1.bf16.msra.mxu0 0
    %2885 = vmatprep.subr.bf16.mxu0 0
    %2886 = vmatpush1.bf16.msra.mxu0 0
    %2887 = vmatprep.mubr.bf16.mxu0 0
    %2888 = vmatmul.mubr.bf16.gmra.mrb[0].mxu0 %v2813
    %v2889 = vpop.f32.mrb[0].mxu0
    %v2890 = vadd.f32 0.0, %v2889
    %v2891 = vpop.f32.mrb[0].mxu0
    %v2892 = vadd.f32 0.0, %v2891
    %v2893 = vpop.f32.mrb[0].mxu0
    %v2894 = vpop.f32.mrb[0].mxu0
    %2895 = vdwg.mxu0
    %v2896 = vadd.f32 %v2809, %v2849
    %v2897 = vadd.f32 %v2810, %v2851
    %v2898 = vadd.f32 %v2811, %v2890
    %v2899 = vadd.f32 %v2812, %v2892
    %v2900 = vxor.u32 %v2896, 2147483648
    %v2901 = vmul.f32 %v2900, 1.442695
    %v2902 = vpow.pop %v2901
    %v2903 = vadd.f32 %v2902, 1.0
    %v2904 = vrcp.pop %v2903
    %v2905 = vmul.f32 1.0, %v2904
    %v2906 = vxor.u32 %v2897, 2147483648
    %v2907 = vmul.f32 %v2906, 1.442695
    %v2908 = vpow.pop %v2907
    %v2909 = vadd.f32 %v2908, 1.0
    %v2910 = vrcp.pop %v2909
    %v2911 = vmul.f32 1.0, %v2910
    %v2912 = vtanh.pop %v2898
    %v2913 = vxor.u32 %v2899, 2147483648
    %v2914 = vmul.f32 %v2913, 1.442695
    %v2915 = vpow.pop %v2914
    %v2916 = vadd.f32 %v2915, 1.0
    %v2917 = vrcp.pop %v2916
    %v2918 = vmul.f32 1.0, %v2917
    %v2919 = vmul.f32 %v2911, %v2689
    %v2920 = vmul.f32 %v2905, %v2912
    %v2921 = vadd.f32 %v2919, %v2920
    %v2922 = vtanh.pop %v2921
    %v2923 = vmul.f32 %v2918, %v2922
    %2924 = vst [vmem:[%s1756] sm:$0xff] %v2808
    %2925 = vst [vmem:[%s1754 + $0x8] sm:$0xff] %v2923
    %v2926 = vld [vmem:[%s1244] sm:$0xff]
    %v2927 = vld [vmem:[%s1244 + $0x8] sm:$0xff]
    %v2928 = vld [vmem:[%s1244 + $0x10] sm:$0xff]
    %v2929 = vld [vmem:[%s1244 + $0x18] sm:$0xff]
    %v2930 = vpack.c.bf16 %v2808, %v2808
    %2931 = vmatprep.subr.bf16.mxu0 %v1071
    %2932 = vmatpush1.bf16.msra.mxu0 %v1070
    %2933 = vmatprep.subr.bf16.mxu0 %v1075
    %2934 = vmatpush1.bf16.msra.mxu0 %v1074
    %2935 = vmatprep.subr.bf16.mxu0 %v1079
    %2936 = vmatpush1.bf16.msra.mxu0 %v1078
    %2937 = vmatprep.subr.bf16.mxu0 %v1083
    %2938 = vmatpush1.bf16.msra.mxu0 %v1082
    %2939 = vmatprep.subr.bf16.mxu0 %v1087
    %2940 = vmatpush1.bf16.msra.mxu0 %v1086
    %2941 = vmatprep.subr.bf16.mxu0 %v1091
    %2942 = vmatpush1.bf16.msra.mxu0 %v1090
    %2943 = vmatprep.subr.bf16.mxu0 %v1095
    %2944 = vmatpush1.bf16.msra.mxu0 %v1094
    %2945 = vmatprep.subr.bf16.mxu0 %v1099
    %2946 = vmatpush1.bf16.msra.mxu0 %v1098
    %2947 = vmatprep.subr.bf16.mxu0 0
    %2948 = vmatpush1.bf16.msra.mxu0 0
    %2949 = vmatprep.subr.bf16.mxu0 0
    %2950 = vmatpush1.bf16.msra.mxu0 0
    %2951 = vmatprep.subr.bf16.mxu0 0
    %2952 = vmatpush1.bf16.msra.mxu0 0
    %2953 = vmatprep.subr.bf16.mxu0 0
    %2954 = vmatpush1.bf16.msra.mxu0 0
    %2955 = vmatprep.subr.bf16.mxu0 0
    %2956 = vmatpush1.bf16.msra.mxu0 0
    %2957 = vmatprep.subr.bf16.mxu0 0
    %2958 = vmatpush1.bf16.msra.mxu0 0
    %2959 = vmatprep.subr.bf16.mxu0 0
    %2960 = vmatpush1.bf16.msra.mxu0 0
    %2961 = vmatprep.subr.bf16.mxu0 0
    %2962 = vmatpush1.bf16.msra.mxu0 0
    %2963 = vmatprep.mubr.bf16.mxu0 0
    %2964 = vmatmul.mubr.bf16.gmra.mrb[0].mxu0 %v2930
    %v2965 = vpop.f32.mrb[0].mxu0
    %v2966 = vadd.f32 0.0, %v2965
    %v2967 = vpop.f32.mrb[0].mxu0
    %v2968 = vadd.f32 0.0, %v2967
    %v2969 = vpop.f32.mrb[0].mxu0
    %v2970 = vpop.f32.mrb[0].mxu0
    %2971 = vdwg.mxu0
    %2972 = vmatprep.subr.bf16.mxu0 %v1073
    %2973 = vmatpush1.bf16.msra.mxu0 %v1072
    %2974 = vmatprep.subr.bf16.mxu0 %v1077
    %2975 = vmatpush1.bf16.msra.mxu0 %v1076
    %2976 = vmatprep.subr.bf16.mxu0 %v1081
    %2977 = vmatpush1.bf16.msra.mxu0 %v1080
    %2978 = vmatprep.subr.bf16.mxu0 %v1085
    %2979 = vmatpush1.bf16.msra.mxu0 %v1084
    %2980 = vmatprep.subr.bf16.mxu0 %v1089
    %2981 = vmatpush1.bf16.msra.mxu0 %v1088
    %2982 = vmatprep.subr.bf16.mxu0 %v1093
    %2983 = vmatpush1.bf16.msra.mxu0 %v1092
    %2984 = vmatprep.subr.bf16.mxu0 %v1097
    %2985 = vmatpush1.bf16.msra.mxu0 %v1096
    %2986 = vmatprep.subr.bf16.mxu0 %v1101
    %2987 = vmatpush1.bf16.msra.mxu0 %v1100
    %2988 = vmatprep.subr.bf16.mxu0 0
    %2989 = vmatpush1.bf16.msra.mxu0 0
    %2990 = vmatprep.subr.bf16.mxu0 0
    %2991 = vmatpush1.bf16.msra.mxu0 0
    %2992 = vmatprep.subr.bf16.mxu0 0
    %2993 = vmatpush1.bf16.msra.mxu0 0
    %2994 = vmatprep.subr.bf16.mxu0 0
    %2995 = vmatpush1.bf16.msra.mxu0 0
    %2996 = vmatprep.subr.bf16.mxu0 0
    %2997 = vmatpush1.bf16.msra.mxu0 0
    %2998 = vmatprep.subr.bf16.mxu0 0
    %2999 = vmatpush1.bf16.msra.mxu0 0
    %3000 = vmatprep.subr.bf16.mxu0 0
    %3001 = vmatpush1.bf16.msra.mxu0 0
    %3002 = vmatprep.subr.bf16.mxu0 0
    %3003 = vmatpush1.bf16.msra.mxu0 0
    %3004 = vmatprep.mubr.bf16.mxu0 0
    %3005 = vmatmul.mubr.bf16.gmra.mrb[0].mxu0 %v2930
    %v3006 = vpop.f32.mrb[0].mxu0
    %v3007 = vadd.f32 0.0, %v3006
    %v3008 = vpop.f32.mrb[0].mxu0
    %v3009 = vadd.f32 0.0, %v3008
    %v3010 = vpop.f32.mrb[0].mxu0
    %v3011 = vpop.f32.mrb[0].mxu0
    %3012 = vdwg.mxu0
    %v3013 = vadd.f32 %v2926, %v2966
    %v3014 = vadd.f32 %v2927, %v2968
    %v3015 = vadd.f32 %v2928, %v3007
    %v3016 = vadd.f32 %v2929, %v3009
    %v3017 = vxor.u32 %v3013, 2147483648
    %v3018 = vmul.f32 %v3017, 1.442695
    %v3019 = vpow.pop %v3018
    %v3020 = vadd.f32 %v3019, 1.0
    %v3021 = vrcp.pop %v3020
    %v3022 = vmul.f32 1.0, %v3021
    %v3023 = vxor.u32 %v3014, 2147483648
    %v3024 = vmul.f32 %v3023, 1.442695
    %v3025 = vpow.pop %v3024
    %v3026 = vadd.f32 %v3025, 1.0
    %v3027 = vrcp.pop %v3026
    %v3028 = vmul.f32 1.0, %v3027
    %v3029 = vtanh.pop %v3015
    %v3030 = vxor.u32 %v3016, 2147483648
    %v3031 = vmul.f32 %v3030, 1.442695
    %v3032 = vpow.pop %v3031
    %v3033 = vadd.f32 %v3032, 1.0
    %v3034 = vrcp.pop %v3033
    %v3035 = vmul.f32 1.0, %v3034
    %v3036 = vmul.f32 %v3028, %v2806
    %v3037 = vmul.f32 %v3022, %v3029
    %v3038 = vadd.f32 %v3036, %v3037
    %v3039 = vtanh.pop %v3038
    %v3040 = vmul.f32 %v3035, %v3039
    %v3041 = vld [vmem:[#allocation2 + $0x20] sm:$0xff]
    %v3042 = vld [vmem:[#allocation2 + $0x28] sm:$0xff]
    %v3043 = vld [vmem:[#allocation2 + $0x30] sm:$0xff]
    %v3044 = vld [vmem:[#allocation2 + $0x38] sm:$0xff]
    %v3045 = vpack.c.bf16 %v2923, %v2923
    %3046 = vmatprep.subr.bf16.mxu0 %v1346
    %3047 = vmatpush1.bf16.msra.mxu0 %v1345
    %3048 = vmatprep.subr.bf16.mxu0 %v1350
    %3049 = vmatpush1.bf16.msra.mxu0 %v1349
    %3050 = vmatprep.subr.bf16.mxu0 %v1354
    %3051 = vmatpush1.bf16.msra.mxu0 %v1353
    %3052 = vmatprep.subr.bf16.mxu0 %v1358
    %3053 = vmatpush1.bf16.msra.mxu0 %v1357
    %3054 = vmatprep.subr.bf16.mxu0 %v1362
    %3055 = vmatpush1.bf16.msra.mxu0 %v1361
    %3056 = vmatprep.subr.bf16.mxu0 %v1366
    %3057 = vmatpush1.bf16.msra.mxu0 %v1365
    %3058 = vmatprep.subr.bf16.mxu0 %v1370
    %3059 = vmatpush1.bf16.msra.mxu0 %v1369
    %3060 = vmatprep.subr.bf16.mxu0 %v1374
    %3061 = vmatpush1.bf16.msra.mxu0 %v1373
    %3062 = vmatprep.subr.bf16.mxu0 0
    %3063 = vmatpush1.bf16.msra.mxu0 0
    %3064 = vmatprep.subr.bf16.mxu0 0
    %3065 = vmatpush1.bf16.msra.mxu0 0
    %3066 = vmatprep.subr.bf16.mxu0 0
    %3067 = vmatpush1.bf16.msra.mxu0 0
    %3068 = vmatprep.subr.bf16.mxu0 0
    %3069 = vmatpush1.bf16.msra.mxu0 0
    %3070 = vmatprep.subr.bf16.mxu0 0
    %3071 = vmatpush1.bf16.msra.mxu0 0
    %3072 = vmatprep.subr.bf16.mxu0 0
    %3073 = vmatpush1.bf16.msra.mxu0 0
    %3074 = vmatprep.subr.bf16.mxu0 0
    %3075 = vmatpush1.bf16.msra.mxu0 0
    %3076 = vmatprep.subr.bf16.mxu0 0
    %3077 = vmatpush1.bf16.msra.mxu0 0
    %3078 = vmatprep.mubr.bf16.mxu0 0
    %3079 = vmatmul.mubr.bf16.gmra.mrb[0].mxu0 %v3045
    %v3080 = vpop.f32.mrb[0].mxu0
    %v3081 = vadd.f32 0.0, %v3080
    %v3082 = vpop.f32.mrb[0].mxu0
    %v3083 = vadd.f32 0.0, %v3082
    %v3084 = vpop.f32.mrb[0].mxu0
    %v3085 = vpop.f32.mrb[0].mxu0
    %3086 = vdwg.mxu0
    %3087 = vmatprep.subr.bf16.mxu0 %v1348
    %3088 = vmatpush1.bf16.msra.mxu0 %v1347
    %3089 = vmatprep.subr.bf16.mxu0 %v1352
    %3090 = vmatpush1.bf16.msra.mxu0 %v1351
    %3091 = vmatprep.subr.bf16.mxu0 %v1356
    %3092 = vmatpush1.bf16.msra.mxu0 %v1355
    %3093 = vmatprep.subr.bf16.mxu0 %v1360
    %3094 = vmatpush1.bf16.msra.mxu0 %v1359
    %3095 = vmatprep.subr.bf16.mxu0 %v1364
    %3096 = vmatpush1.bf16.msra.mxu0 %v1363
    %3097 = vmatprep.subr.bf16.mxu0 %v1368
    %3098 = vmatpush1.bf16.msra.mxu0 %v1367
    %3099 = vmatprep.subr.bf16.mxu0 %v1372
    %3100 = vmatpush1.bf16.msra.mxu0 %v1371
    %3101 = vmatprep.subr.bf16.mxu0 %v1376
    %3102 = vmatpush1.bf16.msra.mxu0 %v1375
    %3103 = vmatprep.subr.bf16.mxu0 0
    %3104 = vmatpush1.bf16.msra.mxu0 0
    %3105 = vmatprep.subr.bf16.mxu0 0
    %3106 = vmatpush1.bf16.msra.mxu0 0
    %3107 = vmatprep.subr.bf16.mxu0 0
    %3108 = vmatpush1.bf16.msra.mxu0 0
    %3109 = vmatprep.subr.bf16.mxu0 0
    %3110 = vmatpush1.bf16.msra.mxu0 0
    %3111 = vmatprep.subr.bf16.mxu0 0
    %3112 = vmatpush1.bf16.msra.mxu0 0
    %3113 = vmatprep.subr.bf16.mxu0 0
    %3114 = vmatpush1.bf16.msra.mxu0 0
    %3115 = vmatprep.subr.bf16.mxu0 0
    %3116 = vmatpush1.bf16.msra.mxu0 0
    %3117 = vmatprep.subr.bf16.mxu0 0
    %3118 = vmatpush1.bf16.msra.mxu0 0
    %3119 = vmatprep.mubr.bf16.mxu0 0
    %3120 = vmatmul.mubr.bf16.gmra.mrb[0].mxu0 %v3045
    %v3121 = vpop.f32.mrb[0].mxu0
    %v3122 = vadd.f32 0.0, %v3121
    %v3123 = vpop.f32.mrb[0].mxu0
    %v3124 = vadd.f32 0.0, %v3123
    %v3125 = vpop.f32.mrb[0].mxu0
    %v3126 = vpop.f32.mrb[0].mxu0
    %3127 = vdwg.mxu0
    %v3128 = vadd.f32 %v3041, %v3081
    %v3129 = vadd.f32 %v3042, %v3083
    %v3130 = vadd.f32 %v3043, %v3122
    %v3131 = vadd.f32 %v3044, %v3124
    %v3132 = vxor.u32 %v3128, 2147483648
    %v3133 = vmul.f32 %v3132, 1.442695
    %v3134 = vpow.pop %v3133
    %v3135 = vadd.f32 %v3134, 1.0
    %v3136 = vrcp.pop %v3135
    %v3137 = vmul.f32 1.0, %v3136
    %v3138 = vxor.u32 %v3129, 2147483648
    %v3139 = vmul.f32 %v3138, 1.442695
    %v3140 = vpow.pop %v3139
    %v3141 = vadd.f32 %v3140, 1.0
    %v3142 = vrcp.pop %v3141
    %v3143 = vmul.f32 1.0, %v3142
    %v3144 = vtanh.pop %v3130
    %v3145 = vxor.u32 %v3131, 2147483648
    %v3146 = vmul.f32 %v3145, 1.442695
    %v3147 = vpow.pop %v3146
    %v3148 = vadd.f32 %v3147, 1.0
    %v3149 = vrcp.pop %v3148
    %v3150 = vmul.f32 1.0, %v3149
    %v3151 = vmul.f32 %v3143, %v2921
    %v3152 = vmul.f32 %v3137, %v3144
    %v3153 = vadd.f32 %v3151, %v3152
    %v3154 = vtanh.pop %v3153
    %v3155 = vmul.f32 %v3150, %v3154
    %3156 = vst [vmem:[%s1520] sm:$0xff] %v3040
    %3157 = vst [vmem:[#allocation12 + $0x8] sm:$0xff] %v3155
    %3158 = vst [vmem:[#allocation13] sm:$0xff] %v3040
    %3159 = vst [vmem:[#allocation13 + $0x8] sm:$0xff] %v3155
    %3160 = vst [vmem:[#allocation15] sm:$0xff] %v3038
    %3161 = vst [vmem:[#allocation15 + $0x8] sm:$0xff] %v3153
    // Predicated region
    $region42: #{tpu_custom_call.1} parent=1 // pred_check
      _
    $region43: #{tpu_custom_call.1} parent=1 // pred_check_branch
      %3163 = sbr.rel (0) target = $region45
    $region44: #{tpu_custom_call.1} parent=1 // pred_region
      %s3165 = ssub.s32 2048, 2048
      %3166 = vsyncadd [#allocation5], %s3165
      %s3167 = sshll.u32 [#allocation12], 4
      %s3168 = int_to_ptr.vmem [resolvable:$true] %s3167
      %3173 = dma.vmem_to_hbm [thread:$0]  %s3168, 2048, %s5, [#allocation5], 256, 256, 16
    $region45: #{tpu_custom_call.1} parent=1 // pred_fallthru
      _
    // Predicated region
    $region46: #{tpu_custom_call.1} parent=1 // pred_check
      _
    $region47: #{tpu_custom_call.1} parent=1 // pred_check_branch
      %3175 = sbr.rel (0) target = $region49
    $region48: #{tpu_custom_call.1} parent=1 // pred_region
      %s3177 = ssub.s32 256, 256
      %3178 = vsyncadd [#allocation14], %s3177
      %s3180 = sshll.u32 [#allocation13], 4
      %s3181 = int_to_ptr.vmem [resolvable:$true] %s3180
      %3183 = dma.vmem_to_hbm [thread:$0]  %s3181, 256, %s6, [#allocation14]
    $region49: #{tpu_custom_call.1} parent=1 // pred_fallthru
      _
    // Predicated region
    $region50: #{tpu_custom_call.1} parent=1 // pred_check
      _
    $region51: #{tpu_custom_call.1} parent=1 // pred_check_branch
      %3185 = sbr.rel (0) target = $region53
    $region52: #{tpu_custom_call.1} parent=1 // pred_region
      %s3187 = ssub.s32 256, 256
      %3188 = vsyncadd [#allocation14], %s3187
      %s3190 = sshll.u32 [#allocation15], 4
      %s3191 = int_to_ptr.vmem [resolvable:$true] %s3190
      %3193 = dma.vmem_to_hbm [thread:$0]  %s3191, 256, %s7, [#allocation14]
    $region53: #{tpu_custom_call.1} parent=1 // pred_fallthru
      _
    // Predicated region
    $region54: #{tpu_custom_call.1} parent=1 // pred_check
      _
    $region55: #{tpu_custom_call.1} parent=1 // pred_check_branch
      %3195 = sbr.rel (0) target = $region57
    $region56: #{tpu_custom_call.1} parent=1 // pred_region
      %3196 = dma.done [#allocation5], 2048
    $region57: #{tpu_custom_call.1} parent=1 // pred_fallthru
      _
    // Predicated region
    $region58: #{tpu_custom_call.1} parent=1 // pred_check
      _
    $region59: #{tpu_custom_call.1} parent=1 // pred_check_branch
      %3198 = sbr.rel (0) target = $region61
    $region60: #{tpu_custom_call.1} parent=1 // pred_region
      %3199 = dma.done [#allocation14], 256
    $region61: #{tpu_custom_call.1} parent=1 // pred_fallthru
      _
    // Predicated region
    $region62: #{tpu_custom_call.1} parent=1 // pred_check
      _
    $region63: #{tpu_custom_call.1} parent=1 // pred_check_branch
      %3201 = sbr.rel (0) target = $region65
    $region64: #{tpu_custom_call.1} parent=1 // pred_region
      %3202 = dma.done [#allocation14], 256
    $region65: #{tpu_custom_call.1} parent=1 // pred_fallthru
      _
    %3203 = vsyncpa [#allocation4], 1
    %3204 = vsyncpa [#allocation7], 1
    %3205 = vsyncpa [#allocation10], 1
    %3206 = vsyncpa [#allocation5], 1
    %3207 = vsyncpa [#allocation14], 1

</llo_original>
